<compile_context>
chip_gen: v5e
topology: v5e:2x2
jax: 0.10.0
libtpu: 0.0.40
codegen_flags: <defaults>
</compile_context>

<pallas_src>
import functools

import jax
import jax.numpy as jnp
from jax.experimental import pallas as pl
from jax.experimental.pallas import tpu as pltpu


def _round_up(x, m):
    return (x + m - 1) // m * m


def _fused_block_kernel(xf_ref, w1_ref, b1_ref, w2_ref, b2_ref, mask_ref,
                        out_ref, h_ref, *, taps, mc):
    """One batch sample: conv1(+bias,ReLU,pad-mask) -> conv2(+bias), fused.

    xf_ref  : (1, Cin_p , MA)   compute dtype  flattened, 2-voxel-padded input
    w1_ref  : (8, Cout_p, Cin_p)               per-tap conv1 weights
    b1_ref  : (Cout_p, 1)       f32
    w2_ref  : (8, Cout_p, Cout_p)              per-tap conv2 weights
    b2_ref  : (Cout_p, 1)       f32
    mask_ref: (1, mc)           f32            1.0 where h is a real voxel
    out_ref : (1, Cout_p, mc)   f32            lane-dense (mc % 128 == 0)
    h_ref   : (Cout_p, MA)      compute dtype  VMEM scratch (intermediate act)
    """
    cout = h_ref.shape[0]
    tail = h_ref.shape[1] - mc

    # Define the halo tail of the scratch so conv2's shifted reads are clean.
    h_ref[:, mc:] = jnp.zeros((cout, tail), h_ref.dtype)

    # ---- conv1: accumulate the 8 shifted taps on the MXU (f32 acc) ---------
    acc = jnp.zeros((cout, mc), jnp.float32)
    for t, off in enumerate(taps):
        xs = xf_ref[0, :, off:off + mc]                         # (Cin_p, mc)
        acc = acc + jnp.dot(w1_ref[t], xs, preferred_element_type=jnp.float32)
    # bias + ReLU + zero-out the padding voxels of the intermediate (all f32).
    h = jnp.maximum(acc + b1_ref[...], 0.0) * mask_ref[...]
    h_ref[:, :mc] = h.astype(h_ref.dtype)

    # ---- conv2: same 8-tap accumulation over the VMEM-resident h -----------
    acc = jnp.zeros((cout, mc), jnp.float32)
    for t, off in enumerate(taps):
        hs = h_ref[:, off:off + mc]                             # (Cout_p, mc)
        acc = acc + jnp.dot(w2_ref[t], hs, preferred_element_type=jnp.float32)
    out_ref[0] = (acc + b2_ref[...]).astype(out_ref.dtype)


@functools.partial(jax.jit, static_argnames="compute_dtype")
def block_forward(x_ncdhw, params, *, compute_dtype=jnp.bfloat16):
    """Forward pass of `Block` (NCDHW in, NCDHW out)."""
    w1, b1, w2, b2 = params
    N, Cin, D, H, W = x_ncdhw.shape
    Cout = w1.shape[0]

    # Channel padding to sublane multiples (zero channels contribute zero).
    Cin_p = _round_up(Cin, 8)
    Cout_p = _round_up(Cout, 8)

    # Extended spatial grid: pad 2 voxels per side so BOTH convs (each pad=1)
    # become uniform flat shifts on the same grid.
    Dx, Hx, Wx = D + 4, H + 4, W + 4
    Mx = Dx * Hx * Wx                       # flattened extended grid
    MC = _round_up(Mx, 128)                 # lanes actually computed
    dmax = Hx * Wx + Wx + 1                 # largest tap offset
    MA = MC + _round_up(dmax, 128)          # allocated lanes (read halo)
    taps = tuple(kd * Hx * Wx + kh * Wx + kw
                 for kd in range(2) for kh in range(2) for kw in range(2))

    # ---- glue (input-sized, no 8x amplification): pad + flatten ------------
    xpp = jnp.pad(x_ncdhw, ((0, 0), (0, Cin_p - Cin),
                            (2, 2), (2, 2), (2, 2)))
    xf = xpp.reshape(N, Cin_p, Mx)
    xf = jnp.pad(xf, ((0, 0), (0, 0), (0, MA - Mx))).astype(compute_dtype)

    # Weights: (O, I, kd, kh, kw) -> (8 taps, Cout_p, Cin_p) — tap order
    # matches `taps` above (kd major, kw minor).
    w1t = jnp.transpose(w1, (2, 3, 4, 0, 1)).reshape(8, Cout, Cin)
    w1t = jnp.pad(w1t, ((0, 0), (0, Cout_p - Cout),
                        (0, Cin_p - Cin))).astype(compute_dtype)
    w2t = jnp.transpose(w2, (2, 3, 4, 0, 1)).reshape(8, Cout, Cout)
    w2t = jnp.pad(w2t, ((0, 0), (0, Cout_p - Cout),
                        (0, Cout_p - Cout))).astype(compute_dtype)
    b1p = jnp.pad(b1, (0, Cout_p - Cout)).reshape(Cout_p, 1).astype(jnp.float32)
    b2p = jnp.pad(b2, (0, Cout_p - Cout)).reshape(Cout_p, 1).astype(jnp.float32)

    # 0/1 mask of "real" conv1-output voxels on the extended grid (index g is
    # valid iff 1 <= g <= S+1 on each axis); zero elsewhere (incl. lane pad).
    md = (jnp.arange(Dx) >= 1) & (jnp.arange(Dx) <= D + 1)
    mh = (jnp.arange(Hx) >= 1) & (jnp.arange(Hx) <= H + 1)
    mw = (jnp.arange(Wx) >= 1) & (jnp.arange(Wx) <= W + 1)
    mask = (md[:, None, None] & mh[None, :, None] & mw[None, None, :])
    mask = mask.reshape(1, Mx).astype(jnp.float32)
    mask = jnp.pad(mask, ((0, 0), (0, MC - Mx)))

    # ---- VMEM budget (derived against v7x: 64 MiB physical / 32 MiB scoped) -
    itemsize = jnp.dtype(compute_dtype).itemsize
    vmem_need = (2 * Cin_p * MA * itemsize          # input block, double-buffered
                 + Cout_p * MA * itemsize           # intermediate h scratch
                 + 2 * Cout_p * MC * 4              # output block, double-buffered
                 + 8 * Cout_p * (Cin_p + Cout_p) * itemsize   # weights
                 + (2 * Cout_p + MC) * 4)           # biases + mask
    assert vmem_need < 24 * 1024 * 1024, (
        "per-sample working set too large for single-block processing")
    # TODO(synk): for large D*H*W / channel counts, tile the flattened spatial
    # axis (with a +dmax halo) instead of one block per sample.

    kern = functools.partial(_fused_block_kernel, taps=taps, mc=MC)
    out_flat = pl.pallas_call(
        kern,
        out_shape=jax.ShapeDtypeStruct((N, Cout_p, MC), jnp.float32),
        grid=(N,),
        in_specs=[
            pl.BlockSpec((1, Cin_p, MA), lambda n: (n, 0, 0)),
            pl.BlockSpec((8, Cout_p, Cin_p), lambda n: (0, 0, 0)),
            pl.BlockSpec((Cout_p, 1), lambda n: (0, 0)),
            pl.BlockSpec((8, Cout_p, Cout_p), lambda n: (0, 0, 0)),
            pl.BlockSpec((Cout_p, 1), lambda n: (0, 0)),
            pl.BlockSpec((1, MC), lambda n: (0, 0)),
        ],
        out_specs=pl.BlockSpec((1, Cout_p, MC), lambda n: (n, 0, 0)),
        scratch_shapes=[pltpu.VMEM((Cout_p, MA), compute_dtype)],
        compiler_params=pltpu.CompilerParams(
            dimension_semantics=("parallel",),
            vmem_limit_bytes=32 * 1024 * 1024),
        cost_estimate=pl.CostEstimate(
            flops=2 * N * MC * 8 * (Cin_p * Cout_p + Cout_p * Cout_p),
            transcendentals=0,
            bytes_accessed=int(N * Cin_p * MA * itemsize
                               + 8 * Cout_p * (Cin_p + Cout_p) * itemsize
                               + (2 * Cout_p + MC) * 4
                               + N * Cout_p * MC * 4)),
    )(xf, w1t, b1p, w2t, b2p, mask)

    # Valid region: conv2 output lives at extended-grid indices [0, S+2) per
    # axis.  Slice + reshape (output-sized glue, already channel-major).
    y = out_flat[:, :Cout, :Mx].reshape(N, Cout, Dx, Hx, Wx)
    return y[:, :, :D + 2, :H + 2, :W + 2]


def _reference_forward(x, params):
    """Pure-XLA reference (matches torch Conv3d semantics) for validation."""
    w1, b1, w2, b2 = params
    dn = ('NCDHW', 'OIDHW', 'NCDHW')
    h = jax.lax.conv_general_dilated(x, w1, (1, 1, 1), [(1, 1)] * 3,
                                     dimension_numbers=dn)
    h = jnp.maximum(h + b1[None, :, None, None, None], 0.0)
    y = jax.lax.conv_general_dilated(h, w2, (1, 1, 1), [(1, 1)] * 3,
                                     dimension_numbers=dn)
    return y + b2[None, :, None, None, None]


def init_params(key, in_ch, out_ch):
    # Deterministic synthetic init (shapes match nn.Conv3d(in, out, 2)).
    k1, k2, k3, k4 = jax.random.split(key, 4)
    fan1 = float(in_ch * 8)
    fan2 = float(out_ch * 8)
    w1 = jax.random.normal(k1, (out_ch, in_ch, 2, 2, 2), jnp.float32) / jnp.sqrt(fan1)
    b1 = jax.random.normal(k2, (out_ch,), jnp.float32) * 0.01
    w2 = jax.random.normal(k3, (out_ch, out_ch, 2, 2, 2), jnp.float32) / jnp.sqrt(fan2)
    b2 = jax.random.normal(k4, (out_ch,), jnp.float32) * 0.01
    return (w1, b1, w2, b2)


if __name__ == "__main__":
    key = jax.random.PRNGKey(0)
    kx, kp = jax.random.split(key)
    in_ch, out_ch = 4, 8
    x = jax.random.normal(kx, (2, in_ch, 6, 6, 6), jnp.float32)  # NCDHW
    params = init_params(kp, in_ch, out_ch)

    y_ref = jax.block_until_ready(_reference_forward(x, params))

    # f32 compute mode: tight structural check against the XLA reference.
    y32 = jax.block_until_ready(
        block_forward(x, params, compute_dtype=jnp.float32))
    assert y32.shape == (2, out_ch, 8, 8, 8), y32.shape
    err32 = float(jnp.max(jnp.abs(y32 - y_ref)))
    assert jnp.allclose(y32, y_ref, atol=1e-3, rtol=1e-3), err32

    # Default fast path: bf16 MXU inputs, f32 accumulation (looser tolerance).
    y = jax.block_until_ready(block_forward(x, params))
    assert y.shape == (2, out_ch, 8, 8, 8), y.shape
    errbf = float(jnp.max(jnp.abs(y - y_ref)))
    assert jnp.allclose(y, y_ref, atol=1e-1, rtol=1e-1), errbf

    print("KERNEL_OK")
</pallas_src>

<mosaic_0001>
module attributes {stable_mosaic.version = 11 : i64} {
  func.func @_fused_block_kernel(%arg0: i32, %arg1: memref<1x8x1152xf32, #tpu.memory_space<vmem>>, %arg2: memref<8x8x8xf32, #tpu.memory_space<vmem>>, %arg3: memref<8x1xf32, #tpu.memory_space<vmem>>, %arg4: memref<8x8x8xf32, #tpu.memory_space<vmem>>, %arg5: memref<8x1xf32, #tpu.memory_space<vmem>>, %arg6: memref<1x1024xf32, #tpu.memory_space<vmem>>, %arg7: memref<1x8x1024xf32, #tpu.memory_space<vmem>>, %arg8: memref<8x1152xf32, #tpu.memory_space<vmem>>) attributes {dimension_semantics = [#tpu.dimension_semantics<parallel>], iteration_bounds = array<i64: 2>, scalar_prefetch = 0 : i64, scratch_operands = 1 : i64, tpu.core_type = #tpu.core_type<tc>, window_params = [{transform_indices = @transform_0, window_bounds = array<i64: 1, 8, 1152>}, {pipeline_mode = #tpu.pipeline_mode<synchronous>, transform_indices = @transform_1, window_bounds = array<i64: 8, 8, 8>}, {pipeline_mode = #tpu.pipeline_mode<synchronous>, transform_indices = @transform_2, window_bounds = array<i64: 8, 1>}, {pipeline_mode = #tpu.pipeline_mode<synchronous>, transform_indices = @transform_3, window_bounds = array<i64: 8, 8, 8>}, {pipeline_mode = #tpu.pipeline_mode<synchronous>, transform_indices = @transform_4, window_bounds = array<i64: 8, 1>}, {pipeline_mode = #tpu.pipeline_mode<synchronous>, transform_indices = @transform_5, window_bounds = array<i64: 1, 1024>}, {transform_indices = @transform_6, window_bounds = array<i64: 1, 8, 1024>}]} {
    %cst = arith.constant 0.000000e+00 : f32
    %0 = vector.broadcast %cst : f32 to vector<8x128xf32>
    %c0 = arith.constant 0 : index
    %c1024 = arith.constant 1024 : index
    %1 = vector.load %arg8[%c0, %c1024] : memref<8x1152xf32, #tpu.memory_space<vmem>>, vector<8x128xf32>
    tpu.vector_store %arg8[%c0, %c1024], %0 {strides = array<i32>} : memref<8x1152xf32, #tpu.memory_space<vmem>>, vector<8x128xf32>,
    %cst_0 = arith.constant 0.000000e+00 : f32
    %2 = vector.broadcast %cst_0 : f32 to vector<8x1024xf32>
    %c0_1 = arith.constant 0 : index
    %c0_2 = arith.constant 0 : index
    %c0_3 = arith.constant 0 : index
    %3 = vector.load %arg1[%c0_1, %c0_2, %c0_3] : memref<1x8x1152xf32, #tpu.memory_space<vmem>>, vector<1x8x1024xf32>
    %4 = vector.shape_cast %3 : vector<1x8x1024xf32> to vector<8x1024xf32>
    %c0_4 = arith.constant 0 : index
    %c0_5 = arith.constant 0 : index
    %c0_6 = arith.constant 0 : index
    %5 = vector.load %arg2[%c0_4, %c0_5, %c0_6] : memref<8x8x8xf32, #tpu.memory_space<vmem>>, vector<1x8x8xf32>
    %6 = vector.shape_cast %5 : vector<1x8x8xf32> to vector<8x8xf32>
    %cst_7 = arith.constant dense<0.000000e+00> : vector<8x1024xf32>
    %7 = tpu.matmul %6, %4, %cst_7 {dimension_numbers = #tpu.dot_dimension_numbers<[1], [0], [0], [1], [0, 0, 1, 1], [], []>} : vector<8x8xf32>, vector<8x1024xf32>, vector<8x1024xf32> -> vector<8x1024xf32>
    %8 = arith.addf %2, %7 : vector<8x1024xf32>
    %c0_8 = arith.constant 0 : index
    %c0_9 = arith.constant 0 : index
    %c1 = arith.constant 1 : index
    %9 = vector.load %arg1[%c0_8, %c0_9, %c1] : memref<1x8x1152xf32, #tpu.memory_space<vmem>>, vector<1x8x1024xf32>
    %10 = vector.shape_cast %9 : vector<1x8x1024xf32> to vector<8x1024xf32>
    %c1_10 = arith.constant 1 : index
    %c0_11 = arith.constant 0 : index
    %c0_12 = arith.constant 0 : index
    %11 = vector.load %arg2[%c1_10, %c0_11, %c0_12] : memref<8x8x8xf32, #tpu.memory_space<vmem>>, vector<1x8x8xf32>
    %12 = vector.shape_cast %11 : vector<1x8x8xf32> to vector<8x8xf32>
    %cst_13 = arith.constant dense<0.000000e+00> : vector<8x1024xf32>
    %13 = tpu.matmul %12, %10, %cst_13 {dimension_numbers = #tpu.dot_dimension_numbers<[1], [0], [0], [1], [0, 0, 1, 1], [], []>} : vector<8x8xf32>, vector<8x1024xf32>, vector<8x1024xf32> -> vector<8x1024xf32>
    %14 = arith.addf %8, %13 : vector<8x1024xf32>
    %c0_14 = arith.constant 0 : index
    %c0_15 = arith.constant 0 : index
    %c10 = arith.constant 10 : index
    %15 = vector.load %arg1[%c0_14, %c0_15, %c10] : memref<1x8x1152xf32, #tpu.memory_space<vmem>>, vector<1x8x1024xf32>
    %16 = vector.shape_cast %15 : vector<1x8x1024xf32> to vector<8x1024xf32>
    %c2 = arith.constant 2 : index
    %c0_16 = arith.constant 0 : index
    %c0_17 = arith.constant 0 : index
    %17 = vector.load %arg2[%c2, %c0_16, %c0_17] : memref<8x8x8xf32, #tpu.memory_space<vmem>>, vector<1x8x8xf32>
    %18 = vector.shape_cast %17 : vector<1x8x8xf32> to vector<8x8xf32>
    %cst_18 = arith.constant dense<0.000000e+00> : vector<8x1024xf32>
    %19 = tpu.matmul %18, %16, %cst_18 {dimension_numbers = #tpu.dot_dimension_numbers<[1], [0], [0], [1], [0, 0, 1, 1], [], []>} : vector<8x8xf32>, vector<8x1024xf32>, vector<8x1024xf32> -> vector<8x1024xf32>
    %20 = arith.addf %14, %19 : vector<8x1024xf32>
    %c0_19 = arith.constant 0 : index
    %c0_20 = arith.constant 0 : index
    %c11 = arith.constant 11 : index
    %21 = vector.load %arg1[%c0_19, %c0_20, %c11] : memref<1x8x1152xf32, #tpu.memory_space<vmem>>, vector<1x8x1024xf32>
    %22 = vector.shape_cast %21 : vector<1x8x1024xf32> to vector<8x1024xf32>
    %c3 = arith.constant 3 : index
    %c0_21 = arith.constant 0 : index
    %c0_22 = arith.constant 0 : index
    %23 = vector.load %arg2[%c3, %c0_21, %c0_22] : memref<8x8x8xf32, #tpu.memory_space<vmem>>, vector<1x8x8xf32>
    %24 = vector.shape_cast %23 : vector<1x8x8xf32> to vector<8x8xf32>
    %cst_23 = arith.constant dense<0.000000e+00> : vector<8x1024xf32>
    %25 = tpu.matmul %24, %22, %cst_23 {dimension_numbers = #tpu.dot_dimension_numbers<[1], [0], [0], [1], [0, 0, 1, 1], [], []>} : vector<8x8xf32>, vector<8x1024xf32>, vector<8x1024xf32> -> vector<8x1024xf32>
    %26 = arith.addf %20, %25 : vector<8x1024xf32>
    %c0_24 = arith.constant 0 : index
    %c0_25 = arith.constant 0 : index
    %c100 = arith.constant 100 : index
    %27 = vector.load %arg1[%c0_24, %c0_25, %c100] : memref<1x8x1152xf32, #tpu.memory_space<vmem>>, vector<1x8x1024xf32>
    %28 = vector.shape_cast %27 : vector<1x8x1024xf32> to vector<8x1024xf32>
    %c4 = arith.constant 4 : index
    %c0_26 = arith.constant 0 : index
    %c0_27 = arith.constant 0 : index
    %29 = vector.load %arg2[%c4, %c0_26, %c0_27] : memref<8x8x8xf32, #tpu.memory_space<vmem>>, vector<1x8x8xf32>
    %30 = vector.shape_cast %29 : vector<1x8x8xf32> to vector<8x8xf32>
    %cst_28 = arith.constant dense<0.000000e+00> : vector<8x1024xf32>
    %31 = tpu.matmul %30, %28, %cst_28 {dimension_numbers = #tpu.dot_dimension_numbers<[1], [0], [0], [1], [0, 0, 1, 1], [], []>} : vector<8x8xf32>, vector<8x1024xf32>, vector<8x1024xf32> -> vector<8x1024xf32>
    %32 = arith.addf %26, %31 : vector<8x1024xf32>
    %c0_29 = arith.constant 0 : index
    %c0_30 = arith.constant 0 : index
    %c101 = arith.constant 101 : index
    %33 = vector.load %arg1[%c0_29, %c0_30, %c101] : memref<1x8x1152xf32, #tpu.memory_space<vmem>>, vector<1x8x1024xf32>
    %34 = vector.shape_cast %33 : vector<1x8x1024xf32> to vector<8x1024xf32>
    %c5 = arith.constant 5 : index
    %c0_31 = arith.constant 0 : index
    %c0_32 = arith.constant 0 : index
    %35 = vector.load %arg2[%c5, %c0_31, %c0_32] : memref<8x8x8xf32, #tpu.memory_space<vmem>>, vector<1x8x8xf32>
    %36 = vector.shape_cast %35 : vector<1x8x8xf32> to vector<8x8xf32>
    %cst_33 = arith.constant dense<0.000000e+00> : vector<8x1024xf32>
    %37 = tpu.matmul %36, %34, %cst_33 {dimension_numbers = #tpu.dot_dimension_numbers<[1], [0], [0], [1], [0, 0, 1, 1], [], []>} : vector<8x8xf32>, vector<8x1024xf32>, vector<8x1024xf32> -> vector<8x1024xf32>
    %38 = arith.addf %32, %37 : vector<8x1024xf32>
    %c0_34 = arith.constant 0 : index
    %c0_35 = arith.constant 0 : index
    %c110 = arith.constant 110 : index
    %39 = vector.load %arg1[%c0_34, %c0_35, %c110] : memref<1x8x1152xf32, #tpu.memory_space<vmem>>, vector<1x8x1024xf32>
    %40 = vector.shape_cast %39 : vector<1x8x1024xf32> to vector<8x1024xf32>
    %c6 = arith.constant 6 : index
    %c0_36 = arith.constant 0 : index
    %c0_37 = arith.constant 0 : index
    %41 = vector.load %arg2[%c6, %c0_36, %c0_37] : memref<8x8x8xf32, #tpu.memory_space<vmem>>, vector<1x8x8xf32>
    %42 = vector.shape_cast %41 : vector<1x8x8xf32> to vector<8x8xf32>
    %cst_38 = arith.constant dense<0.000000e+00> : vector<8x1024xf32>
    %43 = tpu.matmul %42, %40, %cst_38 {dimension_numbers = #tpu.dot_dimension_numbers<[1], [0], [0], [1], [0, 0, 1, 1], [], []>} : vector<8x8xf32>, vector<8x1024xf32>, vector<8x1024xf32> -> vector<8x1024xf32>
    %44 = arith.addf %38, %43 : vector<8x1024xf32>
    %c0_39 = arith.constant 0 : index
    %c0_40 = arith.constant 0 : index
    %c111 = arith.constant 111 : index
    %45 = vector.load %arg1[%c0_39, %c0_40, %c111] : memref<1x8x1152xf32, #tpu.memory_space<vmem>>, vector<1x8x1024xf32>
    %46 = vector.shape_cast %45 : vector<1x8x1024xf32> to vector<8x1024xf32>
    %c7 = arith.constant 7 : index
    %c0_41 = arith.constant 0 : index
    %c0_42 = arith.constant 0 : index
    %47 = vector.load %arg2[%c7, %c0_41, %c0_42] : memref<8x8x8xf32, #tpu.memory_space<vmem>>, vector<1x8x8xf32>
    %48 = vector.shape_cast %47 : vector<1x8x8xf32> to vector<8x8xf32>
    %cst_43 = arith.constant dense<0.000000e+00> : vector<8x1024xf32>
    %49 = tpu.matmul %48, %46, %cst_43 {dimension_numbers = #tpu.dot_dimension_numbers<[1], [0], [0], [1], [0, 0, 1, 1], [], []>} : vector<8x8xf32>, vector<8x1024xf32>, vector<8x1024xf32> -> vector<8x1024xf32>
    %50 = arith.addf %44, %49 : vector<8x1024xf32>
    %c0_44 = arith.constant 0 : index
    %c0_45 = arith.constant 0 : index
    %51 = vector.load %arg3[%c0_44, %c0_45] : memref<8x1xf32, #tpu.memory_space<vmem>>, vector<8x1xf32>
    %52 = vector.broadcast %51 : vector<8x1xf32> to vector<8x1024xf32>
    %53 = arith.addf %50, %52 : vector<8x1024xf32>
    %cst_46 = arith.constant 0.000000e+00 : f32
    %54 = vector.broadcast %cst_46 : f32 to vector<8x1024xf32>
    %55 = arith.maximumf %53, %54 : vector<8x1024xf32>
    %c0_47 = arith.constant 0 : index
    %c0_48 = arith.constant 0 : index
    %56 = vector.load %arg6[%c0_47, %c0_48] : memref<1x1024xf32, #tpu.memory_space<vmem>>, vector<1x1024xf32>
    %57 = vector.broadcast %56 : vector<1x1024xf32> to vector<8x1024xf32>
    %58 = arith.mulf %55, %57 : vector<8x1024xf32>
    %c0_49 = arith.constant 0 : index
    %c0_50 = arith.constant 0 : index
    %59 = vector.load %arg8[%c0_49, %c0_50] : memref<8x1152xf32, #tpu.memory_space<vmem>>, vector<8x1024xf32>
    tpu.vector_store %arg8[%c0_49, %c0_50], %58 {strides = array<i32>} : memref<8x1152xf32, #tpu.memory_space<vmem>>, vector<8x1024xf32>,
    %cst_51 = arith.constant 0.000000e+00 : f32
    %60 = vector.broadcast %cst_51 : f32 to vector<8x1024xf32>
    %c0_52 = arith.constant 0 : index
    %c0_53 = arith.constant 0 : index
    %61 = vector.load %arg8[%c0_52, %c0_53] : memref<8x1152xf32, #tpu.memory_space<vmem>>, vector<8x1024xf32>
    %c0_54 = arith.constant 0 : index
    %c0_55 = arith.constant 0 : index
    %c0_56 = arith.constant 0 : index
    %62 = vector.load %arg4[%c0_54, %c0_55, %c0_56] : memref<8x8x8xf32, #tpu.memory_space<vmem>>, vector<1x8x8xf32>
    %63 = vector.shape_cast %62 : vector<1x8x8xf32> to vector<8x8xf32>
    %cst_57 = arith.constant dense<0.000000e+00> : vector<8x1024xf32>
    %64 = tpu.matmul %63, %61, %cst_57 {dimension_numbers = #tpu.dot_dimension_numbers<[1], [0], [0], [1], [0, 0, 1, 1], [], []>} : vector<8x8xf32>, vector<8x1024xf32>, vector<8x1024xf32> -> vector<8x1024xf32>
    %65 = arith.addf %60, %64 : vector<8x1024xf32>
    %c0_58 = arith.constant 0 : index
    %c1_59 = arith.constant 1 : index
    %66 = vector.load %arg8[%c0_58, %c1_59] : memref<8x1152xf32, #tpu.memory_space<vmem>>, vector<8x1024xf32>
    %c1_60 = arith.constant 1 : index
    %c0_61 = arith.constant 0 : index
    %c0_62 = arith.constant 0 : index
    %67 = vector.load %arg4[%c1_60, %c0_61, %c0_62] : memref<8x8x8xf32, #tpu.memory_space<vmem>>, vector<1x8x8xf32>
    %68 = vector.shape_cast %67 : vector<1x8x8xf32> to vector<8x8xf32>
    %cst_63 = arith.constant dense<0.000000e+00> : vector<8x1024xf32>
    %69 = tpu.matmul %68, %66, %cst_63 {dimension_numbers = #tpu.dot_dimension_numbers<[1], [0], [0], [1], [0, 0, 1, 1], [], []>} : vector<8x8xf32>, vector<8x1024xf32>, vector<8x1024xf32> -> vector<8x1024xf32>
    %70 = arith.addf %65, %69 : vector<8x1024xf32>
    %c0_64 = arith.constant 0 : index
    %c10_65 = arith.constant 10 : index
    %71 = vector.load %arg8[%c0_64, %c10_65] : memref<8x1152xf32, #tpu.memory_space<vmem>>, vector<8x1024xf32>
    %c2_66 = arith.constant 2 : index
    %c0_67 = arith.constant 0 : index
    %c0_68 = arith.constant 0 : index
    %72 = vector.load %arg4[%c2_66, %c0_67, %c0_68] : memref<8x8x8xf32, #tpu.memory_space<vmem>>, vector<1x8x8xf32>
    %73 = vector.shape_cast %72 : vector<1x8x8xf32> to vector<8x8xf32>
    %cst_69 = arith.constant dense<0.000000e+00> : vector<8x1024xf32>
    %74 = tpu.matmul %73, %71, %cst_69 {dimension_numbers = #tpu.dot_dimension_numbers<[1], [0], [0], [1], [0, 0, 1, 1], [], []>} : vector<8x8xf32>, vector<8x1024xf32>, vector<8x1024xf32> -> vector<8x1024xf32>
    %75 = arith.addf %70, %74 : vector<8x1024xf32>
    %c0_70 = arith.constant 0 : index
    %c11_71 = arith.constant 11 : index
    %76 = vector.load %arg8[%c0_70, %c11_71] : memref<8x1152xf32, #tpu.memory_space<vmem>>, vector<8x1024xf32>
    %c3_72 = arith.constant 3 : index
    %c0_73 = arith.constant 0 : index
    %c0_74 = arith.constant 0 : index
    %77 = vector.load %arg4[%c3_72, %c0_73, %c0_74] : memref<8x8x8xf32, #tpu.memory_space<vmem>>, vector<1x8x8xf32>
    %78 = vector.shape_cast %77 : vector<1x8x8xf32> to vector<8x8xf32>
    %cst_75 = arith.constant dense<0.000000e+00> : vector<8x1024xf32>
    %79 = tpu.matmul %78, %76, %cst_75 {dimension_numbers = #tpu.dot_dimension_numbers<[1], [0], [0], [1], [0, 0, 1, 1], [], []>} : vector<8x8xf32>, vector<8x1024xf32>, vector<8x1024xf32> -> vector<8x1024xf32>
    %80 = arith.addf %75, %79 : vector<8x1024xf32>
    %c0_76 = arith.constant 0 : index
    %c100_77 = arith.constant 100 : index
    %81 = vector.load %arg8[%c0_76, %c100_77] : memref<8x1152xf32, #tpu.memory_space<vmem>>, vector<8x1024xf32>
    %c4_78 = arith.constant 4 : index
    %c0_79 = arith.constant 0 : index
    %c0_80 = arith.constant 0 : index
    %82 = vector.load %arg4[%c4_78, %c0_79, %c0_80] : memref<8x8x8xf32, #tpu.memory_space<vmem>>, vector<1x8x8xf32>
    %83 = vector.shape_cast %82 : vector<1x8x8xf32> to vector<8x8xf32>
    %cst_81 = arith.constant dense<0.000000e+00> : vector<8x1024xf32>
    %84 = tpu.matmul %83, %81, %cst_81 {dimension_numbers = #tpu.dot_dimension_numbers<[1], [0], [0], [1], [0, 0, 1, 1], [], []>} : vector<8x8xf32>, vector<8x1024xf32>, vector<8x1024xf32> -> vector<8x1024xf32>
    %85 = arith.addf %80, %84 : vector<8x1024xf32>
    %c0_82 = arith.constant 0 : index
    %c101_83 = arith.constant 101 : index
    %86 = vector.load %arg8[%c0_82, %c101_83] : memref<8x1152xf32, #tpu.memory_space<vmem>>, vector<8x1024xf32>
    %c5_84 = arith.constant 5 : index
    %c0_85 = arith.constant 0 : index
    %c0_86 = arith.constant 0 : index
    %87 = vector.load %arg4[%c5_84, %c0_85, %c0_86] : memref<8x8x8xf32, #tpu.memory_space<vmem>>, vector<1x8x8xf32>
    %88 = vector.shape_cast %87 : vector<1x8x8xf32> to vector<8x8xf32>
    %cst_87 = arith.constant dense<0.000000e+00> : vector<8x1024xf32>
    %89 = tpu.matmul %88, %86, %cst_87 {dimension_numbers = #tpu.dot_dimension_numbers<[1], [0], [0], [1], [0, 0, 1, 1], [], []>} : vector<8x8xf32>, vector<8x1024xf32>, vector<8x1024xf32> -> vector<8x1024xf32>
    %90 = arith.addf %85, %89 : vector<8x1024xf32>
    %c0_88 = arith.constant 0 : index
    %c110_89 = arith.constant 110 : index
    %91 = vector.load %arg8[%c0_88, %c110_89] : memref<8x1152xf32, #tpu.memory_space<vmem>>, vector<8x1024xf32>
    %c6_90 = arith.constant 6 : index
    %c0_91 = arith.constant 0 : index
    %c0_92 = arith.constant 0 : index
    %92 = vector.load %arg4[%c6_90, %c0_91, %c0_92] : memref<8x8x8xf32, #tpu.memory_space<vmem>>, vector<1x8x8xf32>
    %93 = vector.shape_cast %92 : vector<1x8x8xf32> to vector<8x8xf32>
    %cst_93 = arith.constant dense<0.000000e+00> : vector<8x1024xf32>
    %94 = tpu.matmul %93, %91, %cst_93 {dimension_numbers = #tpu.dot_dimension_numbers<[1], [0], [0], [1], [0, 0, 1, 1], [], []>} : vector<8x8xf32>, vector<8x1024xf32>, vector<8x1024xf32> -> vector<8x1024xf32>
    %95 = arith.addf %90, %94 : vector<8x1024xf32>
    %c0_94 = arith.constant 0 : index
    %c111_95 = arith.constant 111 : index
    %96 = vector.load %arg8[%c0_94, %c111_95] : memref<8x1152xf32, #tpu.memory_space<vmem>>, vector<8x1024xf32>
    %c7_96 = arith.constant 7 : index
    %c0_97 = arith.constant 0 : index
    %c0_98 = arith.constant 0 : index
    %97 = vector.load %arg4[%c7_96, %c0_97, %c0_98] : memref<8x8x8xf32, #tpu.memory_space<vmem>>, vector<1x8x8xf32>
    %98 = vector.shape_cast %97 : vector<1x8x8xf32> to vector<8x8xf32>
    %cst_99 = arith.constant dense<0.000000e+00> : vector<8x1024xf32>
    %99 = tpu.matmul %98, %96, %cst_99 {dimension_numbers = #tpu.dot_dimension_numbers<[1], [0], [0], [1], [0, 0, 1, 1], [], []>} : vector<8x8xf32>, vector<8x1024xf32>, vector<8x1024xf32> -> vector<8x1024xf32>
    %100 = arith.addf %95, %99 : vector<8x1024xf32>
    %c0_100 = arith.constant 0 : index
    %c0_101 = arith.constant 0 : index
    %101 = vector.load %arg5[%c0_100, %c0_101] : memref<8x1xf32, #tpu.memory_space<vmem>>, vector<8x1xf32>
    %102 = vector.broadcast %101 : vector<8x1xf32> to vector<8x1024xf32>
    %103 = arith.addf %100, %102 : vector<8x1024xf32>
    %c0_102 = arith.constant 0 : index
    %c0_103 = arith.constant 0 : index
    %c0_104 = arith.constant 0 : index
    %104 = vector.load %arg7[%c0_102, %c0_103, %c0_104] : memref<1x8x1024xf32, #tpu.memory_space<vmem>>, vector<1x8x1024xf32>
    %105 = vector.shape_cast %104 : vector<1x8x1024xf32> to vector<8x1024xf32>
    %106 = vector.shape_cast %103 : vector<8x1024xf32> to vector<1x8x1024xf32>
    tpu.vector_store %arg7[%c0_102, %c0_103, %c0_104], %106 {strides = array<i32>} : memref<1x8x1024xf32, #tpu.memory_space<vmem>>, vector<1x8x1024xf32>,
    return
  }
  func.func @transform_0(%arg0: i32) -> (i32, i32, i32) {
    %c0_i32 = arith.constant 0 : i32
    %c0_i32_0 = arith.constant 0 : i32
    %c0_i32_1 = arith.constant 0 : i32
    return %arg0, %c0_i32, %c0_i32_0 : i32, i32, i32
  }
  func.func @transform_1(%arg0: i32) -> (i32, i32, i32) {
    %c0_i32 = arith.constant 0 : i32
    %c0_i32_0 = arith.constant 0 : i32
    %c0_i32_1 = arith.constant 0 : i32
    %c0_i32_2 = arith.constant 0 : i32
    return %c0_i32, %c0_i32_0, %c0_i32_1 : i32, i32, i32
  }
  func.func @transform_2(%arg0: i32) -> (i32, i32) {
    %c0_i32 = arith.constant 0 : i32
    %c0_i32_0 = arith.constant 0 : i32
    %c0_i32_1 = arith.constant 0 : i32
    return %c0_i32, %c0_i32_0 : i32, i32
  }
  func.func @transform_3(%arg0: i32) -> (i32, i32, i32) {
    %c0_i32 = arith.constant 0 : i32
    %c0_i32_0 = arith.constant 0 : i32
    %c0_i32_1 = arith.constant 0 : i32
    %c0_i32_2 = arith.constant 0 : i32
    return %c0_i32, %c0_i32_0, %c0_i32_1 : i32, i32, i32
  }
  func.func @transform_4(%arg0: i32) -> (i32, i32) {
    %c0_i32 = arith.constant 0 : i32
    %c0_i32_0 = arith.constant 0 : i32
    %c0_i32_1 = arith.constant 0 : i32
    return %c0_i32, %c0_i32_0 : i32, i32
  }
  func.func @transform_5(%arg0: i32) -> (i32, i32) {
    %c0_i32 = arith.constant 0 : i32
    %c0_i32_0 = arith.constant 0 : i32
    %c0_i32_1 = arith.constant 0 : i32
    return %c0_i32, %c0_i32_0 : i32, i32
  }
  func.func @transform_6(%arg0: i32) -> (i32, i32, i32) {
    %c0_i32 = arith.constant 0 : i32
    %c0_i32_0 = arith.constant 0 : i32
    %c0_i32_1 = arith.constant 0 : i32
    return %arg0, %c0_i32, %c0_i32_0 : i32, i32, i32
  }
}

</mosaic_0001>

<llo_original>
// kernel: block_forward.1
$region0: #{block_forward.1}
  #allocation0 [shape = 'u32[]', space=smem, size = 0x4, offset = 0x4, fixed_abs, tag = 'smem constant byte address 0x4 - core index']
  #allocation1 [shape = 'u32[72,128]{1,0:T(1,128)}', space=vmem, size = 0x9000, scoped, tag = 'internal scratch']
  #allocation2 [shape = 'f32[8,1152]{1,0:T(8,128)}', space=vmem, size = 0x9000, scoped, tag = 'scratch operand']
  %s0 = inlined_call_operand.vmem [shape: f32[2,8,1152], index: 0, kind: input, shape index: {}]
  %s1 = inlined_call_operand.vmem [shape: f32[8,8,8], index: 1, kind: input, shape index: {}]
  %s2 = inlined_call_operand.vmem [shape: f32[8,1], index: 2, kind: input, shape index: {}]
  %s3 = inlined_call_operand.vmem [shape: f32[8,8,8], index: 3, kind: input, shape index: {}]
  %s4 = inlined_call_operand.vmem [shape: f32[8,1], index: 4, kind: input, shape index: {}]
  %s5 = inlined_call_operand.vmem [shape: f32[1,1024], index: 5, kind: input, shape index: {}]
  %s6 = inlined_call_operand.vmem [shape: f32[2,8,1024], index: 6, kind: output, shape index: {}]
  %s7 = sld [smem:[#allocation0]]
  $region57: #{block_forward.1} parent=0
    _
  %s9 = ssub.s32 1, %s7
  %s10 = scalar_select 0, %s9, %s7
  loop: start=0, step=1, limit=4
  $region2: #{block_forward.1} parent=0 // loop_pre_header
    _
  $region3: #{block_forward.1} parent=0 // loop_header
    %s12 = sphi 0, %s16
    %p13 = scmp.ge.s32.totalorder %s12, 4
    %s22 = sphi 0, %s24
    %s25 = sphi 0, %s22
    %s26 = sphi 0, %s25
    %s42 = sphi 0, %s26
    %s46 = sphi 0, %s46
    %s48 = sphi 0, %s46
    %s49 = sphi 0, %s48
    %s63 = sphi 0, %s49
    %s67 = sphi 0, %s67
    %s69 = sphi 0, %s67
    %s70 = sphi 0, %s69
    %s84 = sphi 0, %s70
    %s88 = sphi 0, %s88
    %s90 = sphi 0, %s88
    %s91 = sphi 0, %s90
    %s105 = sphi 0, %s91
    %s109 = sphi 0, %s109
    %s111 = sphi 0, %s109
    %s112 = sphi 0, %s111
    %s126 = sphi 0, %s112
    %s130 = sphi 0, %s130
    %s132 = sphi 0, %s130
    %s133 = sphi 0, %s132
    %s147 = sphi 0, %s133
    %s153 = sphi 0, %s155
    %s156 = sphi 0, %s153
    %s157 = sphi 0, %s156
    %s173 = sphi 0, %s157
  $region4: #{block_forward.1} parent=0 // loop_header_branch
    %15 = sbr.rel (%p13) target = $region8
  $region5: #{block_forward.1} parent=0 // loop_body
    %s17 = ssub.s32 %s12, 1
    %s18 = ssub.s32 %s12, 2
    %s19 = sadd.s32 %s12, 1
    %s20 = ssub.s32 %s12, %s19
    %p21 = scmp.eq.s32.totalorder %s20, 0
    %s23 = sadd.s32 %s22, 1
    %s24 = scalar_select %p21, %s22, %s23
    %p27 = pneg %p21
    %p28 = scmp.eq.s32.totalorder %s12, 1
    %p29 = por %p27, %p28
    %p30 = scmp.ne.s32.totalorder %s22, %s25
    %p31 = scmp.eq.s32.totalorder %s12, 0
    %p32 = por %p30, %p31
    %p33 = scmp.ne.s32.totalorder %s22, %s25
    %p34 = scmp.eq.s32.totalorder %s17, 1
    %p35 = por %p33, %p34
    %p36 = scmp.ne.s32.totalorder %s25, %s26
    %p37 = scmp.eq.s32.totalorder %s17, 0
    %p38 = por %p36, %p37
    %p39 = scmp.ne.s32.totalorder %s25, %s26
    %p40 = scmp.eq.s32.totalorder %s18, 1
    %p41 = por %p39, %p40
    %p43 = scmp.ne.s32.totalorder %s26, %s42
    %p44 = scmp.eq.s32.totalorder %s18, 0
    %p45 = por %p43, %p44
    %s47 = sadd.s32 %s46, 1
    %p50 = scmp.eq.s32.totalorder %s12, 1
    %p51 = scmp.ne.s32.totalorder %s46, %s48
    %p52 = scmp.eq.s32.totalorder %s12, 0
    %p53 = por %p51, %p52
    %p54 = scmp.ne.s32.totalorder %s46, %s48
    %p55 = scmp.eq.s32.totalorder %s17, 1
    %p56 = por %p54, %p55
    %p57 = scmp.ne.s32.totalorder %s48, %s49
    %p58 = scmp.eq.s32.totalorder %s17, 0
    %p59 = por %p57, %p58
    %p60 = scmp.ne.s32.totalorder %s48, %s49
    %p61 = scmp.eq.s32.totalorder %s18, 1
    %p62 = por %p60, %p61
    %p64 = scmp.ne.s32.totalorder %s49, %s63
    %p65 = scmp.eq.s32.totalorder %s18, 0
    %p66 = por %p64, %p65
    %s68 = sadd.s32 %s67, 1
    %p71 = scmp.eq.s32.totalorder %s12, 1
    %p72 = scmp.ne.s32.totalorder %s67, %s69
    %p73 = scmp.eq.s32.totalorder %s12, 0
    %p74 = por %p72, %p73
    %p75 = scmp.ne.s32.totalorder %s67, %s69
    %p76 = scmp.eq.s32.totalorder %s17, 1
    %p77 = por %p75, %p76
    %p78 = scmp.ne.s32.totalorder %s69, %s70
    %p79 = scmp.eq.s32.totalorder %s17, 0
    %p80 = por %p78, %p79
    %p81 = scmp.ne.s32.totalorder %s69, %s70
    %p82 = scmp.eq.s32.totalorder %s18, 1
    %p83 = por %p81, %p82
    %p85 = scmp.ne.s32.totalorder %s70, %s84
    %p86 = scmp.eq.s32.totalorder %s18, 0
    %p87 = por %p85, %p86
    %s89 = sadd.s32 %s88, 1
    %p92 = scmp.eq.s32.totalorder %s12, 1
    %p93 = scmp.ne.s32.totalorder %s88, %s90
    %p94 = scmp.eq.s32.totalorder %s12, 0
    %p95 = por %p93, %p94
    %p96 = scmp.ne.s32.totalorder %s88, %s90
    %p97 = scmp.eq.s32.totalorder %s17, 1
    %p98 = por %p96, %p97
    %p99 = scmp.ne.s32.totalorder %s90, %s91
    %p100 = scmp.eq.s32.totalorder %s17, 0
    %p101 = por %p99, %p100
    %p102 = scmp.ne.s32.totalorder %s90, %s91
    %p103 = scmp.eq.s32.totalorder %s18, 1
    %p104 = por %p102, %p103
    %p106 = scmp.ne.s32.totalorder %s91, %s105
    %p107 = scmp.eq.s32.totalorder %s18, 0
    %p108 = por %p106, %p107
    %s110 = sadd.s32 %s109, 1
    %p113 = scmp.eq.s32.totalorder %s12, 1
    %p114 = scmp.ne.s32.totalorder %s109, %s111
    %p115 = scmp.eq.s32.totalorder %s12, 0
    %p116 = por %p114, %p115
    %p117 = scmp.ne.s32.totalorder %s109, %s111
    %p118 = scmp.eq.s32.totalorder %s17, 1
    %p119 = por %p117, %p118
    %p120 = scmp.ne.s32.totalorder %s111, %s112
    %p121 = scmp.eq.s32.totalorder %s17, 0
    %p122 = por %p120, %p121
    %p123 = scmp.ne.s32.totalorder %s111, %s112
    %p124 = scmp.eq.s32.totalorder %s18, 1
    %p125 = por %p123, %p124
    %p127 = scmp.ne.s32.totalorder %s112, %s126
    %p128 = scmp.eq.s32.totalorder %s18, 0
    %p129 = por %p127, %p128
    %s131 = sadd.s32 %s130, 1
    %p134 = scmp.eq.s32.totalorder %s12, 1
    %p135 = scmp.ne.s32.totalorder %s130, %s132
    %p136 = scmp.eq.s32.totalorder %s12, 0
    %p137 = por %p135, %p136
    %p138 = scmp.ne.s32.totalorder %s130, %s132
    %p139 = scmp.eq.s32.totalorder %s17, 1
    %p140 = por %p138, %p139
    %p141 = scmp.ne.s32.totalorder %s132, %s133
    %p142 = scmp.eq.s32.totalorder %s17, 0
    %p143 = por %p141, %p142
    %p144 = scmp.ne.s32.totalorder %s132, %s133
    %p145 = scmp.eq.s32.totalorder %s18, 1
    %p146 = por %p144, %p145
    %p148 = scmp.ne.s32.totalorder %s133, %s147
    %p149 = scmp.eq.s32.totalorder %s18, 0
    %p150 = por %p148, %p149
    %s151 = ssub.s32 %s12, %s19
    %p152 = scmp.eq.s32.totalorder %s151, 0
    %s154 = sadd.s32 %s153, 1
    %s155 = scalar_select %p152, %s153, %s154
    %p158 = pneg %p152
    %p159 = scmp.eq.s32.totalorder %s12, 1
    %p160 = por %p158, %p159
    %p161 = scmp.ne.s32.totalorder %s153, %s156
    %p162 = scmp.eq.s32.totalorder %s12, 0
    %p163 = por %p161, %p162
    %p164 = scmp.ne.s32.totalorder %s153, %s156
    %p165 = scmp.eq.s32.totalorder %s17, 1
    %p166 = por %p164, %p165
    %p167 = scmp.ne.s32.totalorder %s156, %s157
    %p168 = scmp.eq.s32.totalorder %s17, 0
    %p169 = por %p167, %p168
    %p170 = scmp.ne.s32.totalorder %s156, %s157
    %p171 = scmp.eq.s32.totalorder %s18, 1
    %p172 = por %p170, %p171
    %p174 = scmp.ne.s32.totalorder %s157, %s173
    %p175 = scmp.eq.s32.totalorder %s18, 0
    %p176 = por %p174, %p175
    %p177 = scmp.le.s32.totalorder 1, %s12
    %p178 = scmp.lt.s32.totalorder %s12, 3
    %p179 = pnand %p177, %p178
    %p180 = pneg %p179
    // Predicated region
    $region9: #{block_forward.1} parent=5 // pred_check
      _
    $region10: #{block_forward.1} parent=5 // pred_check_branch
      %182 = sbr.rel (%p179) target = $region12
    $region11: #{block_forward.1} parent=5 // pred_region
      %s183 = ssub.s32 %s12, 1
      // Predicated region
      $region13: #{block_forward.1} parent=11 // pred_check
        %p184 = pneg %p59
      $region14: #{block_forward.1} parent=11 // pred_check_branch
        %186 = sbr.rel (%p184) target = $region16
      $region15: #{block_forward.1} parent=11 // pred_region
        _
      $region16: #{block_forward.1} parent=11 // pred_fallthru
        _
      // Predicated region
      $region17: #{block_forward.1} parent=11 // pred_check
        %p187 = pneg %p80
      $region18: #{block_forward.1} parent=11 // pred_check_branch
        %189 = sbr.rel (%p187) target = $region20
      $region19: #{block_forward.1} parent=11 // pred_region
        _
      $region20: #{block_forward.1} parent=11 // pred_fallthru
        _
      // Predicated region
      $region21: #{block_forward.1} parent=11 // pred_check
        %p190 = pneg %p101
      $region22: #{block_forward.1} parent=11 // pred_check_branch
        %192 = sbr.rel (%p190) target = $region24
      $region23: #{block_forward.1} parent=11 // pred_region
        _
      $region24: #{block_forward.1} parent=11 // pred_fallthru
        _
      // Predicated region
      $region25: #{block_forward.1} parent=11 // pred_check
        %p193 = pneg %p122
      $region26: #{block_forward.1} parent=11 // pred_check_branch
        %195 = sbr.rel (%p193) target = $region28
      $region27: #{block_forward.1} parent=11 // pred_region
        _
      $region28: #{block_forward.1} parent=11 // pred_fallthru
        _
      // Predicated region
      $region29: #{block_forward.1} parent=11 // pred_check
        %p196 = pneg %p143
      $region30: #{block_forward.1} parent=11 // pred_check_branch
        %198 = sbr.rel (%p196) target = $region32
      $region31: #{block_forward.1} parent=11 // pred_region
        _
      $region32: #{block_forward.1} parent=11 // pred_fallthru
        _
    $region12: #{block_forward.1} parent=5 // pred_fallthru
      _
    %p199 = scmp.lt.s32.totalorder %s12, 2
    // Predicated region
    $region33: #{block_forward.1} parent=5 // pred_check
      %p200 = pneg %p199
    $region34: #{block_forward.1} parent=5 // pred_check_branch
      %202 = sbr.rel (%p200) target = $region36
    $region35: #{block_forward.1} parent=5 // pred_region
      // Predicated region
      $region37: #{block_forward.1} parent=35 // pred_check
        %p203 = pneg %p32
      $region38: #{block_forward.1} parent=35 // pred_check_branch
        %205 = sbr.rel (%p203) target = $region40
      $region39: #{block_forward.1} parent=35 // pred_region
        %p206 = scmp.lt.s32.totalorder %s12, 1
        %s207 = scalar_select %p206, %s12, 1
        %s208 = smul.addr %s207, 9
        %s209 = smul.addr %s208, 8
        %s210 = scalar_lea.vmem %s0, %s209
      $region40: #{block_forward.1} parent=35 // pred_fallthru
        _
    $region36: #{block_forward.1} parent=5 // pred_fallthru
      _
    %p211 = scmp.le.s32.totalorder 1, %s12
    %p212 = scmp.lt.s32.totalorder %s12, 3
    %p213 = pnand %p211, %p212
    %p214 = pneg %p213
    // Predicated region
    $region41: #{block_forward.1} parent=5 // pred_check
      _
    $region42: #{block_forward.1} parent=5 // pred_check_branch
      %216 = sbr.rel (%p213) target = $region44
    $region43: #{block_forward.1} parent=5 // pred_region
      %s217 = ssub.s32 %s12, 1
      %p218 = scmp.lt.s32.totalorder %s17, 1
      %s219 = scalar_select %p218, %s17, 1
      %s220 = smul.addr %s219, 9
      %s221 = smul.addr %s220, 8
      %s222 = scalar_lea.vmem %s0, %s221
      %p223 = pneg %p38
      %p224 = pneg %p35
      %p225 = pneg %p59
      %p226 = pneg %p56
      %p227 = pneg %p80
      %p228 = pneg %p77
      %p229 = pneg %p101
      %p230 = pneg %p98
      %p231 = pneg %p122
      %p232 = pneg %p119
      %p233 = pneg %p143
      %p234 = pneg %p140
      %p235 = pneg %p169
      %p236 = pneg %p166
      %p237 = scmp.lt.s32.totalorder %s17, 1
      %s238 = scalar_select %p237, %s17, 1
      %s239 = smul.addr %s238, 8
      %s240 = smul.addr %s239, 8
      %s241 = scalar_lea.vmem %s6, %s240
      %p242 = scmp.lt.s32.totalorder %s17, 1
      %s243 = scalar_select %p242, %s17, 1
      %s244 = smul.addr %s243, 9
      %s245 = smul.addr %s244, 8
      %s246 = scalar_lea.vmem %s0, %s245
      %p247 = scmp.lt.s32.totalorder %s17, 1
      %s248 = scalar_select %p247, %s17, 1
      %s249 = smul.addr %s248, 8
      %s250 = smul.addr %s249, 8
      %s251 = scalar_lea.vmem %s6, %s250
      %252 = vst [vmem:[#allocation2 + $0x40] sm:$0xff] 0.0
      %v253 = vld [vmem:[%s246] sm:$0xff]
      %v254 = vld [vmem:[%s246 + $0x8] sm:$0xff]
      %v255 = vld [vmem:[%s246 + $0x10] sm:$0xff]
      %v256 = vld [vmem:[%s246 + $0x18] sm:$0xff]
      %v257 = vld [vmem:[%s246 + $0x20] sm:$0xff]
      %v258 = vld [vmem:[%s246 + $0x28] sm:$0xff]
      %v259 = vld [vmem:[%s246 + $0x30] sm:$0xff]
      %v260 = vld [vmem:[%s246 + $0x38] sm:$0xff]
      %v261 = vld [vmem:[%s1] sm:$0xff]
      %v262 = vld [vmem:[%s246] sm:$0xff]
      %v263 = vld [vmem:[%s246 + $0x8] sm:$0xff]
      %v264 = vld [vmem:[%s246 + $0x10] sm:$0xff]
      %v265 = vld [vmem:[%s246 + $0x18] sm:$0xff]
      %v266 = vld [vmem:[%s246 + $0x20] sm:$0xff]
      %v267 = vld [vmem:[%s246 + $0x28] sm:$0xff]
      %v268 = vld [vmem:[%s246 + $0x30] sm:$0xff]
      %v269 = vld [vmem:[%s246 + $0x38] sm:$0xff]
      %v270 = vld [vmem:[%s246 + $0x40] sm:$0xff]
      %s271 = scalar_lea.vmem %s1, 8
      %v272 = vld [vmem:[%s271] sm:$0xff]
      %282 = vrot.lane.b32.xlu0 %v262, 127
      %v283 = vpop.permute.xlu0 %282
      %284 = vrot.lane.b32.xlu0 %v263, 127
      %v285 = vpop.permute.xlu0 %284
      %286 = vrot.lane.b32.xlu0 %v264, 127
      %v287 = vpop.permute.xlu0 %286
      %288 = vrot.lane.b32.xlu0 %v265, 127
      %v289 = vpop.permute.xlu0 %288
      %290 = vrot.lane.b32.xlu0 %v266, 127
      %v291 = vpop.permute.xlu0 %290
      %292 = vrot.lane.b32.xlu0 %v267, 127
      %v293 = vpop.permute.xlu0 %292
      %294 = vrot.lane.b32.xlu0 %v268, 127
      %v295 = vpop.permute.xlu0 %294
      %296 = vrot.lane.b32.xlu0 %v269, 127
      %v297 = vpop.permute.xlu0 %296
      %298 = vrot.lane.b32.xlu0 %v270, 127
      %v299 = vpop.permute.xlu0 %298
      %vm300 = vcmask 1039360
      %v301 = vsel %vm300, %v283, %v285
      %v302 = vsel %vm300, %v285, %v287
      %v303 = vsel %vm300, %v287, %v289
      %v304 = vsel %vm300, %v289, %v291
      %v305 = vsel %vm300, %v291, %v293
      %v306 = vsel %vm300, %v293, %v295
      %v307 = vsel %vm300, %v295, %v297
      %v308 = vsel %vm300, %v297, %v299
      %vm317 = vcmask 64512
      %v319 = vsel %vm317, %v272, 0
      %321 = vmatpush.msra.mxu0 0.0
      %322 = vmatpush.msra.mxu0 0.0
      %323 = vmatpush.msra.mxu0 0.0
      %324 = vmatpush.msra.mxu0 0.0
      %325 = vmatpush.msra.mxu0 0.0
      %326 = vmatpush.msra.mxu0 0.0
      %327 = vmatpush.msra.mxu0 0.0
      %328 = vmatpush.msra.mxu0 0.0
      %329 = vmatpush.msra.mxu0 0.0
      %330 = vmatpush.msra.mxu0 0.0
      %331 = vmatpush.msra.mxu0 0.0
      %332 = vmatpush.msra.mxu0 0.0
      %333 = vmatpush.msra.mxu0 0.0
      %334 = vmatpush.msra.mxu0 0.0
      %335 = vmatpush.msra.mxu0 0.0
      %336 = vmatpush.msra.mxu0 %v301
      %337 = vmatmul.f32.gmra.mxu0 %v319
      %v338 = vpop.f32.mrf.mxu0
      %v339 = vadd.f32 0.0, %v338
      %340 = vdwg.mxu0
      %341 = vmatpush.msra.mxu0 0.0
      %342 = vmatpush.msra.mxu0 0.0
      %343 = vmatpush.msra.mxu0 0.0
      %344 = vmatpush.msra.mxu0 0.0
      %345 = vmatpush.msra.mxu0 0.0
      %346 = vmatpush.msra.mxu0 0.0
      %347 = vmatpush.msra.mxu0 0.0
      %348 = vmatpush.msra.mxu0 0.0
      %349 = vmatpush.msra.mxu0 0.0
      %350 = vmatpush.msra.mxu0 0.0
      %351 = vmatpush.msra.mxu0 0.0
      %352 = vmatpush.msra.mxu0 0.0
      %353 = vmatpush.msra.mxu0 0.0
      %354 = vmatpush.msra.mxu0 0.0
      %355 = vmatpush.msra.mxu0 0.0
      %356 = vmatpush.msra.mxu0 %v302
      %357 = vmatmul.f32.gmra.mxu0 %v319
      %v358 = vpop.f32.mrf.mxu0
      %v359 = vadd.f32 0.0, %v358
      %360 = vdwg.mxu0
      %361 = vmatpush.msra.mxu0 0.0
      %362 = vmatpush.msra.mxu0 0.0
      %363 = vmatpush.msra.mxu0 0.0
      %364 = vmatpush.msra.mxu0 0.0
      %365 = vmatpush.msra.mxu0 0.0
      %366 = vmatpush.msra.mxu0 0.0
      %367 = vmatpush.msra.mxu0 0.0
      %368 = vmatpush.msra.mxu0 0.0
      %369 = vmatpush.msra.mxu0 0.0
      %370 = vmatpush.msra.mxu0 0.0
      %371 = vmatpush.msra.mxu0 0.0
      %372 = vmatpush.msra.mxu0 0.0
      %373 = vmatpush.msra.mxu0 0.0
      %374 = vmatpush.msra.mxu0 0.0
      %375 = vmatpush.msra.mxu0 0.0
      %376 = vmatpush.msra.mxu0 %v303
      %377 = vmatmul.f32.gmra.mxu0 %v319
      %v378 = vpop.f32.mrf.mxu0
      %v379 = vadd.f32 0.0, %v378
      %380 = vdwg.mxu0
      %381 = vmatpush.msra.mxu0 0.0
      %382 = vmatpush.msra.mxu0 0.0
      %383 = vmatpush.msra.mxu0 0.0
      %384 = vmatpush.msra.mxu0 0.0
      %385 = vmatpush.msra.mxu0 0.0
      %386 = vmatpush.msra.mxu0 0.0
      %387 = vmatpush.msra.mxu0 0.0
      %388 = vmatpush.msra.mxu0 0.0
      %389 = vmatpush.msra.mxu0 0.0
      %390 = vmatpush.msra.mxu0 0.0
      %391 = vmatpush.msra.mxu0 0.0
      %392 = vmatpush.msra.mxu0 0.0
      %393 = vmatpush.msra.mxu0 0.0
      %394 = vmatpush.msra.mxu0 0.0
      %395 = vmatpush.msra.mxu0 0.0
      %396 = vmatpush.msra.mxu0 %v304
      %397 = vmatmul.f32.gmra.mxu0 %v319
      %v398 = vpop.f32.mrf.mxu0
      %v399 = vadd.f32 0.0, %v398
      %400 = vdwg.mxu0
      %401 = vmatpush.msra.mxu0 0.0
      %402 = vmatpush.msra.mxu0 0.0
      %403 = vmatpush.msra.mxu0 0.0
      %404 = vmatpush.msra.mxu0 0.0
      %405 = vmatpush.msra.mxu0 0.0
      %406 = vmatpush.msra.mxu0 0.0
      %407 = vmatpush.msra.mxu0 0.0
      %408 = vmatpush.msra.mxu0 0.0
      %409 = vmatpush.msra.mxu0 0.0
      %410 = vmatpush.msra.mxu0 0.0
      %411 = vmatpush.msra.mxu0 0.0
      %412 = vmatpush.msra.mxu0 0.0
      %413 = vmatpush.msra.mxu0 0.0
      %414 = vmatpush.msra.mxu0 0.0
      %415 = vmatpush.msra.mxu0 0.0
      %416 = vmatpush.msra.mxu0 %v305
      %417 = vmatmul.f32.gmra.mxu0 %v319
      %v418 = vpop.f32.mrf.mxu0
      %v419 = vadd.f32 0.0, %v418
      %420 = vdwg.mxu0
      %421 = vmatpush.msra.mxu0 0.0
      %422 = vmatpush.msra.mxu0 0.0
      %423 = vmatpush.msra.mxu0 0.0
      %424 = vmatpush.msra.mxu0 0.0
      %425 = vmatpush.msra.mxu0 0.0
      %426 = vmatpush.msra.mxu0 0.0
      %427 = vmatpush.msra.mxu0 0.0
      %428 = vmatpush.msra.mxu0 0.0
      %429 = vmatpush.msra.mxu0 0.0
      %430 = vmatpush.msra.mxu0 0.0
      %431 = vmatpush.msra.mxu0 0.0
      %432 = vmatpush.msra.mxu0 0.0
      %433 = vmatpush.msra.mxu0 0.0
      %434 = vmatpush.msra.mxu0 0.0
      %435 = vmatpush.msra.mxu0 0.0
      %436 = vmatpush.msra.mxu0 %v306
      %437 = vmatmul.f32.gmra.mxu0 %v319
      %v438 = vpop.f32.mrf.mxu0
      %v439 = vadd.f32 0.0, %v438
      %440 = vdwg.mxu0
      %441 = vmatpush.msra.mxu0 0.0
      %442 = vmatpush.msra.mxu0 0.0
      %443 = vmatpush.msra.mxu0 0.0
      %444 = vmatpush.msra.mxu0 0.0
      %445 = vmatpush.msra.mxu0 0.0
      %446 = vmatpush.msra.mxu0 0.0
      %447 = vmatpush.msra.mxu0 0.0
      %448 = vmatpush.msra.mxu0 0.0
      %449 = vmatpush.msra.mxu0 0.0
      %450 = vmatpush.msra.mxu0 0.0
      %451 = vmatpush.msra.mxu0 0.0
      %452 = vmatpush.msra.mxu0 0.0
      %453 = vmatpush.msra.mxu0 0.0
      %454 = vmatpush.msra.mxu0 0.0
      %455 = vmatpush.msra.mxu0 0.0
      %456 = vmatpush.msra.mxu0 %v307
      %457 = vmatmul.f32.gmra.mxu0 %v319
      %v458 = vpop.f32.mrf.mxu0
      %v459 = vadd.f32 0.0, %v458
      %460 = vdwg.mxu0
      %461 = vmatpush.msra.mxu0 0.0
      %462 = vmatpush.msra.mxu0 0.0
      %463 = vmatpush.msra.mxu0 0.0
      %464 = vmatpush.msra.mxu0 0.0
      %465 = vmatpush.msra.mxu0 0.0
      %466 = vmatpush.msra.mxu0 0.0
      %467 = vmatpush.msra.mxu0 0.0
      %468 = vmatpush.msra.mxu0 0.0
      %469 = vmatpush.msra.mxu0 0.0
      %470 = vmatpush.msra.mxu0 0.0
      %471 = vmatpush.msra.mxu0 0.0
      %472 = vmatpush.msra.mxu0 0.0
      %473 = vmatpush.msra.mxu0 0.0
      %474 = vmatpush.msra.mxu0 0.0
      %475 = vmatpush.msra.mxu0 0.0
      %476 = vmatpush.msra.mxu0 %v308
      %477 = vmatmul.f32.gmra.mxu0 %v319
      %v478 = vpop.f32.mrf.mxu0
      %v479 = vadd.f32 0.0, %v478
      %480 = vdwg.mxu0
      %v482 = vsel %vm317, %v261, 0
      %484 = vmatpush.msra.mxu0 0.0
      %485 = vmatpush.msra.mxu0 0.0
      %486 = vmatpush.msra.mxu0 0.0
      %487 = vmatpush.msra.mxu0 0.0
      %488 = vmatpush.msra.mxu0 0.0
      %489 = vmatpush.msra.mxu0 0.0
      %490 = vmatpush.msra.mxu0 0.0
      %491 = vmatpush.msra.mxu0 0.0
      %492 = vmatpush.msra.mxu0 0.0
      %493 = vmatpush.msra.mxu0 0.0
      %494 = vmatpush.msra.mxu0 0.0
      %495 = vmatpush.msra.mxu0 0.0
      %496 = vmatpush.msra.mxu0 0.0
      %497 = vmatpush.msra.mxu0 0.0
      %498 = vmatpush.msra.mxu0 0.0
      %499 = vmatpush.msra.mxu0 %v253
      %500 = vmatmul.f32.gmra.mxu0 %v482
      %v501 = vpop.f32.mrf.mxu0
      %v502 = vadd.f32 %v339, %v501
      %503 = vdwg.mxu0
      %504 = vmatpush.msra.mxu0 0.0
      %505 = vmatpush.msra.mxu0 0.0
      %506 = vmatpush.msra.mxu0 0.0
      %507 = vmatpush.msra.mxu0 0.0
      %508 = vmatpush.msra.mxu0 0.0
      %509 = vmatpush.msra.mxu0 0.0
      %510 = vmatpush.msra.mxu0 0.0
      %511 = vmatpush.msra.mxu0 0.0
      %512 = vmatpush.msra.mxu0 0.0
      %513 = vmatpush.msra.mxu0 0.0
      %514 = vmatpush.msra.mxu0 0.0
      %515 = vmatpush.msra.mxu0 0.0
      %516 = vmatpush.msra.mxu0 0.0
      %517 = vmatpush.msra.mxu0 0.0
      %518 = vmatpush.msra.mxu0 0.0
      %519 = vmatpush.msra.mxu0 %v254
      %520 = vmatmul.f32.gmra.mxu0 %v482
      %v521 = vpop.f32.mrf.mxu0
      %v522 = vadd.f32 %v359, %v521
      %523 = vdwg.mxu0
      %524 = vmatpush.msra.mxu0 0.0
      %525 = vmatpush.msra.mxu0 0.0
      %526 = vmatpush.msra.mxu0 0.0
      %527 = vmatpush.msra.mxu0 0.0
      %528 = vmatpush.msra.mxu0 0.0
      %529 = vmatpush.msra.mxu0 0.0
      %530 = vmatpush.msra.mxu0 0.0
      %531 = vmatpush.msra.mxu0 0.0
      %532 = vmatpush.msra.mxu0 0.0
      %533 = vmatpush.msra.mxu0 0.0
      %534 = vmatpush.msra.mxu0 0.0
      %535 = vmatpush.msra.mxu0 0.0
      %536 = vmatpush.msra.mxu0 0.0
      %537 = vmatpush.msra.mxu0 0.0
      %538 = vmatpush.msra.mxu0 0.0
      %539 = vmatpush.msra.mxu0 %v255
      %540 = vmatmul.f32.gmra.mxu0 %v482
      %v541 = vpop.f32.mrf.mxu0
      %v542 = vadd.f32 %v379, %v541
      %543 = vdwg.mxu0
      %544 = vmatpush.msra.mxu0 0.0
      %545 = vmatpush.msra.mxu0 0.0
      %546 = vmatpush.msra.mxu0 0.0
      %547 = vmatpush.msra.mxu0 0.0
      %548 = vmatpush.msra.mxu0 0.0
      %549 = vmatpush.msra.mxu0 0.0
      %550 = vmatpush.msra.mxu0 0.0
      %551 = vmatpush.msra.mxu0 0.0
      %552 = vmatpush.msra.mxu0 0.0
      %553 = vmatpush.msra.mxu0 0.0
      %554 = vmatpush.msra.mxu0 0.0
      %555 = vmatpush.msra.mxu0 0.0
      %556 = vmatpush.msra.mxu0 0.0
      %557 = vmatpush.msra.mxu0 0.0
      %558 = vmatpush.msra.mxu0 0.0
      %559 = vmatpush.msra.mxu0 %v256
      %560 = vmatmul.f32.gmra.mxu0 %v482
      %v561 = vpop.f32.mrf.mxu0
      %v562 = vadd.f32 %v399, %v561
      %563 = vdwg.mxu0
      %564 = vmatpush.msra.mxu0 0.0
      %565 = vmatpush.msra.mxu0 0.0
      %566 = vmatpush.msra.mxu0 0.0
      %567 = vmatpush.msra.mxu0 0.0
      %568 = vmatpush.msra.mxu0 0.0
      %569 = vmatpush.msra.mxu0 0.0
      %570 = vmatpush.msra.mxu0 0.0
      %571 = vmatpush.msra.mxu0 0.0
      %572 = vmatpush.msra.mxu0 0.0
      %573 = vmatpush.msra.mxu0 0.0
      %574 = vmatpush.msra.mxu0 0.0
      %575 = vmatpush.msra.mxu0 0.0
      %576 = vmatpush.msra.mxu0 0.0
      %577 = vmatpush.msra.mxu0 0.0
      %578 = vmatpush.msra.mxu0 0.0
      %579 = vmatpush.msra.mxu0 %v257
      %580 = vmatmul.f32.gmra.mxu0 %v482
      %v581 = vpop.f32.mrf.mxu0
      %v582 = vadd.f32 %v419, %v581
      %583 = vdwg.mxu0
      %584 = vmatpush.msra.mxu0 0.0
      %585 = vmatpush.msra.mxu0 0.0
      %586 = vmatpush.msra.mxu0 0.0
      %587 = vmatpush.msra.mxu0 0.0
      %588 = vmatpush.msra.mxu0 0.0
      %589 = vmatpush.msra.mxu0 0.0
      %590 = vmatpush.msra.mxu0 0.0
      %591 = vmatpush.msra.mxu0 0.0
      %592 = vmatpush.msra.mxu0 0.0
      %593 = vmatpush.msra.mxu0 0.0
      %594 = vmatpush.msra.mxu0 0.0
      %595 = vmatpush.msra.mxu0 0.0
      %596 = vmatpush.msra.mxu0 0.0
      %597 = vmatpush.msra.mxu0 0.0
      %598 = vmatpush.msra.mxu0 0.0
      %599 = vmatpush.msra.mxu0 %v258
      %600 = vmatmul.f32.gmra.mxu0 %v482
      %v601 = vpop.f32.mrf.mxu0
      %v602 = vadd.f32 %v439, %v601
      %603 = vdwg.mxu0
      %604 = vmatpush.msra.mxu0 0.0
      %605 = vmatpush.msra.mxu0 0.0
      %606 = vmatpush.msra.mxu0 0.0
      %607 = vmatpush.msra.mxu0 0.0
      %608 = vmatpush.msra.mxu0 0.0
      %609 = vmatpush.msra.mxu0 0.0
      %610 = vmatpush.msra.mxu0 0.0
      %611 = vmatpush.msra.mxu0 0.0
      %612 = vmatpush.msra.mxu0 0.0
      %613 = vmatpush.msra.mxu0 0.0
      %614 = vmatpush.msra.mxu0 0.0
      %615 = vmatpush.msra.mxu0 0.0
      %616 = vmatpush.msra.mxu0 0.0
      %617 = vmatpush.msra.mxu0 0.0
      %618 = vmatpush.msra.mxu0 0.0
      %619 = vmatpush.msra.mxu0 %v259
      %620 = vmatmul.f32.gmra.mxu0 %v482
      %v621 = vpop.f32.mrf.mxu0
      %v622 = vadd.f32 %v459, %v621
      %623 = vdwg.mxu0
      %624 = vmatpush.msra.mxu0 0.0
      %625 = vmatpush.msra.mxu0 0.0
      %626 = vmatpush.msra.mxu0 0.0
      %627 = vmatpush.msra.mxu0 0.0
      %628 = vmatpush.msra.mxu0 0.0
      %629 = vmatpush.msra.mxu0 0.0
      %630 = vmatpush.msra.mxu0 0.0
      %631 = vmatpush.msra.mxu0 0.0
      %632 = vmatpush.msra.mxu0 0.0
      %633 = vmatpush.msra.mxu0 0.0
      %634 = vmatpush.msra.mxu0 0.0
      %635 = vmatpush.msra.mxu0 0.0
      %636 = vmatpush.msra.mxu0 0.0
      %637 = vmatpush.msra.mxu0 0.0
      %638 = vmatpush.msra.mxu0 0.0
      %639 = vmatpush.msra.mxu0 %v260
      %640 = vmatmul.f32.gmra.mxu0 %v482
      %v641 = vpop.f32.mrf.mxu0
      %v642 = vadd.f32 %v479, %v641
      %643 = vdwg.mxu0
      %s644 = scalar_lea.vmem %s1, 16
      %v645 = vld [vmem:[%s644] sm:$0xff]
      %646 = vrot.lane.b32.xlu0 %v262, 118
      %v647 = vpop.permute.xlu0 %646
      %648 = vrot.lane.b32.xlu0 %v263, 118
      %v649 = vpop.permute.xlu0 %648
      %650 = vrot.lane.b32.xlu0 %v264, 118
      %v651 = vpop.permute.xlu0 %650
      %652 = vrot.lane.b32.xlu0 %v265, 118
      %v653 = vpop.permute.xlu0 %652
      %654 = vrot.lane.b32.xlu0 %v266, 118
      %v655 = vpop.permute.xlu0 %654
      %656 = vrot.lane.b32.xlu0 %v267, 118
      %v657 = vpop.permute.xlu0 %656
      %658 = vrot.lane.b32.xlu0 %v268, 118
      %v659 = vpop.permute.xlu0 %658
      %660 = vrot.lane.b32.xlu0 %v269, 118
      %v661 = vpop.permute.xlu0 %660
      %662 = vrot.lane.b32.xlu0 %v270, 118
      %v663 = vpop.permute.xlu0 %662
      %vm664 = vcmask 965632
      %v665 = vsel %vm664, %v647, %v649
      %v666 = vsel %vm664, %v649, %v651
      %v667 = vsel %vm664, %v651, %v653
      %v668 = vsel %vm664, %v653, %v655
      %v669 = vsel %vm664, %v655, %v657
      %v670 = vsel %vm664, %v657, %v659
      %v671 = vsel %vm664, %v659, %v661
      %v672 = vsel %vm664, %v661, %v663
      %v682 = vsel %vm317, %v645, 0
      %684 = vmatpush.msra.mxu0 0.0
      %685 = vmatpush.msra.mxu0 0.0
      %686 = vmatpush.msra.mxu0 0.0
      %687 = vmatpush.msra.mxu0 0.0
      %688 = vmatpush.msra.mxu0 0.0
      %689 = vmatpush.msra.mxu0 0.0
      %690 = vmatpush.msra.mxu0 0.0
      %691 = vmatpush.msra.mxu0 0.0
      %692 = vmatpush.msra.mxu0 0.0
      %693 = vmatpush.msra.mxu0 0.0
      %694 = vmatpush.msra.mxu0 0.0
      %695 = vmatpush.msra.mxu0 0.0
      %696 = vmatpush.msra.mxu0 0.0
      %697 = vmatpush.msra.mxu0 0.0
      %698 = vmatpush.msra.mxu0 0.0
      %699 = vmatpush.msra.mxu0 %v665
      %700 = vmatmul.f32.gmra.mxu0 %v682
      %v701 = vpop.f32.mrf.mxu0
      %v702 = vadd.f32 0.0, %v701
      %703 = vdwg.mxu0
      %704 = vmatpush.msra.mxu0 0.0
      %705 = vmatpush.msra.mxu0 0.0
      %706 = vmatpush.msra.mxu0 0.0
      %707 = vmatpush.msra.mxu0 0.0
      %708 = vmatpush.msra.mxu0 0.0
      %709 = vmatpush.msra.mxu0 0.0
      %710 = vmatpush.msra.mxu0 0.0
      %711 = vmatpush.msra.mxu0 0.0
      %712 = vmatpush.msra.mxu0 0.0
      %713 = vmatpush.msra.mxu0 0.0
      %714 = vmatpush.msra.mxu0 0.0
      %715 = vmatpush.msra.mxu0 0.0
      %716 = vmatpush.msra.mxu0 0.0
      %717 = vmatpush.msra.mxu0 0.0
      %718 = vmatpush.msra.mxu0 0.0
      %719 = vmatpush.msra.mxu0 %v666
      %720 = vmatmul.f32.gmra.mxu0 %v682
      %v721 = vpop.f32.mrf.mxu0
      %v722 = vadd.f32 0.0, %v721
      %723 = vdwg.mxu0
      %724 = vmatpush.msra.mxu0 0.0
      %725 = vmatpush.msra.mxu0 0.0
      %726 = vmatpush.msra.mxu0 0.0
      %727 = vmatpush.msra.mxu0 0.0
      %728 = vmatpush.msra.mxu0 0.0
      %729 = vmatpush.msra.mxu0 0.0
      %730 = vmatpush.msra.mxu0 0.0
      %731 = vmatpush.msra.mxu0 0.0
      %732 = vmatpush.msra.mxu0 0.0
      %733 = vmatpush.msra.mxu0 0.0
      %734 = vmatpush.msra.mxu0 0.0
      %735 = vmatpush.msra.mxu0 0.0
      %736 = vmatpush.msra.mxu0 0.0
      %737 = vmatpush.msra.mxu0 0.0
      %738 = vmatpush.msra.mxu0 0.0
      %739 = vmatpush.msra.mxu0 %v667
      %740 = vmatmul.f32.gmra.mxu0 %v682
      %v741 = vpop.f32.mrf.mxu0
      %v742 = vadd.f32 0.0, %v741
      %743 = vdwg.mxu0
      %744 = vmatpush.msra.mxu0 0.0
      %745 = vmatpush.msra.mxu0 0.0
      %746 = vmatpush.msra.mxu0 0.0
      %747 = vmatpush.msra.mxu0 0.0
      %748 = vmatpush.msra.mxu0 0.0
      %749 = vmatpush.msra.mxu0 0.0
      %750 = vmatpush.msra.mxu0 0.0
      %751 = vmatpush.msra.mxu0 0.0
      %752 = vmatpush.msra.mxu0 0.0
      %753 = vmatpush.msra.mxu0 0.0
      %754 = vmatpush.msra.mxu0 0.0
      %755 = vmatpush.msra.mxu0 0.0
      %756 = vmatpush.msra.mxu0 0.0
      %757 = vmatpush.msra.mxu0 0.0
      %758 = vmatpush.msra.mxu0 0.0
      %759 = vmatpush.msra.mxu0 %v668
      %760 = vmatmul.f32.gmra.mxu0 %v682
      %v761 = vpop.f32.mrf.mxu0
      %v762 = vadd.f32 0.0, %v761
      %763 = vdwg.mxu0
      %764 = vmatpush.msra.mxu0 0.0
      %765 = vmatpush.msra.mxu0 0.0
      %766 = vmatpush.msra.mxu0 0.0
      %767 = vmatpush.msra.mxu0 0.0
      %768 = vmatpush.msra.mxu0 0.0
      %769 = vmatpush.msra.mxu0 0.0
      %770 = vmatpush.msra.mxu0 0.0
      %771 = vmatpush.msra.mxu0 0.0
      %772 = vmatpush.msra.mxu0 0.0
      %773 = vmatpush.msra.mxu0 0.0
      %774 = vmatpush.msra.mxu0 0.0
      %775 = vmatpush.msra.mxu0 0.0
      %776 = vmatpush.msra.mxu0 0.0
      %777 = vmatpush.msra.mxu0 0.0
      %778 = vmatpush.msra.mxu0 0.0
      %779 = vmatpush.msra.mxu0 %v669
      %780 = vmatmul.f32.gmra.mxu0 %v682
      %v781 = vpop.f32.mrf.mxu0
      %v782 = vadd.f32 0.0, %v781
      %783 = vdwg.mxu0
      %784 = vmatpush.msra.mxu0 0.0
      %785 = vmatpush.msra.mxu0 0.0
      %786 = vmatpush.msra.mxu0 0.0
      %787 = vmatpush.msra.mxu0 0.0
      %788 = vmatpush.msra.mxu0 0.0
      %789 = vmatpush.msra.mxu0 0.0
      %790 = vmatpush.msra.mxu0 0.0
      %791 = vmatpush.msra.mxu0 0.0
      %792 = vmatpush.msra.mxu0 0.0
      %793 = vmatpush.msra.mxu0 0.0
      %794 = vmatpush.msra.mxu0 0.0
      %795 = vmatpush.msra.mxu0 0.0
      %796 = vmatpush.msra.mxu0 0.0
      %797 = vmatpush.msra.mxu0 0.0
      %798 = vmatpush.msra.mxu0 0.0
      %799 = vmatpush.msra.mxu0 %v670
      %800 = vmatmul.f32.gmra.mxu0 %v682
      %v801 = vpop.f32.mrf.mxu0
      %v802 = vadd.f32 0.0, %v801
      %803 = vdwg.mxu0
      %804 = vmatpush.msra.mxu0 0.0
      %805 = vmatpush.msra.mxu0 0.0
      %806 = vmatpush.msra.mxu0 0.0
      %807 = vmatpush.msra.mxu0 0.0
      %808 = vmatpush.msra.mxu0 0.0
      %809 = vmatpush.msra.mxu0 0.0
      %810 = vmatpush.msra.mxu0 0.0
      %811 = vmatpush.msra.mxu0 0.0
      %812 = vmatpush.msra.mxu0 0.0
      %813 = vmatpush.msra.mxu0 0.0
      %814 = vmatpush.msra.mxu0 0.0
      %815 = vmatpush.msra.mxu0 0.0
      %816 = vmatpush.msra.mxu0 0.0
      %817 = vmatpush.msra.mxu0 0.0
      %818 = vmatpush.msra.mxu0 0.0
      %819 = vmatpush.msra.mxu0 %v671
      %820 = vmatmul.f32.gmra.mxu0 %v682
      %v821 = vpop.f32.mrf.mxu0
      %v822 = vadd.f32 0.0, %v821
      %823 = vdwg.mxu0
      %824 = vmatpush.msra.mxu0 0.0
      %825 = vmatpush.msra.mxu0 0.0
      %826 = vmatpush.msra.mxu0 0.0
      %827 = vmatpush.msra.mxu0 0.0
      %828 = vmatpush.msra.mxu0 0.0
      %829 = vmatpush.msra.mxu0 0.0
      %830 = vmatpush.msra.mxu0 0.0
      %831 = vmatpush.msra.mxu0 0.0
      %832 = vmatpush.msra.mxu0 0.0
      %833 = vmatpush.msra.mxu0 0.0
      %834 = vmatpush.msra.mxu0 0.0
      %835 = vmatpush.msra.mxu0 0.0
      %836 = vmatpush.msra.mxu0 0.0
      %837 = vmatpush.msra.mxu0 0.0
      %838 = vmatpush.msra.mxu0 0.0
      %839 = vmatpush.msra.mxu0 %v672
      %840 = vmatmul.f32.gmra.mxu0 %v682
      %v841 = vpop.f32.mrf.mxu0
      %v842 = vadd.f32 0.0, %v841
      %843 = vdwg.mxu0
      %v844 = vadd.f32 %v502, %v702
      %v845 = vadd.f32 %v522, %v722
      %v846 = vadd.f32 %v542, %v742
      %v847 = vadd.f32 %v562, %v762
      %v848 = vadd.f32 %v582, %v782
      %v849 = vadd.f32 %v602, %v802
      %v850 = vadd.f32 %v622, %v822
      %v851 = vadd.f32 %v642, %v842
      %s852 = scalar_lea.vmem %s1, 24
      %v853 = vld [vmem:[%s852] sm:$0xff]
      %854 = vrot.lane.b32.xlu0 %v262, 117
      %v855 = vpop.permute.xlu0 %854
      %856 = vrot.lane.b32.xlu0 %v263, 117
      %v857 = vpop.permute.xlu0 %856
      %858 = vrot.lane.b32.xlu0 %v264, 117
      %v859 = vpop.permute.xlu0 %858
      %860 = vrot.lane.b32.xlu0 %v265, 117
      %v861 = vpop.permute.xlu0 %860
      %862 = vrot.lane.b32.xlu0 %v266, 117
      %v863 = vpop.permute.xlu0 %862
      %864 = vrot.lane.b32.xlu0 %v267, 117
      %v865 = vpop.permute.xlu0 %864
      %866 = vrot.lane.b32.xlu0 %v268, 117
      %v867 = vpop.permute.xlu0 %866
      %868 = vrot.lane.b32.xlu0 %v269, 117
      %v869 = vpop.permute.xlu0 %868
      %870 = vrot.lane.b32.xlu0 %v270, 117
      %v871 = vpop.permute.xlu0 %870
      %vm872 = vcmask 957440
      %v873 = vsel %vm872, %v855, %v857
      %v874 = vsel %vm872, %v857, %v859
      %v875 = vsel %vm872, %v859, %v861
      %v876 = vsel %vm872, %v861, %v863
      %v877 = vsel %vm872, %v863, %v865
      %v878 = vsel %vm872, %v865, %v867
      %v879 = vsel %vm872, %v867, %v869
      %v880 = vsel %vm872, %v869, %v871
      %v890 = vsel %vm317, %v853, 0
      %892 = vmatpush.msra.mxu0 0.0
      %893 = vmatpush.msra.mxu0 0.0
      %894 = vmatpush.msra.mxu0 0.0
      %895 = vmatpush.msra.mxu0 0.0
      %896 = vmatpush.msra.mxu0 0.0
      %897 = vmatpush.msra.mxu0 0.0
      %898 = vmatpush.msra.mxu0 0.0
      %899 = vmatpush.msra.mxu0 0.0
      %900 = vmatpush.msra.mxu0 0.0
      %901 = vmatpush.msra.mxu0 0.0
      %902 = vmatpush.msra.mxu0 0.0
      %903 = vmatpush.msra.mxu0 0.0
      %904 = vmatpush.msra.mxu0 0.0
      %905 = vmatpush.msra.mxu0 0.0
      %906 = vmatpush.msra.mxu0 0.0
      %907 = vmatpush.msra.mxu0 %v873
      %908 = vmatmul.f32.gmra.mxu0 %v890
      %v909 = vpop.f32.mrf.mxu0
      %v910 = vadd.f32 0.0, %v909
      %911 = vdwg.mxu0
      %912 = vmatpush.msra.mxu0 0.0
      %913 = vmatpush.msra.mxu0 0.0
      %914 = vmatpush.msra.mxu0 0.0
      %915 = vmatpush.msra.mxu0 0.0
      %916 = vmatpush.msra.mxu0 0.0
      %917 = vmatpush.msra.mxu0 0.0
      %918 = vmatpush.msra.mxu0 0.0
      %919 = vmatpush.msra.mxu0 0.0
      %920 = vmatpush.msra.mxu0 0.0
      %921 = vmatpush.msra.mxu0 0.0
      %922 = vmatpush.msra.mxu0 0.0
      %923 = vmatpush.msra.mxu0 0.0
      %924 = vmatpush.msra.mxu0 0.0
      %925 = vmatpush.msra.mxu0 0.0
      %926 = vmatpush.msra.mxu0 0.0
      %927 = vmatpush.msra.mxu0 %v874
      %928 = vmatmul.f32.gmra.mxu0 %v890
      %v929 = vpop.f32.mrf.mxu0
      %v930 = vadd.f32 0.0, %v929
      %931 = vdwg.mxu0
      %932 = vmatpush.msra.mxu0 0.0
      %933 = vmatpush.msra.mxu0 0.0
      %934 = vmatpush.msra.mxu0 0.0
      %935 = vmatpush.msra.mxu0 0.0
      %936 = vmatpush.msra.mxu0 0.0
      %937 = vmatpush.msra.mxu0 0.0
      %938 = vmatpush.msra.mxu0 0.0
      %939 = vmatpush.msra.mxu0 0.0
      %940 = vmatpush.msra.mxu0 0.0
      %941 = vmatpush.msra.mxu0 0.0
      %942 = vmatpush.msra.mxu0 0.0
      %943 = vmatpush.msra.mxu0 0.0
      %944 = vmatpush.msra.mxu0 0.0
      %945 = vmatpush.msra.mxu0 0.0
      %946 = vmatpush.msra.mxu0 0.0
      %947 = vmatpush.msra.mxu0 %v875
      %948 = vmatmul.f32.gmra.mxu0 %v890
      %v949 = vpop.f32.mrf.mxu0
      %v950 = vadd.f32 0.0, %v949
      %951 = vdwg.mxu0
      %952 = vmatpush.msra.mxu0 0.0
      %953 = vmatpush.msra.mxu0 0.0
      %954 = vmatpush.msra.mxu0 0.0
      %955 = vmatpush.msra.mxu0 0.0
      %956 = vmatpush.msra.mxu0 0.0
      %957 = vmatpush.msra.mxu0 0.0
      %958 = vmatpush.msra.mxu0 0.0
      %959 = vmatpush.msra.mxu0 0.0
      %960 = vmatpush.msra.mxu0 0.0
      %961 = vmatpush.msra.mxu0 0.0
      %962 = vmatpush.msra.mxu0 0.0
      %963 = vmatpush.msra.mxu0 0.0
      %964 = vmatpush.msra.mxu0 0.0
      %965 = vmatpush.msra.mxu0 0.0
      %966 = vmatpush.msra.mxu0 0.0
      %967 = vmatpush.msra.mxu0 %v876
      %968 = vmatmul.f32.gmra.mxu0 %v890
      %v969 = vpop.f32.mrf.mxu0
      %v970 = vadd.f32 0.0, %v969
      %971 = vdwg.mxu0
      %972 = vmatpush.msra.mxu0 0.0
      %973 = vmatpush.msra.mxu0 0.0
      %974 = vmatpush.msra.mxu0 0.0
      %975 = vmatpush.msra.mxu0 0.0
      %976 = vmatpush.msra.mxu0 0.0
      %977 = vmatpush.msra.mxu0 0.0
      %978 = vmatpush.msra.mxu0 0.0
      %979 = vmatpush.msra.mxu0 0.0
      %980 = vmatpush.msra.mxu0 0.0
      %981 = vmatpush.msra.mxu0 0.0
      %982 = vmatpush.msra.mxu0 0.0
      %983 = vmatpush.msra.mxu0 0.0
      %984 = vmatpush.msra.mxu0 0.0
      %985 = vmatpush.msra.mxu0 0.0
      %986 = vmatpush.msra.mxu0 0.0
      %987 = vmatpush.msra.mxu0 %v877
      %988 = vmatmul.f32.gmra.mxu0 %v890
      %v989 = vpop.f32.mrf.mxu0
      %v990 = vadd.f32 0.0, %v989
      %991 = vdwg.mxu0
      %992 = vmatpush.msra.mxu0 0.0
      %993 = vmatpush.msra.mxu0 0.0
      %994 = vmatpush.msra.mxu0 0.0
      %995 = vmatpush.msra.mxu0 0.0
      %996 = vmatpush.msra.mxu0 0.0
      %997 = vmatpush.msra.mxu0 0.0
      %998 = vmatpush.msra.mxu0 0.0
      %999 = vmatpush.msra.mxu0 0.0
      %1000 = vmatpush.msra.mxu0 0.0
      %1001 = vmatpush.msra.mxu0 0.0
      %1002 = vmatpush.msra.mxu0 0.0
      %1003 = vmatpush.msra.mxu0 0.0
      %1004 = vmatpush.msra.mxu0 0.0
      %1005 = vmatpush.msra.mxu0 0.0
      %1006 = vmatpush.msra.mxu0 0.0
      %1007 = vmatpush.msra.mxu0 %v878
      %1008 = vmatmul.f32.gmra.mxu0 %v890
      %v1009 = vpop.f32.mrf.mxu0
      %v1010 = vadd.f32 0.0, %v1009
      %1011 = vdwg.mxu0
      %1012 = vmatpush.msra.mxu0 0.0
      %1013 = vmatpush.msra.mxu0 0.0
      %1014 = vmatpush.msra.mxu0 0.0
      %1015 = vmatpush.msra.mxu0 0.0
      %1016 = vmatpush.msra.mxu0 0.0
      %1017 = vmatpush.msra.mxu0 0.0
      %1018 = vmatpush.msra.mxu0 0.0
      %1019 = vmatpush.msra.mxu0 0.0
      %1020 = vmatpush.msra.mxu0 0.0
      %1021 = vmatpush.msra.mxu0 0.0
      %1022 = vmatpush.msra.mxu0 0.0
      %1023 = vmatpush.msra.mxu0 0.0
      %1024 = vmatpush.msra.mxu0 0.0
      %1025 = vmatpush.msra.mxu0 0.0
      %1026 = vmatpush.msra.mxu0 0.0
      %1027 = vmatpush.msra.mxu0 %v879
      %1028 = vmatmul.f32.gmra.mxu0 %v890
      %v1029 = vpop.f32.mrf.mxu0
      %v1030 = vadd.f32 0.0, %v1029
      %1031 = vdwg.mxu0
      %1032 = vmatpush.msra.mxu0 0.0
      %1033 = vmatpush.msra.mxu0 0.0
      %1034 = vmatpush.msra.mxu0 0.0
      %1035 = vmatpush.msra.mxu0 0.0
      %1036 = vmatpush.msra.mxu0 0.0
      %1037 = vmatpush.msra.mxu0 0.0
      %1038 = vmatpush.msra.mxu0 0.0
      %1039 = vmatpush.msra.mxu0 0.0
      %1040 = vmatpush.msra.mxu0 0.0
      %1041 = vmatpush.msra.mxu0 0.0
      %1042 = vmatpush.msra.mxu0 0.0
      %1043 = vmatpush.msra.mxu0 0.0
      %1044 = vmatpush.msra.mxu0 0.0
      %1045 = vmatpush.msra.mxu0 0.0
      %1046 = vmatpush.msra.mxu0 0.0
      %1047 = vmatpush.msra.mxu0 %v880
      %1048 = vmatmul.f32.gmra.mxu0 %v890
      %v1049 = vpop.f32.mrf.mxu0
      %v1050 = vadd.f32 0.0, %v1049
      %1051 = vdwg.mxu0
      %v1052 = vadd.f32 %v844, %v910
      %v1053 = vadd.f32 %v845, %v930
      %v1054 = vadd.f32 %v846, %v950
      %v1055 = vadd.f32 %v847, %v970
      %v1056 = vadd.f32 %v848, %v990
      %v1057 = vadd.f32 %v849, %v1010
      %v1058 = vadd.f32 %v850, %v1030
      %v1059 = vadd.f32 %v851, %v1050
      %s1060 = scalar_lea.vmem %s1, 32
      %v1061 = vld [vmem:[%s1060] sm:$0xff]
      %1062 = vrot.lane.b32.xlu0 %v262, 28
      %v1063 = vpop.permute.xlu0 %1062
      %1064 = vrot.lane.b32.xlu0 %v263, 28
      %v1065 = vpop.permute.xlu0 %1064
      %1066 = vrot.lane.b32.xlu0 %v264, 28
      %v1067 = vpop.permute.xlu0 %1066
      %1068 = vrot.lane.b32.xlu0 %v265, 28
      %v1069 = vpop.permute.xlu0 %1068
      %1070 = vrot.lane.b32.xlu0 %v266, 28
      %v1071 = vpop.permute.xlu0 %1070
      %1072 = vrot.lane.b32.xlu0 %v267, 28
      %v1073 = vpop.permute.xlu0 %1072
      %1074 = vrot.lane.b32.xlu0 %v268, 28
      %v1075 = vpop.permute.xlu0 %1074
      %1076 = vrot.lane.b32.xlu0 %v269, 28
      %v1077 = vpop.permute.xlu0 %1076
      %1078 = vrot.lane.b32.xlu0 %v270, 28
      %v1079 = vpop.permute.xlu0 %1078
      %vm1080 = vcmask 228352
      %v1081 = vsel %vm1080, %v1063, %v1065
      %v1082 = vsel %vm1080, %v1065, %v1067
      %v1083 = vsel %vm1080, %v1067, %v1069
      %v1084 = vsel %vm1080, %v1069, %v1071
      %v1085 = vsel %vm1080, %v1071, %v1073
      %v1086 = vsel %vm1080, %v1073, %v1075
      %v1087 = vsel %vm1080, %v1075, %v1077
      %v1088 = vsel %vm1080, %v1077, %v1079
      %v1098 = vsel %vm317, %v1061, 0
      %1100 = vmatpush.msra.mxu0 0.0
      %1101 = vmatpush.msra.mxu0 0.0
      %1102 = vmatpush.msra.mxu0 0.0
      %1103 = vmatpush.msra.mxu0 0.0
      %1104 = vmatpush.msra.mxu0 0.0
      %1105 = vmatpush.msra.mxu0 0.0
      %1106 = vmatpush.msra.mxu0 0.0
      %1107 = vmatpush.msra.mxu0 0.0
      %1108 = vmatpush.msra.mxu0 0.0
      %1109 = vmatpush.msra.mxu0 0.0
      %1110 = vmatpush.msra.mxu0 0.0
      %1111 = vmatpush.msra.mxu0 0.0
      %1112 = vmatpush.msra.mxu0 0.0
      %1113 = vmatpush.msra.mxu0 0.0
      %1114 = vmatpush.msra.mxu0 0.0
      %1115 = vmatpush.msra.mxu0 %v1081
      %1116 = vmatmul.f32.gmra.mxu0 %v1098
      %v1117 = vpop.f32.mrf.mxu0
      %v1118 = vadd.f32 0.0, %v1117
      %1119 = vdwg.mxu0
      %1120 = vmatpush.msra.mxu0 0.0
      %1121 = vmatpush.msra.mxu0 0.0
      %1122 = vmatpush.msra.mxu0 0.0
      %1123 = vmatpush.msra.mxu0 0.0
      %1124 = vmatpush.msra.mxu0 0.0
      %1125 = vmatpush.msra.mxu0 0.0
      %1126 = vmatpush.msra.mxu0 0.0
      %1127 = vmatpush.msra.mxu0 0.0
      %1128 = vmatpush.msra.mxu0 0.0
      %1129 = vmatpush.msra.mxu0 0.0
      %1130 = vmatpush.msra.mxu0 0.0
      %1131 = vmatpush.msra.mxu0 0.0
      %1132 = vmatpush.msra.mxu0 0.0
      %1133 = vmatpush.msra.mxu0 0.0
      %1134 = vmatpush.msra.mxu0 0.0
      %1135 = vmatpush.msra.mxu0 %v1082
      %1136 = vmatmul.f32.gmra.mxu0 %v1098
      %v1137 = vpop.f32.mrf.mxu0
      %v1138 = vadd.f32 0.0, %v1137
      %1139 = vdwg.mxu0
      %1140 = vmatpush.msra.mxu0 0.0
      %1141 = vmatpush.msra.mxu0 0.0
      %1142 = vmatpush.msra.mxu0 0.0
      %1143 = vmatpush.msra.mxu0 0.0
      %1144 = vmatpush.msra.mxu0 0.0
      %1145 = vmatpush.msra.mxu0 0.0
      %1146 = vmatpush.msra.mxu0 0.0
      %1147 = vmatpush.msra.mxu0 0.0
      %1148 = vmatpush.msra.mxu0 0.0
      %1149 = vmatpush.msra.mxu0 0.0
      %1150 = vmatpush.msra.mxu0 0.0
      %1151 = vmatpush.msra.mxu0 0.0
      %1152 = vmatpush.msra.mxu0 0.0
      %1153 = vmatpush.msra.mxu0 0.0
      %1154 = vmatpush.msra.mxu0 0.0
      %1155 = vmatpush.msra.mxu0 %v1083
      %1156 = vmatmul.f32.gmra.mxu0 %v1098
      %v1157 = vpop.f32.mrf.mxu0
      %v1158 = vadd.f32 0.0, %v1157
      %1159 = vdwg.mxu0
      %1160 = vmatpush.msra.mxu0 0.0
      %1161 = vmatpush.msra.mxu0 0.0
      %1162 = vmatpush.msra.mxu0 0.0
      %1163 = vmatpush.msra.mxu0 0.0
      %1164 = vmatpush.msra.mxu0 0.0
      %1165 = vmatpush.msra.mxu0 0.0
      %1166 = vmatpush.msra.mxu0 0.0
      %1167 = vmatpush.msra.mxu0 0.0
      %1168 = vmatpush.msra.mxu0 0.0
      %1169 = vmatpush.msra.mxu0 0.0
      %1170 = vmatpush.msra.mxu0 0.0
      %1171 = vmatpush.msra.mxu0 0.0
      %1172 = vmatpush.msra.mxu0 0.0
      %1173 = vmatpush.msra.mxu0 0.0
      %1174 = vmatpush.msra.mxu0 0.0
      %1175 = vmatpush.msra.mxu0 %v1084
      %1176 = vmatmul.f32.gmra.mxu0 %v1098
      %v1177 = vpop.f32.mrf.mxu0
      %v1178 = vadd.f32 0.0, %v1177
      %1179 = vdwg.mxu0
      %1180 = vmatpush.msra.mxu0 0.0
      %1181 = vmatpush.msra.mxu0 0.0
      %1182 = vmatpush.msra.mxu0 0.0
      %1183 = vmatpush.msra.mxu0 0.0
      %1184 = vmatpush.msra.mxu0 0.0
      %1185 = vmatpush.msra.mxu0 0.0
      %1186 = vmatpush.msra.mxu0 0.0
      %1187 = vmatpush.msra.mxu0 0.0
      %1188 = vmatpush.msra.mxu0 0.0
      %1189 = vmatpush.msra.mxu0 0.0
      %1190 = vmatpush.msra.mxu0 0.0
      %1191 = vmatpush.msra.mxu0 0.0
      %1192 = vmatpush.msra.mxu0 0.0
      %1193 = vmatpush.msra.mxu0 0.0
      %1194 = vmatpush.msra.mxu0 0.0
      %1195 = vmatpush.msra.mxu0 %v1085
      %1196 = vmatmul.f32.gmra.mxu0 %v1098
      %v1197 = vpop.f32.mrf.mxu0
      %v1198 = vadd.f32 0.0, %v1197
      %1199 = vdwg.mxu0
      %1200 = vmatpush.msra.mxu0 0.0
      %1201 = vmatpush.msra.mxu0 0.0
      %1202 = vmatpush.msra.mxu0 0.0
      %1203 = vmatpush.msra.mxu0 0.0
      %1204 = vmatpush.msra.mxu0 0.0
      %1205 = vmatpush.msra.mxu0 0.0
      %1206 = vmatpush.msra.mxu0 0.0
      %1207 = vmatpush.msra.mxu0 0.0
      %1208 = vmatpush.msra.mxu0 0.0
      %1209 = vmatpush.msra.mxu0 0.0
      %1210 = vmatpush.msra.mxu0 0.0
      %1211 = vmatpush.msra.mxu0 0.0
      %1212 = vmatpush.msra.mxu0 0.0
      %1213 = vmatpush.msra.mxu0 0.0
      %1214 = vmatpush.msra.mxu0 0.0
      %1215 = vmatpush.msra.mxu0 %v1086
      %1216 = vmatmul.f32.gmra.mxu0 %v1098
      %v1217 = vpop.f32.mrf.mxu0
      %v1218 = vadd.f32 0.0, %v1217
      %1219 = vdwg.mxu0
      %1220 = vmatpush.msra.mxu0 0.0
      %1221 = vmatpush.msra.mxu0 0.0
      %1222 = vmatpush.msra.mxu0 0.0
      %1223 = vmatpush.msra.mxu0 0.0
      %1224 = vmatpush.msra.mxu0 0.0
      %1225 = vmatpush.msra.mxu0 0.0
      %1226 = vmatpush.msra.mxu0 0.0
      %1227 = vmatpush.msra.mxu0 0.0
      %1228 = vmatpush.msra.mxu0 0.0
      %1229 = vmatpush.msra.mxu0 0.0
      %1230 = vmatpush.msra.mxu0 0.0
      %1231 = vmatpush.msra.mxu0 0.0
      %1232 = vmatpush.msra.mxu0 0.0
      %1233 = vmatpush.msra.mxu0 0.0
      %1234 = vmatpush.msra.mxu0 0.0
      %1235 = vmatpush.msra.mxu0 %v1087
      %1236 = vmatmul.f32.gmra.mxu0 %v1098
      %v1237 = vpop.f32.mrf.mxu0
      %v1238 = vadd.f32 0.0, %v1237
      %1239 = vdwg.mxu0
      %1240 = vmatpush.msra.mxu0 0.0
      %1241 = vmatpush.msra.mxu0 0.0
      %1242 = vmatpush.msra.mxu0 0.0
      %1243 = vmatpush.msra.mxu0 0.0
      %1244 = vmatpush.msra.mxu0 0.0
      %1245 = vmatpush.msra.mxu0 0.0
      %1246 = vmatpush.msra.mxu0 0.0
      %1247 = vmatpush.msra.mxu0 0.0
      %1248 = vmatpush.msra.mxu0 0.0
      %1249 = vmatpush.msra.mxu0 0.0
      %1250 = vmatpush.msra.mxu0 0.0
      %1251 = vmatpush.msra.mxu0 0.0
      %1252 = vmatpush.msra.mxu0 0.0
      %1253 = vmatpush.msra.mxu0 0.0
      %1254 = vmatpush.msra.mxu0 0.0
      %1255 = vmatpush.msra.mxu0 %v1088
      %1256 = vmatmul.f32.gmra.mxu0 %v1098
      %v1257 = vpop.f32.mrf.mxu0
      %v1258 = vadd.f32 0.0, %v1257
      %1259 = vdwg.mxu0
      %v1260 = vadd.f32 %v1052, %v1118
      %v1261 = vadd.f32 %v1053, %v1138
      %v1262 = vadd.f32 %v1054, %v1158
      %v1263 = vadd.f32 %v1055, %v1178
      %v1264 = vadd.f32 %v1056, %v1198
      %v1265 = vadd.f32 %v1057, %v1218
      %v1266 = vadd.f32 %v1058, %v1238
      %v1267 = vadd.f32 %v1059, %v1258
      %s1268 = scalar_lea.vmem %s1, 40
      %v1269 = vld [vmem:[%s1268] sm:$0xff]
      %1270 = vrot.lane.b32.xlu0 %v262, 27
      %v1271 = vpop.permute.xlu0 %1270
      %1272 = vrot.lane.b32.xlu0 %v263, 27
      %v1273 = vpop.permute.xlu0 %1272
      %1274 = vrot.lane.b32.xlu0 %v264, 27
      %v1275 = vpop.permute.xlu0 %1274
      %1276 = vrot.lane.b32.xlu0 %v265, 27
      %v1277 = vpop.permute.xlu0 %1276
      %1278 = vrot.lane.b32.xlu0 %v266, 27
      %v1279 = vpop.permute.xlu0 %1278
      %1280 = vrot.lane.b32.xlu0 %v267, 27
      %v1281 = vpop.permute.xlu0 %1280
      %1282 = vrot.lane.b32.xlu0 %v268, 27
      %v1283 = vpop.permute.xlu0 %1282
      %1284 = vrot.lane.b32.xlu0 %v269, 27
      %v1285 = vpop.permute.xlu0 %1284
      %1286 = vrot.lane.b32.xlu0 %v270, 27
      %v1287 = vpop.permute.xlu0 %1286
      %vm1288 = vcmask 220160
      %v1289 = vsel %vm1288, %v1271, %v1273
      %v1290 = vsel %vm1288, %v1273, %v1275
      %v1291 = vsel %vm1288, %v1275, %v1277
      %v1292 = vsel %vm1288, %v1277, %v1279
      %v1293 = vsel %vm1288, %v1279, %v1281
      %v1294 = vsel %vm1288, %v1281, %v1283
      %v1295 = vsel %vm1288, %v1283, %v1285
      %v1296 = vsel %vm1288, %v1285, %v1287
      %v1306 = vsel %vm317, %v1269, 0
      %1308 = vmatpush.msra.mxu0 0.0
      %1309 = vmatpush.msra.mxu0 0.0
      %1310 = vmatpush.msra.mxu0 0.0
      %1311 = vmatpush.msra.mxu0 0.0
      %1312 = vmatpush.msra.mxu0 0.0
      %1313 = vmatpush.msra.mxu0 0.0
      %1314 = vmatpush.msra.mxu0 0.0
      %1315 = vmatpush.msra.mxu0 0.0
      %1316 = vmatpush.msra.mxu0 0.0
      %1317 = vmatpush.msra.mxu0 0.0
      %1318 = vmatpush.msra.mxu0 0.0
      %1319 = vmatpush.msra.mxu0 0.0
      %1320 = vmatpush.msra.mxu0 0.0
      %1321 = vmatpush.msra.mxu0 0.0
      %1322 = vmatpush.msra.mxu0 0.0
      %1323 = vmatpush.msra.mxu0 %v1289
      %1324 = vmatmul.f32.gmra.mxu0 %v1306
      %v1325 = vpop.f32.mrf.mxu0
      %v1326 = vadd.f32 0.0, %v1325
      %1327 = vdwg.mxu0
      %1328 = vmatpush.msra.mxu0 0.0
      %1329 = vmatpush.msra.mxu0 0.0
      %1330 = vmatpush.msra.mxu0 0.0
      %1331 = vmatpush.msra.mxu0 0.0
      %1332 = vmatpush.msra.mxu0 0.0
      %1333 = vmatpush.msra.mxu0 0.0
      %1334 = vmatpush.msra.mxu0 0.0
      %1335 = vmatpush.msra.mxu0 0.0
      %1336 = vmatpush.msra.mxu0 0.0
      %1337 = vmatpush.msra.mxu0 0.0
      %1338 = vmatpush.msra.mxu0 0.0
      %1339 = vmatpush.msra.mxu0 0.0
      %1340 = vmatpush.msra.mxu0 0.0
      %1341 = vmatpush.msra.mxu0 0.0
      %1342 = vmatpush.msra.mxu0 0.0
      %1343 = vmatpush.msra.mxu0 %v1290
      %1344 = vmatmul.f32.gmra.mxu0 %v1306
      %v1345 = vpop.f32.mrf.mxu0
      %v1346 = vadd.f32 0.0, %v1345
      %1347 = vdwg.mxu0
      %1348 = vmatpush.msra.mxu0 0.0
      %1349 = vmatpush.msra.mxu0 0.0
      %1350 = vmatpush.msra.mxu0 0.0
      %1351 = vmatpush.msra.mxu0 0.0
      %1352 = vmatpush.msra.mxu0 0.0
      %1353 = vmatpush.msra.mxu0 0.0
      %1354 = vmatpush.msra.mxu0 0.0
      %1355 = vmatpush.msra.mxu0 0.0
      %1356 = vmatpush.msra.mxu0 0.0
      %1357 = vmatpush.msra.mxu0 0.0
      %1358 = vmatpush.msra.mxu0 0.0
      %1359 = vmatpush.msra.mxu0 0.0
      %1360 = vmatpush.msra.mxu0 0.0
      %1361 = vmatpush.msra.mxu0 0.0
      %1362 = vmatpush.msra.mxu0 0.0
      %1363 = vmatpush.msra.mxu0 %v1291
      %1364 = vmatmul.f32.gmra.mxu0 %v1306
      %v1365 = vpop.f32.mrf.mxu0
      %v1366 = vadd.f32 0.0, %v1365
      %1367 = vdwg.mxu0
      %1368 = vmatpush.msra.mxu0 0.0
      %1369 = vmatpush.msra.mxu0 0.0
      %1370 = vmatpush.msra.mxu0 0.0
      %1371 = vmatpush.msra.mxu0 0.0
      %1372 = vmatpush.msra.mxu0 0.0
      %1373 = vmatpush.msra.mxu0 0.0
      %1374 = vmatpush.msra.mxu0 0.0
      %1375 = vmatpush.msra.mxu0 0.0
      %1376 = vmatpush.msra.mxu0 0.0
      %1377 = vmatpush.msra.mxu0 0.0
      %1378 = vmatpush.msra.mxu0 0.0
      %1379 = vmatpush.msra.mxu0 0.0
      %1380 = vmatpush.msra.mxu0 0.0
      %1381 = vmatpush.msra.mxu0 0.0
      %1382 = vmatpush.msra.mxu0 0.0
      %1383 = vmatpush.msra.mxu0 %v1292
      %1384 = vmatmul.f32.gmra.mxu0 %v1306
      %v1385 = vpop.f32.mrf.mxu0
      %v1386 = vadd.f32 0.0, %v1385
      %1387 = vdwg.mxu0
      %1388 = vmatpush.msra.mxu0 0.0
      %1389 = vmatpush.msra.mxu0 0.0
      %1390 = vmatpush.msra.mxu0 0.0
      %1391 = vmatpush.msra.mxu0 0.0
      %1392 = vmatpush.msra.mxu0 0.0
      %1393 = vmatpush.msra.mxu0 0.0
      %1394 = vmatpush.msra.mxu0 0.0
      %1395 = vmatpush.msra.mxu0 0.0
      %1396 = vmatpush.msra.mxu0 0.0
      %1397 = vmatpush.msra.mxu0 0.0
      %1398 = vmatpush.msra.mxu0 0.0
      %1399 = vmatpush.msra.mxu0 0.0
      %1400 = vmatpush.msra.mxu0 0.0
      %1401 = vmatpush.msra.mxu0 0.0
      %1402 = vmatpush.msra.mxu0 0.0
      %1403 = vmatpush.msra.mxu0 %v1293
      %1404 = vmatmul.f32.gmra.mxu0 %v1306
      %v1405 = vpop.f32.mrf.mxu0
      %v1406 = vadd.f32 0.0, %v1405
      %1407 = vdwg.mxu0
      %1408 = vmatpush.msra.mxu0 0.0
      %1409 = vmatpush.msra.mxu0 0.0
      %1410 = vmatpush.msra.mxu0 0.0
      %1411 = vmatpush.msra.mxu0 0.0
      %1412 = vmatpush.msra.mxu0 0.0
      %1413 = vmatpush.msra.mxu0 0.0
      %1414 = vmatpush.msra.mxu0 0.0
      %1415 = vmatpush.msra.mxu0 0.0
      %1416 = vmatpush.msra.mxu0 0.0
      %1417 = vmatpush.msra.mxu0 0.0
      %1418 = vmatpush.msra.mxu0 0.0
      %1419 = vmatpush.msra.mxu0 0.0
      %1420 = vmatpush.msra.mxu0 0.0
      %1421 = vmatpush.msra.mxu0 0.0
      %1422 = vmatpush.msra.mxu0 0.0
      %1423 = vmatpush.msra.mxu0 %v1294
      %1424 = vmatmul.f32.gmra.mxu0 %v1306
      %v1425 = vpop.f32.mrf.mxu0
      %v1426 = vadd.f32 0.0, %v1425
      %1427 = vdwg.mxu0
      %1428 = vmatpush.msra.mxu0 0.0
      %1429 = vmatpush.msra.mxu0 0.0
      %1430 = vmatpush.msra.mxu0 0.0
      %1431 = vmatpush.msra.mxu0 0.0
      %1432 = vmatpush.msra.mxu0 0.0
      %1433 = vmatpush.msra.mxu0 0.0
      %1434 = vmatpush.msra.mxu0 0.0
      %1435 = vmatpush.msra.mxu0 0.0
      %1436 = vmatpush.msra.mxu0 0.0
      %1437 = vmatpush.msra.mxu0 0.0
      %1438 = vmatpush.msra.mxu0 0.0
      %1439 = vmatpush.msra.mxu0 0.0
      %1440 = vmatpush.msra.mxu0 0.0
      %1441 = vmatpush.msra.mxu0 0.0
      %1442 = vmatpush.msra.mxu0 0.0
      %1443 = vmatpush.msra.mxu0 %v1295
      %1444 = vmatmul.f32.gmra.mxu0 %v1306
      %v1445 = vpop.f32.mrf.mxu0
      %v1446 = vadd.f32 0.0, %v1445
      %1447 = vdwg.mxu0
      %1448 = vmatpush.msra.mxu0 0.0
      %1449 = vmatpush.msra.mxu0 0.0
      %1450 = vmatpush.msra.mxu0 0.0
      %1451 = vmatpush.msra.mxu0 0.0
      %1452 = vmatpush.msra.mxu0 0.0
      %1453 = vmatpush.msra.mxu0 0.0
      %1454 = vmatpush.msra.mxu0 0.0
      %1455 = vmatpush.msra.mxu0 0.0
      %1456 = vmatpush.msra.mxu0 0.0
      %1457 = vmatpush.msra.mxu0 0.0
      %1458 = vmatpush.msra.mxu0 0.0
      %1459 = vmatpush.msra.mxu0 0.0
      %1460 = vmatpush.msra.mxu0 0.0
      %1461 = vmatpush.msra.mxu0 0.0
      %1462 = vmatpush.msra.mxu0 0.0
      %1463 = vmatpush.msra.mxu0 %v1296
      %1464 = vmatmul.f32.gmra.mxu0 %v1306
      %v1465 = vpop.f32.mrf.mxu0
      %v1466 = vadd.f32 0.0, %v1465
      %1467 = vdwg.mxu0
      %v1468 = vadd.f32 %v1260, %v1326
      %v1469 = vadd.f32 %v1261, %v1346
      %v1470 = vadd.f32 %v1262, %v1366
      %v1471 = vadd.f32 %v1263, %v1386
      %v1472 = vadd.f32 %v1264, %v1406
      %v1473 = vadd.f32 %v1265, %v1426
      %v1474 = vadd.f32 %v1266, %v1446
      %v1475 = vadd.f32 %v1267, %v1466
      %s1476 = scalar_lea.vmem %s1, 48
      %v1477 = vld [vmem:[%s1476] sm:$0xff]
      %1478 = vrot.lane.b32.xlu0 %v262, 18
      %v1479 = vpop.permute.xlu0 %1478
      %1480 = vrot.lane.b32.xlu0 %v263, 18
      %v1481 = vpop.permute.xlu0 %1480
      %1482 = vrot.lane.b32.xlu0 %v264, 18
      %v1483 = vpop.permute.xlu0 %1482
      %1484 = vrot.lane.b32.xlu0 %v265, 18
      %v1485 = vpop.permute.xlu0 %1484
      %1486 = vrot.lane.b32.xlu0 %v266, 18
      %v1487 = vpop.permute.xlu0 %1486
      %1488 = vrot.lane.b32.xlu0 %v267, 18
      %v1489 = vpop.permute.xlu0 %1488
      %1490 = vrot.lane.b32.xlu0 %v268, 18
      %v1491 = vpop.permute.xlu0 %1490
      %1492 = vrot.lane.b32.xlu0 %v269, 18
      %v1493 = vpop.permute.xlu0 %1492
      %1494 = vrot.lane.b32.xlu0 %v270, 18
      %v1495 = vpop.permute.xlu0 %1494
      %vm1496 = vcmask 146432
      %v1497 = vsel %vm1496, %v1479, %v1481
      %v1498 = vsel %vm1496, %v1481, %v1483
      %v1499 = vsel %vm1496, %v1483, %v1485
      %v1500 = vsel %vm1496, %v1485, %v1487
      %v1501 = vsel %vm1496, %v1487, %v1489
      %v1502 = vsel %vm1496, %v1489, %v1491
      %v1503 = vsel %vm1496, %v1491, %v1493
      %v1504 = vsel %vm1496, %v1493, %v1495
      %v1514 = vsel %vm317, %v1477, 0
      %1516 = vmatpush.msra.mxu0 0.0
      %1517 = vmatpush.msra.mxu0 0.0
      %1518 = vmatpush.msra.mxu0 0.0
      %1519 = vmatpush.msra.mxu0 0.0
      %1520 = vmatpush.msra.mxu0 0.0
      %1521 = vmatpush.msra.mxu0 0.0
      %1522 = vmatpush.msra.mxu0 0.0
      %1523 = vmatpush.msra.mxu0 0.0
      %1524 = vmatpush.msra.mxu0 0.0
      %1525 = vmatpush.msra.mxu0 0.0
      %1526 = vmatpush.msra.mxu0 0.0
      %1527 = vmatpush.msra.mxu0 0.0
      %1528 = vmatpush.msra.mxu0 0.0
      %1529 = vmatpush.msra.mxu0 0.0
      %1530 = vmatpush.msra.mxu0 0.0
      %1531 = vmatpush.msra.mxu0 %v1497
      %1532 = vmatmul.f32.gmra.mxu0 %v1514
      %v1533 = vpop.f32.mrf.mxu0
      %v1534 = vadd.f32 0.0, %v1533
      %1535 = vdwg.mxu0
      %1536 = vmatpush.msra.mxu0 0.0
      %1537 = vmatpush.msra.mxu0 0.0
      %1538 = vmatpush.msra.mxu0 0.0
      %1539 = vmatpush.msra.mxu0 0.0
      %1540 = vmatpush.msra.mxu0 0.0
      %1541 = vmatpush.msra.mxu0 0.0
      %1542 = vmatpush.msra.mxu0 0.0
      %1543 = vmatpush.msra.mxu0 0.0
      %1544 = vmatpush.msra.mxu0 0.0
      %1545 = vmatpush.msra.mxu0 0.0
      %1546 = vmatpush.msra.mxu0 0.0
      %1547 = vmatpush.msra.mxu0 0.0
      %1548 = vmatpush.msra.mxu0 0.0
      %1549 = vmatpush.msra.mxu0 0.0
      %1550 = vmatpush.msra.mxu0 0.0
      %1551 = vmatpush.msra.mxu0 %v1498
      %1552 = vmatmul.f32.gmra.mxu0 %v1514
      %v1553 = vpop.f32.mrf.mxu0
      %v1554 = vadd.f32 0.0, %v1553
      %1555 = vdwg.mxu0
      %1556 = vmatpush.msra.mxu0 0.0
      %1557 = vmatpush.msra.mxu0 0.0
      %1558 = vmatpush.msra.mxu0 0.0
      %1559 = vmatpush.msra.mxu0 0.0
      %1560 = vmatpush.msra.mxu0 0.0
      %1561 = vmatpush.msra.mxu0 0.0
      %1562 = vmatpush.msra.mxu0 0.0
      %1563 = vmatpush.msra.mxu0 0.0
      %1564 = vmatpush.msra.mxu0 0.0
      %1565 = vmatpush.msra.mxu0 0.0
      %1566 = vmatpush.msra.mxu0 0.0
      %1567 = vmatpush.msra.mxu0 0.0
      %1568 = vmatpush.msra.mxu0 0.0
      %1569 = vmatpush.msra.mxu0 0.0
      %1570 = vmatpush.msra.mxu0 0.0
      %1571 = vmatpush.msra.mxu0 %v1499
      %1572 = vmatmul.f32.gmra.mxu0 %v1514
      %v1573 = vpop.f32.mrf.mxu0
      %v1574 = vadd.f32 0.0, %v1573
      %1575 = vdwg.mxu0
      %1576 = vmatpush.msra.mxu0 0.0
      %1577 = vmatpush.msra.mxu0 0.0
      %1578 = vmatpush.msra.mxu0 0.0
      %1579 = vmatpush.msra.mxu0 0.0
      %1580 = vmatpush.msra.mxu0 0.0
      %1581 = vmatpush.msra.mxu0 0.0
      %1582 = vmatpush.msra.mxu0 0.0
      %1583 = vmatpush.msra.mxu0 0.0
      %1584 = vmatpush.msra.mxu0 0.0
      %1585 = vmatpush.msra.mxu0 0.0
      %1586 = vmatpush.msra.mxu0 0.0
      %1587 = vmatpush.msra.mxu0 0.0
      %1588 = vmatpush.msra.mxu0 0.0
      %1589 = vmatpush.msra.mxu0 0.0
      %1590 = vmatpush.msra.mxu0 0.0
      %1591 = vmatpush.msra.mxu0 %v1500
      %1592 = vmatmul.f32.gmra.mxu0 %v1514
      %v1593 = vpop.f32.mrf.mxu0
      %v1594 = vadd.f32 0.0, %v1593
      %1595 = vdwg.mxu0
      %1596 = vmatpush.msra.mxu0 0.0
      %1597 = vmatpush.msra.mxu0 0.0
      %1598 = vmatpush.msra.mxu0 0.0
      %1599 = vmatpush.msra.mxu0 0.0
      %1600 = vmatpush.msra.mxu0 0.0
      %1601 = vmatpush.msra.mxu0 0.0
      %1602 = vmatpush.msra.mxu0 0.0
      %1603 = vmatpush.msra.mxu0 0.0
      %1604 = vmatpush.msra.mxu0 0.0
      %1605 = vmatpush.msra.mxu0 0.0
      %1606 = vmatpush.msra.mxu0 0.0
      %1607 = vmatpush.msra.mxu0 0.0
      %1608 = vmatpush.msra.mxu0 0.0
      %1609 = vmatpush.msra.mxu0 0.0
      %1610 = vmatpush.msra.mxu0 0.0
      %1611 = vmatpush.msra.mxu0 %v1501
      %1612 = vmatmul.f32.gmra.mxu0 %v1514
      %v1613 = vpop.f32.mrf.mxu0
      %v1614 = vadd.f32 0.0, %v1613
      %1615 = vdwg.mxu0
      %1616 = vmatpush.msra.mxu0 0.0
      %1617 = vmatpush.msra.mxu0 0.0
      %1618 = vmatpush.msra.mxu0 0.0
      %1619 = vmatpush.msra.mxu0 0.0
      %1620 = vmatpush.msra.mxu0 0.0
      %1621 = vmatpush.msra.mxu0 0.0
      %1622 = vmatpush.msra.mxu0 0.0
      %1623 = vmatpush.msra.mxu0 0.0
      %1624 = vmatpush.msra.mxu0 0.0
      %1625 = vmatpush.msra.mxu0 0.0
      %1626 = vmatpush.msra.mxu0 0.0
      %1627 = vmatpush.msra.mxu0 0.0
      %1628 = vmatpush.msra.mxu0 0.0
      %1629 = vmatpush.msra.mxu0 0.0
      %1630 = vmatpush.msra.mxu0 0.0
      %1631 = vmatpush.msra.mxu0 %v1502
      %1632 = vmatmul.f32.gmra.mxu0 %v1514
      %v1633 = vpop.f32.mrf.mxu0
      %v1634 = vadd.f32 0.0, %v1633
      %1635 = vdwg.mxu0
      %1636 = vmatpush.msra.mxu0 0.0
      %1637 = vmatpush.msra.mxu0 0.0
      %1638 = vmatpush.msra.mxu0 0.0
      %1639 = vmatpush.msra.mxu0 0.0
      %1640 = vmatpush.msra.mxu0 0.0
      %1641 = vmatpush.msra.mxu0 0.0
      %1642 = vmatpush.msra.mxu0 0.0
      %1643 = vmatpush.msra.mxu0 0.0
      %1644 = vmatpush.msra.mxu0 0.0
      %1645 = vmatpush.msra.mxu0 0.0
      %1646 = vmatpush.msra.mxu0 0.0
      %1647 = vmatpush.msra.mxu0 0.0
      %1648 = vmatpush.msra.mxu0 0.0
      %1649 = vmatpush.msra.mxu0 0.0
      %1650 = vmatpush.msra.mxu0 0.0
      %1651 = vmatpush.msra.mxu0 %v1503
      %1652 = vmatmul.f32.gmra.mxu0 %v1514
      %v1653 = vpop.f32.mrf.mxu0
      %v1654 = vadd.f32 0.0, %v1653
      %1655 = vdwg.mxu0
      %1656 = vmatpush.msra.mxu0 0.0
      %1657 = vmatpush.msra.mxu0 0.0
      %1658 = vmatpush.msra.mxu0 0.0
      %1659 = vmatpush.msra.mxu0 0.0
      %1660 = vmatpush.msra.mxu0 0.0
      %1661 = vmatpush.msra.mxu0 0.0
      %1662 = vmatpush.msra.mxu0 0.0
      %1663 = vmatpush.msra.mxu0 0.0
      %1664 = vmatpush.msra.mxu0 0.0
      %1665 = vmatpush.msra.mxu0 0.0
      %1666 = vmatpush.msra.mxu0 0.0
      %1667 = vmatpush.msra.mxu0 0.0
      %1668 = vmatpush.msra.mxu0 0.0
      %1669 = vmatpush.msra.mxu0 0.0
      %1670 = vmatpush.msra.mxu0 0.0
      %1671 = vmatpush.msra.mxu0 %v1504
      %1672 = vmatmul.f32.gmra.mxu0 %v1514
      %v1673 = vpop.f32.mrf.mxu0
      %v1674 = vadd.f32 0.0, %v1673
      %1675 = vdwg.mxu0
      %v1676 = vadd.f32 %v1468, %v1534
      %v1677 = vadd.f32 %v1469, %v1554
      %v1678 = vadd.f32 %v1470, %v1574
      %v1679 = vadd.f32 %v1471, %v1594
      %v1680 = vadd.f32 %v1472, %v1614
      %v1681 = vadd.f32 %v1473, %v1634
      %v1682 = vadd.f32 %v1474, %v1654
      %v1683 = vadd.f32 %v1475, %v1674
      %s1684 = scalar_lea.vmem %s1, 56
      %v1685 = vld [vmem:[%s1684] sm:$0xff]
      %1686 = vrot.lane.b32.xlu0 %v262, 17
      %v1687 = vpop.permute.xlu0 %1686
      %1688 = vrot.lane.b32.xlu0 %v263, 17
      %v1689 = vpop.permute.xlu0 %1688
      %1690 = vrot.lane.b32.xlu0 %v264, 17
      %v1691 = vpop.permute.xlu0 %1690
      %1692 = vrot.lane.b32.xlu0 %v265, 17
      %v1693 = vpop.permute.xlu0 %1692
      %1694 = vrot.lane.b32.xlu0 %v266, 17
      %v1695 = vpop.permute.xlu0 %1694
      %1696 = vrot.lane.b32.xlu0 %v267, 17
      %v1697 = vpop.permute.xlu0 %1696
      %1698 = vrot.lane.b32.xlu0 %v268, 17
      %v1699 = vpop.permute.xlu0 %1698
      %1700 = vrot.lane.b32.xlu0 %v269, 17
      %v1701 = vpop.permute.xlu0 %1700
      %1702 = vrot.lane.b32.xlu0 %v270, 17
      %v1703 = vpop.permute.xlu0 %1702
      %vm1704 = vcmask 138240
      %v1705 = vsel %vm1704, %v1687, %v1689
      %v1706 = vsel %vm1704, %v1689, %v1691
      %v1707 = vsel %vm1704, %v1691, %v1693
      %v1708 = vsel %vm1704, %v1693, %v1695
      %v1709 = vsel %vm1704, %v1695, %v1697
      %v1710 = vsel %vm1704, %v1697, %v1699
      %v1711 = vsel %vm1704, %v1699, %v1701
      %v1712 = vsel %vm1704, %v1701, %v1703
      %v1722 = vsel %vm317, %v1685, 0
      %1724 = vmatpush.msra.mxu0 0.0
      %1725 = vmatpush.msra.mxu0 0.0
      %1726 = vmatpush.msra.mxu0 0.0
      %1727 = vmatpush.msra.mxu0 0.0
      %1728 = vmatpush.msra.mxu0 0.0
      %1729 = vmatpush.msra.mxu0 0.0
      %1730 = vmatpush.msra.mxu0 0.0
      %1731 = vmatpush.msra.mxu0 0.0
      %1732 = vmatpush.msra.mxu0 0.0
      %1733 = vmatpush.msra.mxu0 0.0
      %1734 = vmatpush.msra.mxu0 0.0
      %1735 = vmatpush.msra.mxu0 0.0
      %1736 = vmatpush.msra.mxu0 0.0
      %1737 = vmatpush.msra.mxu0 0.0
      %1738 = vmatpush.msra.mxu0 0.0
      %1739 = vmatpush.msra.mxu0 %v1705
      %1740 = vmatmul.f32.gmra.mxu0 %v1722
      %v1741 = vpop.f32.mrf.mxu0
      %v1742 = vadd.f32 0.0, %v1741
      %1743 = vdwg.mxu0
      %1744 = vmatpush.msra.mxu0 0.0
      %1745 = vmatpush.msra.mxu0 0.0
      %1746 = vmatpush.msra.mxu0 0.0
      %1747 = vmatpush.msra.mxu0 0.0
      %1748 = vmatpush.msra.mxu0 0.0
      %1749 = vmatpush.msra.mxu0 0.0
      %1750 = vmatpush.msra.mxu0 0.0
      %1751 = vmatpush.msra.mxu0 0.0
      %1752 = vmatpush.msra.mxu0 0.0
      %1753 = vmatpush.msra.mxu0 0.0
      %1754 = vmatpush.msra.mxu0 0.0
      %1755 = vmatpush.msra.mxu0 0.0
      %1756 = vmatpush.msra.mxu0 0.0
      %1757 = vmatpush.msra.mxu0 0.0
      %1758 = vmatpush.msra.mxu0 0.0
      %1759 = vmatpush.msra.mxu0 %v1706
      %1760 = vmatmul.f32.gmra.mxu0 %v1722
      %v1761 = vpop.f32.mrf.mxu0
      %v1762 = vadd.f32 0.0, %v1761
      %1763 = vdwg.mxu0
      %1764 = vmatpush.msra.mxu0 0.0
      %1765 = vmatpush.msra.mxu0 0.0
      %1766 = vmatpush.msra.mxu0 0.0
      %1767 = vmatpush.msra.mxu0 0.0
      %1768 = vmatpush.msra.mxu0 0.0
      %1769 = vmatpush.msra.mxu0 0.0
      %1770 = vmatpush.msra.mxu0 0.0
      %1771 = vmatpush.msra.mxu0 0.0
      %1772 = vmatpush.msra.mxu0 0.0
      %1773 = vmatpush.msra.mxu0 0.0
      %1774 = vmatpush.msra.mxu0 0.0
      %1775 = vmatpush.msra.mxu0 0.0
      %1776 = vmatpush.msra.mxu0 0.0
      %1777 = vmatpush.msra.mxu0 0.0
      %1778 = vmatpush.msra.mxu0 0.0
      %1779 = vmatpush.msra.mxu0 %v1707
      %1780 = vmatmul.f32.gmra.mxu0 %v1722
      %v1781 = vpop.f32.mrf.mxu0
      %v1782 = vadd.f32 0.0, %v1781
      %1783 = vdwg.mxu0
      %1784 = vmatpush.msra.mxu0 0.0
      %1785 = vmatpush.msra.mxu0 0.0
      %1786 = vmatpush.msra.mxu0 0.0
      %1787 = vmatpush.msra.mxu0 0.0
      %1788 = vmatpush.msra.mxu0 0.0
      %1789 = vmatpush.msra.mxu0 0.0
      %1790 = vmatpush.msra.mxu0 0.0
      %1791 = vmatpush.msra.mxu0 0.0
      %1792 = vmatpush.msra.mxu0 0.0
      %1793 = vmatpush.msra.mxu0 0.0
      %1794 = vmatpush.msra.mxu0 0.0
      %1795 = vmatpush.msra.mxu0 0.0
      %1796 = vmatpush.msra.mxu0 0.0
      %1797 = vmatpush.msra.mxu0 0.0
      %1798 = vmatpush.msra.mxu0 0.0
      %1799 = vmatpush.msra.mxu0 %v1708
      %1800 = vmatmul.f32.gmra.mxu0 %v1722
      %v1801 = vpop.f32.mrf.mxu0
      %v1802 = vadd.f32 0.0, %v1801
      %1803 = vdwg.mxu0
      %1804 = vmatpush.msra.mxu0 0.0
      %1805 = vmatpush.msra.mxu0 0.0
      %1806 = vmatpush.msra.mxu0 0.0
      %1807 = vmatpush.msra.mxu0 0.0
      %1808 = vmatpush.msra.mxu0 0.0
      %1809 = vmatpush.msra.mxu0 0.0
      %1810 = vmatpush.msra.mxu0 0.0
      %1811 = vmatpush.msra.mxu0 0.0
      %1812 = vmatpush.msra.mxu0 0.0
      %1813 = vmatpush.msra.mxu0 0.0
      %1814 = vmatpush.msra.mxu0 0.0
      %1815 = vmatpush.msra.mxu0 0.0
      %1816 = vmatpush.msra.mxu0 0.0
      %1817 = vmatpush.msra.mxu0 0.0
      %1818 = vmatpush.msra.mxu0 0.0
      %1819 = vmatpush.msra.mxu0 %v1709
      %1820 = vmatmul.f32.gmra.mxu0 %v1722
      %v1821 = vpop.f32.mrf.mxu0
      %v1822 = vadd.f32 0.0, %v1821
      %1823 = vdwg.mxu0
      %1824 = vmatpush.msra.mxu0 0.0
      %1825 = vmatpush.msra.mxu0 0.0
      %1826 = vmatpush.msra.mxu0 0.0
      %1827 = vmatpush.msra.mxu0 0.0
      %1828 = vmatpush.msra.mxu0 0.0
      %1829 = vmatpush.msra.mxu0 0.0
      %1830 = vmatpush.msra.mxu0 0.0
      %1831 = vmatpush.msra.mxu0 0.0
      %1832 = vmatpush.msra.mxu0 0.0
      %1833 = vmatpush.msra.mxu0 0.0
      %1834 = vmatpush.msra.mxu0 0.0
      %1835 = vmatpush.msra.mxu0 0.0
      %1836 = vmatpush.msra.mxu0 0.0
      %1837 = vmatpush.msra.mxu0 0.0
      %1838 = vmatpush.msra.mxu0 0.0
      %1839 = vmatpush.msra.mxu0 %v1710
      %1840 = vmatmul.f32.gmra.mxu0 %v1722
      %v1841 = vpop.f32.mrf.mxu0
      %v1842 = vadd.f32 0.0, %v1841
      %1843 = vdwg.mxu0
      %1844 = vmatpush.msra.mxu0 0.0
      %1845 = vmatpush.msra.mxu0 0.0
      %1846 = vmatpush.msra.mxu0 0.0
      %1847 = vmatpush.msra.mxu0 0.0
      %1848 = vmatpush.msra.mxu0 0.0
      %1849 = vmatpush.msra.mxu0 0.0
      %1850 = vmatpush.msra.mxu0 0.0
      %1851 = vmatpush.msra.mxu0 0.0
      %1852 = vmatpush.msra.mxu0 0.0
      %1853 = vmatpush.msra.mxu0 0.0
      %1854 = vmatpush.msra.mxu0 0.0
      %1855 = vmatpush.msra.mxu0 0.0
      %1856 = vmatpush.msra.mxu0 0.0
      %1857 = vmatpush.msra.mxu0 0.0
      %1858 = vmatpush.msra.mxu0 0.0
      %1859 = vmatpush.msra.mxu0 %v1711
      %1860 = vmatmul.f32.gmra.mxu0 %v1722
      %v1861 = vpop.f32.mrf.mxu0
      %v1862 = vadd.f32 0.0, %v1861
      %1863 = vdwg.mxu0
      %1864 = vmatpush.msra.mxu0 0.0
      %1865 = vmatpush.msra.mxu0 0.0
      %1866 = vmatpush.msra.mxu0 0.0
      %1867 = vmatpush.msra.mxu0 0.0
      %1868 = vmatpush.msra.mxu0 0.0
      %1869 = vmatpush.msra.mxu0 0.0
      %1870 = vmatpush.msra.mxu0 0.0
      %1871 = vmatpush.msra.mxu0 0.0
      %1872 = vmatpush.msra.mxu0 0.0
      %1873 = vmatpush.msra.mxu0 0.0
      %1874 = vmatpush.msra.mxu0 0.0
      %1875 = vmatpush.msra.mxu0 0.0
      %1876 = vmatpush.msra.mxu0 0.0
      %1877 = vmatpush.msra.mxu0 0.0
      %1878 = vmatpush.msra.mxu0 0.0
      %1879 = vmatpush.msra.mxu0 %v1712
      %1880 = vmatmul.f32.gmra.mxu0 %v1722
      %v1881 = vpop.f32.mrf.mxu0
      %v1882 = vadd.f32 0.0, %v1881
      %1883 = vdwg.mxu0
      %v1884 = vadd.f32 %v1676, %v1742
      %v1885 = vadd.f32 %v1677, %v1762
      %v1886 = vadd.f32 %v1678, %v1782
      %v1887 = vadd.f32 %v1679, %v1802
      %v1888 = vadd.f32 %v1680, %v1822
      %v1889 = vadd.f32 %v1681, %v1842
      %v1890 = vadd.f32 %v1682, %v1862
      %v1891 = vadd.f32 %v1683, %v1882
      %v1892 = vld [vmem:[%s2] sm:$0xff]
      %1894 = vset.pattern.permute.xlu0 0
      %1895 = vperm.xlu0 %1894, %v1892
      %v1896 = vpop.permute.xlu0 %1895
      %v1898 = vadd.f32 %v1884, %v1896
      %v1899 = vadd.f32 %v1885, %v1896
      %v1900 = vadd.f32 %v1886, %v1896
      %v1901 = vadd.f32 %v1887, %v1896
      %v1902 = vadd.f32 %v1888, %v1896
      %v1903 = vadd.f32 %v1889, %v1896
      %v1904 = vadd.f32 %v1890, %v1896
      %v1905 = vadd.f32 %v1891, %v1896
      %v1906 = vmax.f32 %v1898, 0.0
      %v1907 = vmax.f32 %v1899, 0.0
      %v1908 = vmax.f32 %v1900, 0.0
      %v1909 = vmax.f32 %v1901, 0.0
      %v1910 = vmax.f32 %v1902, 0.0
      %v1911 = vmax.f32 %v1903, 0.0
      %v1912 = vmax.f32 %v1904, 0.0
      %v1913 = vmax.f32 %v1905, 0.0
      %v1914 = vld [vmem:[%s5] sm:$0xff]
      %v1916 = vperm.slane %v1914, 0
      %v1917 = vperm.slane %v1914, 1
      %v1918 = vperm.slane %v1914, 2
      %v1919 = vperm.slane %v1914, 3
      %v1920 = vperm.slane %v1914, 4
      %v1921 = vperm.slane %v1914, 5
      %v1922 = vperm.slane %v1914, 6
      %v1923 = vperm.slane %v1914, 7
      %v1932 = vmul.f32 %v1906, %v1916
      %v1933 = vmul.f32 %v1907, %v1917
      %v1934 = vmul.f32 %v1908, %v1918
      %v1935 = vmul.f32 %v1909, %v1919
      %v1936 = vmul.f32 %v1910, %v1920
      %v1937 = vmul.f32 %v1911, %v1921
      %v1938 = vmul.f32 %v1912, %v1922
      %v1939 = vmul.f32 %v1913, %v1923
      %1940 = vst [vmem:[#allocation2] sm:$0xff] %v1932
      %1941 = vst [vmem:[#allocation2 + $0x8] sm:$0xff] %v1933
      %1942 = vst [vmem:[#allocation2 + $0x10] sm:$0xff] %v1934
      %1943 = vst [vmem:[#allocation2 + $0x18] sm:$0xff] %v1935
      %1944 = vst [vmem:[#allocation2 + $0x20] sm:$0xff] %v1936
      %1945 = vst [vmem:[#allocation2 + $0x28] sm:$0xff] %v1937
      %1946 = vst [vmem:[#allocation2 + $0x30] sm:$0xff] %v1938
      %1947 = vst [vmem:[#allocation2 + $0x38] sm:$0xff] %v1939
      %v1948 = vld [vmem:[#allocation2] sm:$0xff]
      %v1949 = vld [vmem:[#allocation2 + $0x8] sm:$0xff]
      %v1950 = vld [vmem:[#allocation2 + $0x10] sm:$0xff]
      %v1951 = vld [vmem:[#allocation2 + $0x18] sm:$0xff]
      %v1952 = vld [vmem:[#allocation2 + $0x20] sm:$0xff]
      %v1953 = vld [vmem:[#allocation2 + $0x28] sm:$0xff]
      %v1954 = vld [vmem:[#allocation2 + $0x30] sm:$0xff]
      %v1955 = vld [vmem:[#allocation2 + $0x38] sm:$0xff]
      %v1956 = vld [vmem:[%s3] sm:$0xff]
      %v1957 = vld [vmem:[#allocation2] sm:$0xff]
      %v1958 = vld [vmem:[#allocation2 + $0x8] sm:$0xff]
      %v1959 = vld [vmem:[#allocation2 + $0x10] sm:$0xff]
      %v1960 = vld [vmem:[#allocation2 + $0x18] sm:$0xff]
      %v1961 = vld [vmem:[#allocation2 + $0x20] sm:$0xff]
      %v1962 = vld [vmem:[#allocation2 + $0x28] sm:$0xff]
      %v1963 = vld [vmem:[#allocation2 + $0x30] sm:$0xff]
      %v1964 = vld [vmem:[#allocation2 + $0x38] sm:$0xff]
      %v1965 = vld [vmem:[#allocation2 + $0x40] sm:$0xff]
      %s1966 = scalar_lea.vmem %s3, 8
      %v1967 = vld [vmem:[%s1966] sm:$0xff]
      %1977 = vrot.lane.b32.xlu0 %v1957, 127
      %v1978 = vpop.permute.xlu0 %1977
      %1979 = vrot.lane.b32.xlu0 %v1958, 127
      %v1980 = vpop.permute.xlu0 %1979
      %1981 = vrot.lane.b32.xlu0 %v1959, 127
      %v1982 = vpop.permute.xlu0 %1981
      %1983 = vrot.lane.b32.xlu0 %v1960, 127
      %v1984 = vpop.permute.xlu0 %1983
      %1985 = vrot.lane.b32.xlu0 %v1961, 127
      %v1986 = vpop.permute.xlu0 %1985
      %1987 = vrot.lane.b32.xlu0 %v1962, 127
      %v1988 = vpop.permute.xlu0 %1987
      %1989 = vrot.lane.b32.xlu0 %v1963, 127
      %v1990 = vpop.permute.xlu0 %1989
      %1991 = vrot.lane.b32.xlu0 %v1964, 127
      %v1992 = vpop.permute.xlu0 %1991
      %1993 = vrot.lane.b32.xlu0 %v1965, 127
      %v1994 = vpop.permute.xlu0 %1993
      %v1995 = vsel %vm300, %v1978, %v1980
      %v1996 = vsel %vm300, %v1980, %v1982
      %v1997 = vsel %vm300, %v1982, %v1984
      %v1998 = vsel %vm300, %v1984, %v1986
      %v1999 = vsel %vm300, %v1986, %v1988
      %v2000 = vsel %vm300, %v1988, %v1990
      %v2001 = vsel %vm300, %v1990, %v1992
      %v2002 = vsel %vm300, %v1992, %v1994
      %v2012 = vsel %vm317, %v1967, 0
      %2014 = vmatpush.msra.mxu0 0.0
      %2015 = vmatpush.msra.mxu0 0.0
      %2016 = vmatpush.msra.mxu0 0.0
      %2017 = vmatpush.msra.mxu0 0.0
      %2018 = vmatpush.msra.mxu0 0.0
      %2019 = vmatpush.msra.mxu0 0.0
      %2020 = vmatpush.msra.mxu0 0.0
      %2021 = vmatpush.msra.mxu0 0.0
      %2022 = vmatpush.msra.mxu0 0.0
      %2023 = vmatpush.msra.mxu0 0.0
      %2024 = vmatpush.msra.mxu0 0.0
      %2025 = vmatpush.msra.mxu0 0.0
      %2026 = vmatpush.msra.mxu0 0.0
      %2027 = vmatpush.msra.mxu0 0.0
      %2028 = vmatpush.msra.mxu0 0.0
      %2029 = vmatpush.msra.mxu0 %v1995
      %2030 = vmatmul.f32.gmra.mxu0 %v2012
      %v2031 = vpop.f32.mrf.mxu0
      %v2032 = vadd.f32 0.0, %v2031
      %2033 = vdwg.mxu0
      %2034 = vmatpush.msra.mxu0 0.0
      %2035 = vmatpush.msra.mxu0 0.0
      %2036 = vmatpush.msra.mxu0 0.0
      %2037 = vmatpush.msra.mxu0 0.0
      %2038 = vmatpush.msra.mxu0 0.0
      %2039 = vmatpush.msra.mxu0 0.0
      %2040 = vmatpush.msra.mxu0 0.0
      %2041 = vmatpush.msra.mxu0 0.0
      %2042 = vmatpush.msra.mxu0 0.0
      %2043 = vmatpush.msra.mxu0 0.0
      %2044 = vmatpush.msra.mxu0 0.0
      %2045 = vmatpush.msra.mxu0 0.0
      %2046 = vmatpush.msra.mxu0 0.0
      %2047 = vmatpush.msra.mxu0 0.0
      %2048 = vmatpush.msra.mxu0 0.0
      %2049 = vmatpush.msra.mxu0 %v1996
      %2050 = vmatmul.f32.gmra.mxu0 %v2012
      %v2051 = vpop.f32.mrf.mxu0
      %v2052 = vadd.f32 0.0, %v2051
      %2053 = vdwg.mxu0
      %2054 = vmatpush.msra.mxu0 0.0
      %2055 = vmatpush.msra.mxu0 0.0
      %2056 = vmatpush.msra.mxu0 0.0
      %2057 = vmatpush.msra.mxu0 0.0
      %2058 = vmatpush.msra.mxu0 0.0
      %2059 = vmatpush.msra.mxu0 0.0
      %2060 = vmatpush.msra.mxu0 0.0
      %2061 = vmatpush.msra.mxu0 0.0
      %2062 = vmatpush.msra.mxu0 0.0
      %2063 = vmatpush.msra.mxu0 0.0
      %2064 = vmatpush.msra.mxu0 0.0
      %2065 = vmatpush.msra.mxu0 0.0
      %2066 = vmatpush.msra.mxu0 0.0
      %2067 = vmatpush.msra.mxu0 0.0
      %2068 = vmatpush.msra.mxu0 0.0
      %2069 = vmatpush.msra.mxu0 %v1997
      %2070 = vmatmul.f32.gmra.mxu0 %v2012
      %v2071 = vpop.f32.mrf.mxu0
      %v2072 = vadd.f32 0.0, %v2071
      %2073 = vdwg.mxu0
      %2074 = vmatpush.msra.mxu0 0.0
      %2075 = vmatpush.msra.mxu0 0.0
      %2076 = vmatpush.msra.mxu0 0.0
      %2077 = vmatpush.msra.mxu0 0.0
      %2078 = vmatpush.msra.mxu0 0.0
      %2079 = vmatpush.msra.mxu0 0.0
      %2080 = vmatpush.msra.mxu0 0.0
      %2081 = vmatpush.msra.mxu0 0.0
      %2082 = vmatpush.msra.mxu0 0.0
      %2083 = vmatpush.msra.mxu0 0.0
      %2084 = vmatpush.msra.mxu0 0.0
      %2085 = vmatpush.msra.mxu0 0.0
      %2086 = vmatpush.msra.mxu0 0.0
      %2087 = vmatpush.msra.mxu0 0.0
      %2088 = vmatpush.msra.mxu0 0.0
      %2089 = vmatpush.msra.mxu0 %v1998
      %2090 = vmatmul.f32.gmra.mxu0 %v2012
      %v2091 = vpop.f32.mrf.mxu0
      %v2092 = vadd.f32 0.0, %v2091
      %2093 = vdwg.mxu0
      %2094 = vmatpush.msra.mxu0 0.0
      %2095 = vmatpush.msra.mxu0 0.0
      %2096 = vmatpush.msra.mxu0 0.0
      %2097 = vmatpush.msra.mxu0 0.0
      %2098 = vmatpush.msra.mxu0 0.0
      %2099 = vmatpush.msra.mxu0 0.0
      %2100 = vmatpush.msra.mxu0 0.0
      %2101 = vmatpush.msra.mxu0 0.0
      %2102 = vmatpush.msra.mxu0 0.0
      %2103 = vmatpush.msra.mxu0 0.0
      %2104 = vmatpush.msra.mxu0 0.0
      %2105 = vmatpush.msra.mxu0 0.0
      %2106 = vmatpush.msra.mxu0 0.0
      %2107 = vmatpush.msra.mxu0 0.0
      %2108 = vmatpush.msra.mxu0 0.0
      %2109 = vmatpush.msra.mxu0 %v1999
      %2110 = vmatmul.f32.gmra.mxu0 %v2012
      %v2111 = vpop.f32.mrf.mxu0
      %v2112 = vadd.f32 0.0, %v2111
      %2113 = vdwg.mxu0
      %2114 = vmatpush.msra.mxu0 0.0
      %2115 = vmatpush.msra.mxu0 0.0
      %2116 = vmatpush.msra.mxu0 0.0
      %2117 = vmatpush.msra.mxu0 0.0
      %2118 = vmatpush.msra.mxu0 0.0
      %2119 = vmatpush.msra.mxu0 0.0
      %2120 = vmatpush.msra.mxu0 0.0
      %2121 = vmatpush.msra.mxu0 0.0
      %2122 = vmatpush.msra.mxu0 0.0
      %2123 = vmatpush.msra.mxu0 0.0
      %2124 = vmatpush.msra.mxu0 0.0
      %2125 = vmatpush.msra.mxu0 0.0
      %2126 = vmatpush.msra.mxu0 0.0
      %2127 = vmatpush.msra.mxu0 0.0
      %2128 = vmatpush.msra.mxu0 0.0
      %2129 = vmatpush.msra.mxu0 %v2000
      %2130 = vmatmul.f32.gmra.mxu0 %v2012
      %v2131 = vpop.f32.mrf.mxu0
      %v2132 = vadd.f32 0.0, %v2131
      %2133 = vdwg.mxu0
      %2134 = vmatpush.msra.mxu0 0.0
      %2135 = vmatpush.msra.mxu0 0.0
      %2136 = vmatpush.msra.mxu0 0.0
      %2137 = vmatpush.msra.mxu0 0.0
      %2138 = vmatpush.msra.mxu0 0.0
      %2139 = vmatpush.msra.mxu0 0.0
      %2140 = vmatpush.msra.mxu0 0.0
      %2141 = vmatpush.msra.mxu0 0.0
      %2142 = vmatpush.msra.mxu0 0.0
      %2143 = vmatpush.msra.mxu0 0.0
      %2144 = vmatpush.msra.mxu0 0.0
      %2145 = vmatpush.msra.mxu0 0.0
      %2146 = vmatpush.msra.mxu0 0.0
      %2147 = vmatpush.msra.mxu0 0.0
      %2148 = vmatpush.msra.mxu0 0.0
      %2149 = vmatpush.msra.mxu0 %v2001
      %2150 = vmatmul.f32.gmra.mxu0 %v2012
      %v2151 = vpop.f32.mrf.mxu0
      %v2152 = vadd.f32 0.0, %v2151
      %2153 = vdwg.mxu0
      %2154 = vmatpush.msra.mxu0 0.0
      %2155 = vmatpush.msra.mxu0 0.0
      %2156 = vmatpush.msra.mxu0 0.0
      %2157 = vmatpush.msra.mxu0 0.0
      %2158 = vmatpush.msra.mxu0 0.0
      %2159 = vmatpush.msra.mxu0 0.0
      %2160 = vmatpush.msra.mxu0 0.0
      %2161 = vmatpush.msra.mxu0 0.0
      %2162 = vmatpush.msra.mxu0 0.0
      %2163 = vmatpush.msra.mxu0 0.0
      %2164 = vmatpush.msra.mxu0 0.0
      %2165 = vmatpush.msra.mxu0 0.0
      %2166 = vmatpush.msra.mxu0 0.0
      %2167 = vmatpush.msra.mxu0 0.0
      %2168 = vmatpush.msra.mxu0 0.0
      %2169 = vmatpush.msra.mxu0 %v2002
      %2170 = vmatmul.f32.gmra.mxu0 %v2012
      %v2171 = vpop.f32.mrf.mxu0
      %v2172 = vadd.f32 0.0, %v2171
      %2173 = vdwg.mxu0
      %v2175 = vsel %vm317, %v1956, 0
      %2177 = vmatpush.msra.mxu0 0.0
      %2178 = vmatpush.msra.mxu0 0.0
      %2179 = vmatpush.msra.mxu0 0.0
      %2180 = vmatpush.msra.mxu0 0.0
      %2181 = vmatpush.msra.mxu0 0.0
      %2182 = vmatpush.msra.mxu0 0.0
      %2183 = vmatpush.msra.mxu0 0.0
      %2184 = vmatpush.msra.mxu0 0.0
      %2185 = vmatpush.msra.mxu0 0.0
      %2186 = vmatpush.msra.mxu0 0.0
      %2187 = vmatpush.msra.mxu0 0.0
      %2188 = vmatpush.msra.mxu0 0.0
      %2189 = vmatpush.msra.mxu0 0.0
      %2190 = vmatpush.msra.mxu0 0.0
      %2191 = vmatpush.msra.mxu0 0.0
      %2192 = vmatpush.msra.mxu0 %v1948
      %2193 = vmatmul.f32.gmra.mxu0 %v2175
      %v2194 = vpop.f32.mrf.mxu0
      %v2195 = vadd.f32 %v2032, %v2194
      %2196 = vdwg.mxu0
      %2197 = vmatpush.msra.mxu0 0.0
      %2198 = vmatpush.msra.mxu0 0.0
      %2199 = vmatpush.msra.mxu0 0.0
      %2200 = vmatpush.msra.mxu0 0.0
      %2201 = vmatpush.msra.mxu0 0.0
      %2202 = vmatpush.msra.mxu0 0.0
      %2203 = vmatpush.msra.mxu0 0.0
      %2204 = vmatpush.msra.mxu0 0.0
      %2205 = vmatpush.msra.mxu0 0.0
      %2206 = vmatpush.msra.mxu0 0.0
      %2207 = vmatpush.msra.mxu0 0.0
      %2208 = vmatpush.msra.mxu0 0.0
      %2209 = vmatpush.msra.mxu0 0.0
      %2210 = vmatpush.msra.mxu0 0.0
      %2211 = vmatpush.msra.mxu0 0.0
      %2212 = vmatpush.msra.mxu0 %v1949
      %2213 = vmatmul.f32.gmra.mxu0 %v2175
      %v2214 = vpop.f32.mrf.mxu0
      %v2215 = vadd.f32 %v2052, %v2214
      %2216 = vdwg.mxu0
      %2217 = vmatpush.msra.mxu0 0.0
      %2218 = vmatpush.msra.mxu0 0.0
      %2219 = vmatpush.msra.mxu0 0.0
      %2220 = vmatpush.msra.mxu0 0.0
      %2221 = vmatpush.msra.mxu0 0.0
      %2222 = vmatpush.msra.mxu0 0.0
      %2223 = vmatpush.msra.mxu0 0.0
      %2224 = vmatpush.msra.mxu0 0.0
      %2225 = vmatpush.msra.mxu0 0.0
      %2226 = vmatpush.msra.mxu0 0.0
      %2227 = vmatpush.msra.mxu0 0.0
      %2228 = vmatpush.msra.mxu0 0.0
      %2229 = vmatpush.msra.mxu0 0.0
      %2230 = vmatpush.msra.mxu0 0.0
      %2231 = vmatpush.msra.mxu0 0.0
      %2232 = vmatpush.msra.mxu0 %v1950
      %2233 = vmatmul.f32.gmra.mxu0 %v2175
      %v2234 = vpop.f32.mrf.mxu0
      %v2235 = vadd.f32 %v2072, %v2234
      %2236 = vdwg.mxu0
      %2237 = vmatpush.msra.mxu0 0.0
      %2238 = vmatpush.msra.mxu0 0.0
      %2239 = vmatpush.msra.mxu0 0.0
      %2240 = vmatpush.msra.mxu0 0.0
      %2241 = vmatpush.msra.mxu0 0.0
      %2242 = vmatpush.msra.mxu0 0.0
      %2243 = vmatpush.msra.mxu0 0.0
      %2244 = vmatpush.msra.mxu0 0.0
      %2245 = vmatpush.msra.mxu0 0.0
      %2246 = vmatpush.msra.mxu0 0.0
      %2247 = vmatpush.msra.mxu0 0.0
      %2248 = vmatpush.msra.mxu0 0.0
      %2249 = vmatpush.msra.mxu0 0.0
      %2250 = vmatpush.msra.mxu0 0.0
      %2251 = vmatpush.msra.mxu0 0.0
      %2252 = vmatpush.msra.mxu0 %v1951
      %2253 = vmatmul.f32.gmra.mxu0 %v2175
      %v2254 = vpop.f32.mrf.mxu0
      %v2255 = vadd.f32 %v2092, %v2254
      %2256 = vdwg.mxu0
      %2257 = vmatpush.msra.mxu0 0.0
      %2258 = vmatpush.msra.mxu0 0.0
      %2259 = vmatpush.msra.mxu0 0.0
      %2260 = vmatpush.msra.mxu0 0.0
      %2261 = vmatpush.msra.mxu0 0.0
      %2262 = vmatpush.msra.mxu0 0.0
      %2263 = vmatpush.msra.mxu0 0.0
      %2264 = vmatpush.msra.mxu0 0.0
      %2265 = vmatpush.msra.mxu0 0.0
      %2266 = vmatpush.msra.mxu0 0.0
      %2267 = vmatpush.msra.mxu0 0.0
      %2268 = vmatpush.msra.mxu0 0.0
      %2269 = vmatpush.msra.mxu0 0.0
      %2270 = vmatpush.msra.mxu0 0.0
      %2271 = vmatpush.msra.mxu0 0.0
      %2272 = vmatpush.msra.mxu0 %v1952
      %2273 = vmatmul.f32.gmra.mxu0 %v2175
      %v2274 = vpop.f32.mrf.mxu0
      %v2275 = vadd.f32 %v2112, %v2274
      %2276 = vdwg.mxu0
      %2277 = vmatpush.msra.mxu0 0.0
      %2278 = vmatpush.msra.mxu0 0.0
      %2279 = vmatpush.msra.mxu0 0.0
      %2280 = vmatpush.msra.mxu0 0.0
      %2281 = vmatpush.msra.mxu0 0.0
      %2282 = vmatpush.msra.mxu0 0.0
      %2283 = vmatpush.msra.mxu0 0.0
      %2284 = vmatpush.msra.mxu0 0.0
      %2285 = vmatpush.msra.mxu0 0.0
      %2286 = vmatpush.msra.mxu0 0.0
      %2287 = vmatpush.msra.mxu0 0.0
      %2288 = vmatpush.msra.mxu0 0.0
      %2289 = vmatpush.msra.mxu0 0.0
      %2290 = vmatpush.msra.mxu0 0.0
      %2291 = vmatpush.msra.mxu0 0.0
      %2292 = vmatpush.msra.mxu0 %v1953
      %2293 = vmatmul.f32.gmra.mxu0 %v2175
      %v2294 = vpop.f32.mrf.mxu0
      %v2295 = vadd.f32 %v2132, %v2294
      %2296 = vdwg.mxu0
      %2297 = vmatpush.msra.mxu0 0.0
      %2298 = vmatpush.msra.mxu0 0.0
      %2299 = vmatpush.msra.mxu0 0.0
      %2300 = vmatpush.msra.mxu0 0.0
      %2301 = vmatpush.msra.mxu0 0.0
      %2302 = vmatpush.msra.mxu0 0.0
      %2303 = vmatpush.msra.mxu0 0.0
      %2304 = vmatpush.msra.mxu0 0.0
      %2305 = vmatpush.msra.mxu0 0.0
      %2306 = vmatpush.msra.mxu0 0.0
      %2307 = vmatpush.msra.mxu0 0.0
      %2308 = vmatpush.msra.mxu0 0.0
      %2309 = vmatpush.msra.mxu0 0.0
      %2310 = vmatpush.msra.mxu0 0.0
      %2311 = vmatpush.msra.mxu0 0.0
      %2312 = vmatpush.msra.mxu0 %v1954
      %2313 = vmatmul.f32.gmra.mxu0 %v2175
      %v2314 = vpop.f32.mrf.mxu0
      %v2315 = vadd.f32 %v2152, %v2314
      %2316 = vdwg.mxu0
      %2317 = vmatpush.msra.mxu0 0.0
      %2318 = vmatpush.msra.mxu0 0.0
      %2319 = vmatpush.msra.mxu0 0.0
      %2320 = vmatpush.msra.mxu0 0.0
      %2321 = vmatpush.msra.mxu0 0.0
      %2322 = vmatpush.msra.mxu0 0.0
      %2323 = vmatpush.msra.mxu0 0.0
      %2324 = vmatpush.msra.mxu0 0.0
      %2325 = vmatpush.msra.mxu0 0.0
      %2326 = vmatpush.msra.mxu0 0.0
      %2327 = vmatpush.msra.mxu0 0.0
      %2328 = vmatpush.msra.mxu0 0.0
      %2329 = vmatpush.msra.mxu0 0.0
      %2330 = vmatpush.msra.mxu0 0.0
      %2331 = vmatpush.msra.mxu0 0.0
      %2332 = vmatpush.msra.mxu0 %v1955
      %2333 = vmatmul.f32.gmra.mxu0 %v2175
      %v2334 = vpop.f32.mrf.mxu0
      %v2335 = vadd.f32 %v2172, %v2334
      %2336 = vdwg.mxu0
      %s2337 = scalar_lea.vmem %s3, 16
      %v2338 = vld [vmem:[%s2337] sm:$0xff]
      %2339 = vrot.lane.b32.xlu0 %v1957, 118
      %v2340 = vpop.permute.xlu0 %2339
      %2341 = vrot.lane.b32.xlu0 %v1958, 118
      %v2342 = vpop.permute.xlu0 %2341
      %2343 = vrot.lane.b32.xlu0 %v1959, 118
      %v2344 = vpop.permute.xlu0 %2343
      %2345 = vrot.lane.b32.xlu0 %v1960, 118
      %v2346 = vpop.permute.xlu0 %2345
      %2347 = vrot.lane.b32.xlu0 %v1961, 118
      %v2348 = vpop.permute.xlu0 %2347
      %2349 = vrot.lane.b32.xlu0 %v1962, 118
      %v2350 = vpop.permute.xlu0 %2349
      %2351 = vrot.lane.b32.xlu0 %v1963, 118
      %v2352 = vpop.permute.xlu0 %2351
      %2353 = vrot.lane.b32.xlu0 %v1964, 118
      %v2354 = vpop.permute.xlu0 %2353
      %2355 = vrot.lane.b32.xlu0 %v1965, 118
      %v2356 = vpop.permute.xlu0 %2355
      %v2357 = vsel %vm664, %v2340, %v2342
      %v2358 = vsel %vm664, %v2342, %v2344
      %v2359 = vsel %vm664, %v2344, %v2346
      %v2360 = vsel %vm664, %v2346, %v2348
      %v2361 = vsel %vm664, %v2348, %v2350
      %v2362 = vsel %vm664, %v2350, %v2352
      %v2363 = vsel %vm664, %v2352, %v2354
      %v2364 = vsel %vm664, %v2354, %v2356
      %v2374 = vsel %vm317, %v2338, 0
      %2376 = vmatpush.msra.mxu0 0.0
      %2377 = vmatpush.msra.mxu0 0.0
      %2378 = vmatpush.msra.mxu0 0.0
      %2379 = vmatpush.msra.mxu0 0.0
      %2380 = vmatpush.msra.mxu0 0.0
      %2381 = vmatpush.msra.mxu0 0.0
      %2382 = vmatpush.msra.mxu0 0.0
      %2383 = vmatpush.msra.mxu0 0.0
      %2384 = vmatpush.msra.mxu0 0.0
      %2385 = vmatpush.msra.mxu0 0.0
      %2386 = vmatpush.msra.mxu0 0.0
      %2387 = vmatpush.msra.mxu0 0.0
      %2388 = vmatpush.msra.mxu0 0.0
      %2389 = vmatpush.msra.mxu0 0.0
      %2390 = vmatpush.msra.mxu0 0.0
      %2391 = vmatpush.msra.mxu0 %v2357
      %2392 = vmatmul.f32.gmra.mxu0 %v2374
      %v2393 = vpop.f32.mrf.mxu0
      %v2394 = vadd.f32 0.0, %v2393
      %2395 = vdwg.mxu0
      %2396 = vmatpush.msra.mxu0 0.0
      %2397 = vmatpush.msra.mxu0 0.0
      %2398 = vmatpush.msra.mxu0 0.0
      %2399 = vmatpush.msra.mxu0 0.0
      %2400 = vmatpush.msra.mxu0 0.0
      %2401 = vmatpush.msra.mxu0 0.0
      %2402 = vmatpush.msra.mxu0 0.0
      %2403 = vmatpush.msra.mxu0 0.0
      %2404 = vmatpush.msra.mxu0 0.0
      %2405 = vmatpush.msra.mxu0 0.0
      %2406 = vmatpush.msra.mxu0 0.0
      %2407 = vmatpush.msra.mxu0 0.0
      %2408 = vmatpush.msra.mxu0 0.0
      %2409 = vmatpush.msra.mxu0 0.0
      %2410 = vmatpush.msra.mxu0 0.0
      %2411 = vmatpush.msra.mxu0 %v2358
      %2412 = vmatmul.f32.gmra.mxu0 %v2374
      %v2413 = vpop.f32.mrf.mxu0
      %v2414 = vadd.f32 0.0, %v2413
      %2415 = vdwg.mxu0
      %2416 = vmatpush.msra.mxu0 0.0
      %2417 = vmatpush.msra.mxu0 0.0
      %2418 = vmatpush.msra.mxu0 0.0
      %2419 = vmatpush.msra.mxu0 0.0
      %2420 = vmatpush.msra.mxu0 0.0
      %2421 = vmatpush.msra.mxu0 0.0
      %2422 = vmatpush.msra.mxu0 0.0
      %2423 = vmatpush.msra.mxu0 0.0
      %2424 = vmatpush.msra.mxu0 0.0
      %2425 = vmatpush.msra.mxu0 0.0
      %2426 = vmatpush.msra.mxu0 0.0
      %2427 = vmatpush.msra.mxu0 0.0
      %2428 = vmatpush.msra.mxu0 0.0
      %2429 = vmatpush.msra.mxu0 0.0
      %2430 = vmatpush.msra.mxu0 0.0
      %2431 = vmatpush.msra.mxu0 %v2359
      %2432 = vmatmul.f32.gmra.mxu0 %v2374
      %v2433 = vpop.f32.mrf.mxu0
      %v2434 = vadd.f32 0.0, %v2433
      %2435 = vdwg.mxu0
      %2436 = vmatpush.msra.mxu0 0.0
      %2437 = vmatpush.msra.mxu0 0.0
      %2438 = vmatpush.msra.mxu0 0.0
      %2439 = vmatpush.msra.mxu0 0.0
      %2440 = vmatpush.msra.mxu0 0.0
      %2441 = vmatpush.msra.mxu0 0.0
      %2442 = vmatpush.msra.mxu0 0.0
      %2443 = vmatpush.msra.mxu0 0.0
      %2444 = vmatpush.msra.mxu0 0.0
      %2445 = vmatpush.msra.mxu0 0.0
      %2446 = vmatpush.msra.mxu0 0.0
      %2447 = vmatpush.msra.mxu0 0.0
      %2448 = vmatpush.msra.mxu0 0.0
      %2449 = vmatpush.msra.mxu0 0.0
      %2450 = vmatpush.msra.mxu0 0.0
      %2451 = vmatpush.msra.mxu0 %v2360
      %2452 = vmatmul.f32.gmra.mxu0 %v2374
      %v2453 = vpop.f32.mrf.mxu0
      %v2454 = vadd.f32 0.0, %v2453
      %2455 = vdwg.mxu0
      %2456 = vmatpush.msra.mxu0 0.0
      %2457 = vmatpush.msra.mxu0 0.0
      %2458 = vmatpush.msra.mxu0 0.0
      %2459 = vmatpush.msra.mxu0 0.0
      %2460 = vmatpush.msra.mxu0 0.0
      %2461 = vmatpush.msra.mxu0 0.0
      %2462 = vmatpush.msra.mxu0 0.0
      %2463 = vmatpush.msra.mxu0 0.0
      %2464 = vmatpush.msra.mxu0 0.0
      %2465 = vmatpush.msra.mxu0 0.0
      %2466 = vmatpush.msra.mxu0 0.0
      %2467 = vmatpush.msra.mxu0 0.0
      %2468 = vmatpush.msra.mxu0 0.0
      %2469 = vmatpush.msra.mxu0 0.0
      %2470 = vmatpush.msra.mxu0 0.0
      %2471 = vmatpush.msra.mxu0 %v2361
      %2472 = vmatmul.f32.gmra.mxu0 %v2374
      %v2473 = vpop.f32.mrf.mxu0
      %v2474 = vadd.f32 0.0, %v2473
      %2475 = vdwg.mxu0
      %2476 = vmatpush.msra.mxu0 0.0
      %2477 = vmatpush.msra.mxu0 0.0
      %2478 = vmatpush.msra.mxu0 0.0
      %2479 = vmatpush.msra.mxu0 0.0
      %2480 = vmatpush.msra.mxu0 0.0
      %2481 = vmatpush.msra.mxu0 0.0
      %2482 = vmatpush.msra.mxu0 0.0
      %2483 = vmatpush.msra.mxu0 0.0
      %2484 = vmatpush.msra.mxu0 0.0
      %2485 = vmatpush.msra.mxu0 0.0
      %2486 = vmatpush.msra.mxu0 0.0
      %2487 = vmatpush.msra.mxu0 0.0
      %2488 = vmatpush.msra.mxu0 0.0
      %2489 = vmatpush.msra.mxu0 0.0
      %2490 = vmatpush.msra.mxu0 0.0
      %2491 = vmatpush.msra.mxu0 %v2362
      %2492 = vmatmul.f32.gmra.mxu0 %v2374
      %v2493 = vpop.f32.mrf.mxu0
      %v2494 = vadd.f32 0.0, %v2493
      %2495 = vdwg.mxu0
      %2496 = vmatpush.msra.mxu0 0.0
      %2497 = vmatpush.msra.mxu0 0.0
      %2498 = vmatpush.msra.mxu0 0.0
      %2499 = vmatpush.msra.mxu0 0.0
      %2500 = vmatpush.msra.mxu0 0.0
      %2501 = vmatpush.msra.mxu0 0.0
      %2502 = vmatpush.msra.mxu0 0.0
      %2503 = vmatpush.msra.mxu0 0.0
      %2504 = vmatpush.msra.mxu0 0.0
      %2505 = vmatpush.msra.mxu0 0.0
      %2506 = vmatpush.msra.mxu0 0.0
      %2507 = vmatpush.msra.mxu0 0.0
      %2508 = vmatpush.msra.mxu0 0.0
      %2509 = vmatpush.msra.mxu0 0.0
      %2510 = vmatpush.msra.mxu0 0.0
      %2511 = vmatpush.msra.mxu0 %v2363
      %2512 = vmatmul.f32.gmra.mxu0 %v2374
      %v2513 = vpop.f32.mrf.mxu0
      %v2514 = vadd.f32 0.0, %v2513
      %2515 = vdwg.mxu0
      %2516 = vmatpush.msra.mxu0 0.0
      %2517 = vmatpush.msra.mxu0 0.0
      %2518 = vmatpush.msra.mxu0 0.0
      %2519 = vmatpush.msra.mxu0 0.0
      %2520 = vmatpush.msra.mxu0 0.0
      %2521 = vmatpush.msra.mxu0 0.0
      %2522 = vmatpush.msra.mxu0 0.0
      %2523 = vmatpush.msra.mxu0 0.0
      %2524 = vmatpush.msra.mxu0 0.0
      %2525 = vmatpush.msra.mxu0 0.0
      %2526 = vmatpush.msra.mxu0 0.0
      %2527 = vmatpush.msra.mxu0 0.0
      %2528 = vmatpush.msra.mxu0 0.0
      %2529 = vmatpush.msra.mxu0 0.0
      %2530 = vmatpush.msra.mxu0 0.0
      %2531 = vmatpush.msra.mxu0 %v2364
      %2532 = vmatmul.f32.gmra.mxu0 %v2374
      %v2533 = vpop.f32.mrf.mxu0
      %v2534 = vadd.f32 0.0, %v2533
      %2535 = vdwg.mxu0
      %v2536 = vadd.f32 %v2195, %v2394
      %v2537 = vadd.f32 %v2215, %v2414
      %v2538 = vadd.f32 %v2235, %v2434
      %v2539 = vadd.f32 %v2255, %v2454
      %v2540 = vadd.f32 %v2275, %v2474
      %v2541 = vadd.f32 %v2295, %v2494
      %v2542 = vadd.f32 %v2315, %v2514
      %v2543 = vadd.f32 %v2335, %v2534
      %s2544 = scalar_lea.vmem %s3, 24
      %v2545 = vld [vmem:[%s2544] sm:$0xff]
      %2546 = vrot.lane.b32.xlu0 %v1957, 117
      %v2547 = vpop.permute.xlu0 %2546
      %2548 = vrot.lane.b32.xlu0 %v1958, 117
      %v2549 = vpop.permute.xlu0 %2548
      %2550 = vrot.lane.b32.xlu0 %v1959, 117
      %v2551 = vpop.permute.xlu0 %2550
      %2552 = vrot.lane.b32.xlu0 %v1960, 117
      %v2553 = vpop.permute.xlu0 %2552
      %2554 = vrot.lane.b32.xlu0 %v1961, 117
      %v2555 = vpop.permute.xlu0 %2554
      %2556 = vrot.lane.b32.xlu0 %v1962, 117
      %v2557 = vpop.permute.xlu0 %2556
      %2558 = vrot.lane.b32.xlu0 %v1963, 117
      %v2559 = vpop.permute.xlu0 %2558
      %2560 = vrot.lane.b32.xlu0 %v1964, 117
      %v2561 = vpop.permute.xlu0 %2560
      %2562 = vrot.lane.b32.xlu0 %v1965, 117
      %v2563 = vpop.permute.xlu0 %2562
      %v2564 = vsel %vm872, %v2547, %v2549
      %v2565 = vsel %vm872, %v2549, %v2551
      %v2566 = vsel %vm872, %v2551, %v2553
      %v2567 = vsel %vm872, %v2553, %v2555
      %v2568 = vsel %vm872, %v2555, %v2557
      %v2569 = vsel %vm872, %v2557, %v2559
      %v2570 = vsel %vm872, %v2559, %v2561
      %v2571 = vsel %vm872, %v2561, %v2563
      %v2581 = vsel %vm317, %v2545, 0
      %2583 = vmatpush.msra.mxu0 0.0
      %2584 = vmatpush.msra.mxu0 0.0
      %2585 = vmatpush.msra.mxu0 0.0
      %2586 = vmatpush.msra.mxu0 0.0
      %2587 = vmatpush.msra.mxu0 0.0
      %2588 = vmatpush.msra.mxu0 0.0
      %2589 = vmatpush.msra.mxu0 0.0
      %2590 = vmatpush.msra.mxu0 0.0
      %2591 = vmatpush.msra.mxu0 0.0
      %2592 = vmatpush.msra.mxu0 0.0
      %2593 = vmatpush.msra.mxu0 0.0
      %2594 = vmatpush.msra.mxu0 0.0
      %2595 = vmatpush.msra.mxu0 0.0
      %2596 = vmatpush.msra.mxu0 0.0
      %2597 = vmatpush.msra.mxu0 0.0
      %2598 = vmatpush.msra.mxu0 %v2564
      %2599 = vmatmul.f32.gmra.mxu0 %v2581
      %v2600 = vpop.f32.mrf.mxu0
      %v2601 = vadd.f32 0.0, %v2600
      %2602 = vdwg.mxu0
      %2603 = vmatpush.msra.mxu0 0.0
      %2604 = vmatpush.msra.mxu0 0.0
      %2605 = vmatpush.msra.mxu0 0.0
      %2606 = vmatpush.msra.mxu0 0.0
      %2607 = vmatpush.msra.mxu0 0.0
      %2608 = vmatpush.msra.mxu0 0.0
      %2609 = vmatpush.msra.mxu0 0.0
      %2610 = vmatpush.msra.mxu0 0.0
      %2611 = vmatpush.msra.mxu0 0.0
      %2612 = vmatpush.msra.mxu0 0.0
      %2613 = vmatpush.msra.mxu0 0.0
      %2614 = vmatpush.msra.mxu0 0.0
      %2615 = vmatpush.msra.mxu0 0.0
      %2616 = vmatpush.msra.mxu0 0.0
      %2617 = vmatpush.msra.mxu0 0.0
      %2618 = vmatpush.msra.mxu0 %v2565
      %2619 = vmatmul.f32.gmra.mxu0 %v2581
      %v2620 = vpop.f32.mrf.mxu0
      %v2621 = vadd.f32 0.0, %v2620
      %2622 = vdwg.mxu0
      %2623 = vmatpush.msra.mxu0 0.0
      %2624 = vmatpush.msra.mxu0 0.0
      %2625 = vmatpush.msra.mxu0 0.0
      %2626 = vmatpush.msra.mxu0 0.0
      %2627 = vmatpush.msra.mxu0 0.0
      %2628 = vmatpush.msra.mxu0 0.0
      %2629 = vmatpush.msra.mxu0 0.0
      %2630 = vmatpush.msra.mxu0 0.0
      %2631 = vmatpush.msra.mxu0 0.0
      %2632 = vmatpush.msra.mxu0 0.0
      %2633 = vmatpush.msra.mxu0 0.0
      %2634 = vmatpush.msra.mxu0 0.0
      %2635 = vmatpush.msra.mxu0 0.0
      %2636 = vmatpush.msra.mxu0 0.0
      %2637 = vmatpush.msra.mxu0 0.0
      %2638 = vmatpush.msra.mxu0 %v2566
      %2639 = vmatmul.f32.gmra.mxu0 %v2581
      %v2640 = vpop.f32.mrf.mxu0
      %v2641 = vadd.f32 0.0, %v2640
      %2642 = vdwg.mxu0
      %2643 = vmatpush.msra.mxu0 0.0
      %2644 = vmatpush.msra.mxu0 0.0
      %2645 = vmatpush.msra.mxu0 0.0
      %2646 = vmatpush.msra.mxu0 0.0
      %2647 = vmatpush.msra.mxu0 0.0
      %2648 = vmatpush.msra.mxu0 0.0
      %2649 = vmatpush.msra.mxu0 0.0
      %2650 = vmatpush.msra.mxu0 0.0
      %2651 = vmatpush.msra.mxu0 0.0
      %2652 = vmatpush.msra.mxu0 0.0
      %2653 = vmatpush.msra.mxu0 0.0
      %2654 = vmatpush.msra.mxu0 0.0
      %2655 = vmatpush.msra.mxu0 0.0
      %2656 = vmatpush.msra.mxu0 0.0
      %2657 = vmatpush.msra.mxu0 0.0
      %2658 = vmatpush.msra.mxu0 %v2567
      %2659 = vmatmul.f32.gmra.mxu0 %v2581
      %v2660 = vpop.f32.mrf.mxu0
      %v2661 = vadd.f32 0.0, %v2660
      %2662 = vdwg.mxu0
      %2663 = vmatpush.msra.mxu0 0.0
      %2664 = vmatpush.msra.mxu0 0.0
      %2665 = vmatpush.msra.mxu0 0.0
      %2666 = vmatpush.msra.mxu0 0.0
      %2667 = vmatpush.msra.mxu0 0.0
      %2668 = vmatpush.msra.mxu0 0.0
      %2669 = vmatpush.msra.mxu0 0.0
      %2670 = vmatpush.msra.mxu0 0.0
      %2671 = vmatpush.msra.mxu0 0.0
      %2672 = vmatpush.msra.mxu0 0.0
      %2673 = vmatpush.msra.mxu0 0.0
      %2674 = vmatpush.msra.mxu0 0.0
      %2675 = vmatpush.msra.mxu0 0.0
      %2676 = vmatpush.msra.mxu0 0.0
      %2677 = vmatpush.msra.mxu0 0.0
      %2678 = vmatpush.msra.mxu0 %v2568
      %2679 = vmatmul.f32.gmra.mxu0 %v2581
      %v2680 = vpop.f32.mrf.mxu0
      %v2681 = vadd.f32 0.0, %v2680
      %2682 = vdwg.mxu0
      %2683 = vmatpush.msra.mxu0 0.0
      %2684 = vmatpush.msra.mxu0 0.0
      %2685 = vmatpush.msra.mxu0 0.0
      %2686 = vmatpush.msra.mxu0 0.0
      %2687 = vmatpush.msra.mxu0 0.0
      %2688 = vmatpush.msra.mxu0 0.0
      %2689 = vmatpush.msra.mxu0 0.0
      %2690 = vmatpush.msra.mxu0 0.0
      %2691 = vmatpush.msra.mxu0 0.0
      %2692 = vmatpush.msra.mxu0 0.0
      %2693 = vmatpush.msra.mxu0 0.0
      %2694 = vmatpush.msra.mxu0 0.0
      %2695 = vmatpush.msra.mxu0 0.0
      %2696 = vmatpush.msra.mxu0 0.0
      %2697 = vmatpush.msra.mxu0 0.0
      %2698 = vmatpush.msra.mxu0 %v2569
      %2699 = vmatmul.f32.gmra.mxu0 %v2581
      %v2700 = vpop.f32.mrf.mxu0
      %v2701 = vadd.f32 0.0, %v2700
      %2702 = vdwg.mxu0
      %2703 = vmatpush.msra.mxu0 0.0
      %2704 = vmatpush.msra.mxu0 0.0
      %2705 = vmatpush.msra.mxu0 0.0
      %2706 = vmatpush.msra.mxu0 0.0
      %2707 = vmatpush.msra.mxu0 0.0
      %2708 = vmatpush.msra.mxu0 0.0
      %2709 = vmatpush.msra.mxu0 0.0
      %2710 = vmatpush.msra.mxu0 0.0
      %2711 = vmatpush.msra.mxu0 0.0
      %2712 = vmatpush.msra.mxu0 0.0
      %2713 = vmatpush.msra.mxu0 0.0
      %2714 = vmatpush.msra.mxu0 0.0
      %2715 = vmatpush.msra.mxu0 0.0
      %2716 = vmatpush.msra.mxu0 0.0
      %2717 = vmatpush.msra.mxu0 0.0
      %2718 = vmatpush.msra.mxu0 %v2570
      %2719 = vmatmul.f32.gmra.mxu0 %v2581
      %v2720 = vpop.f32.mrf.mxu0
      %v2721 = vadd.f32 0.0, %v2720
      %2722 = vdwg.mxu0
      %2723 = vmatpush.msra.mxu0 0.0
      %2724 = vmatpush.msra.mxu0 0.0
      %2725 = vmatpush.msra.mxu0 0.0
      %2726 = vmatpush.msra.mxu0 0.0
      %2727 = vmatpush.msra.mxu0 0.0
      %2728 = vmatpush.msra.mxu0 0.0
      %2729 = vmatpush.msra.mxu0 0.0
      %2730 = vmatpush.msra.mxu0 0.0
      %2731 = vmatpush.msra.mxu0 0.0
      %2732 = vmatpush.msra.mxu0 0.0
      %2733 = vmatpush.msra.mxu0 0.0
      %2734 = vmatpush.msra.mxu0 0.0
      %2735 = vmatpush.msra.mxu0 0.0
      %2736 = vmatpush.msra.mxu0 0.0
      %2737 = vmatpush.msra.mxu0 0.0
      %2738 = vmatpush.msra.mxu0 %v2571
      %2739 = vmatmul.f32.gmra.mxu0 %v2581
      %v2740 = vpop.f32.mrf.mxu0
      %v2741 = vadd.f32 0.0, %v2740
      %2742 = vdwg.mxu0
      %v2743 = vadd.f32 %v2536, %v2601
      %v2744 = vadd.f32 %v2537, %v2621
      %v2745 = vadd.f32 %v2538, %v2641
      %v2746 = vadd.f32 %v2539, %v2661
      %v2747 = vadd.f32 %v2540, %v2681
      %v2748 = vadd.f32 %v2541, %v2701
      %v2749 = vadd.f32 %v2542, %v2721
      %v2750 = vadd.f32 %v2543, %v2741
      %s2751 = scalar_lea.vmem %s3, 32
      %v2752 = vld [vmem:[%s2751] sm:$0xff]
      %2753 = vrot.lane.b32.xlu0 %v1957, 28
      %v2754 = vpop.permute.xlu0 %2753
      %2755 = vrot.lane.b32.xlu0 %v1958, 28
      %v2756 = vpop.permute.xlu0 %2755
      %2757 = vrot.lane.b32.xlu0 %v1959, 28
      %v2758 = vpop.permute.xlu0 %2757
      %2759 = vrot.lane.b32.xlu0 %v1960, 28
      %v2760 = vpop.permute.xlu0 %2759
      %2761 = vrot.lane.b32.xlu0 %v1961, 28
      %v2762 = vpop.permute.xlu0 %2761
      %2763 = vrot.lane.b32.xlu0 %v1962, 28
      %v2764 = vpop.permute.xlu0 %2763
      %2765 = vrot.lane.b32.xlu0 %v1963, 28
      %v2766 = vpop.permute.xlu0 %2765
      %2767 = vrot.lane.b32.xlu0 %v1964, 28
      %v2768 = vpop.permute.xlu0 %2767
      %2769 = vrot.lane.b32.xlu0 %v1965, 28
      %v2770 = vpop.permute.xlu0 %2769
      %v2771 = vsel %vm1080, %v2754, %v2756
      %v2772 = vsel %vm1080, %v2756, %v2758
      %v2773 = vsel %vm1080, %v2758, %v2760
      %v2774 = vsel %vm1080, %v2760, %v2762
      %v2775 = vsel %vm1080, %v2762, %v2764
      %v2776 = vsel %vm1080, %v2764, %v2766
      %v2777 = vsel %vm1080, %v2766, %v2768
      %v2778 = vsel %vm1080, %v2768, %v2770
      %v2788 = vsel %vm317, %v2752, 0
      %2790 = vmatpush.msra.mxu0 0.0
      %2791 = vmatpush.msra.mxu0 0.0
      %2792 = vmatpush.msra.mxu0 0.0
      %2793 = vmatpush.msra.mxu0 0.0
      %2794 = vmatpush.msra.mxu0 0.0
      %2795 = vmatpush.msra.mxu0 0.0
      %2796 = vmatpush.msra.mxu0 0.0
      %2797 = vmatpush.msra.mxu0 0.0
      %2798 = vmatpush.msra.mxu0 0.0
      %2799 = vmatpush.msra.mxu0 0.0
      %2800 = vmatpush.msra.mxu0 0.0
      %2801 = vmatpush.msra.mxu0 0.0
      %2802 = vmatpush.msra.mxu0 0.0
      %2803 = vmatpush.msra.mxu0 0.0
      %2804 = vmatpush.msra.mxu0 0.0
      %2805 = vmatpush.msra.mxu0 %v2771
      %2806 = vmatmul.f32.gmra.mxu0 %v2788
      %v2807 = vpop.f32.mrf.mxu0
      %v2808 = vadd.f32 0.0, %v2807
      %2809 = vdwg.mxu0
      %2810 = vmatpush.msra.mxu0 0.0
      %2811 = vmatpush.msra.mxu0 0.0
      %2812 = vmatpush.msra.mxu0 0.0
      %2813 = vmatpush.msra.mxu0 0.0
      %2814 = vmatpush.msra.mxu0 0.0
      %2815 = vmatpush.msra.mxu0 0.0
      %2816 = vmatpush.msra.mxu0 0.0
      %2817 = vmatpush.msra.mxu0 0.0
      %2818 = vmatpush.msra.mxu0 0.0
      %2819 = vmatpush.msra.mxu0 0.0
      %2820 = vmatpush.msra.mxu0 0.0
      %2821 = vmatpush.msra.mxu0 0.0
      %2822 = vmatpush.msra.mxu0 0.0
      %2823 = vmatpush.msra.mxu0 0.0
      %2824 = vmatpush.msra.mxu0 0.0
      %2825 = vmatpush.msra.mxu0 %v2772
      %2826 = vmatmul.f32.gmra.mxu0 %v2788
      %v2827 = vpop.f32.mrf.mxu0
      %v2828 = vadd.f32 0.0, %v2827
      %2829 = vdwg.mxu0
      %2830 = vmatpush.msra.mxu0 0.0
      %2831 = vmatpush.msra.mxu0 0.0
      %2832 = vmatpush.msra.mxu0 0.0
      %2833 = vmatpush.msra.mxu0 0.0
      %2834 = vmatpush.msra.mxu0 0.0
      %2835 = vmatpush.msra.mxu0 0.0
      %2836 = vmatpush.msra.mxu0 0.0
      %2837 = vmatpush.msra.mxu0 0.0
      %2838 = vmatpush.msra.mxu0 0.0
      %2839 = vmatpush.msra.mxu0 0.0
      %2840 = vmatpush.msra.mxu0 0.0
      %2841 = vmatpush.msra.mxu0 0.0
      %2842 = vmatpush.msra.mxu0 0.0
      %2843 = vmatpush.msra.mxu0 0.0
      %2844 = vmatpush.msra.mxu0 0.0
      %2845 = vmatpush.msra.mxu0 %v2773
      %2846 = vmatmul.f32.gmra.mxu0 %v2788
      %v2847 = vpop.f32.mrf.mxu0
      %v2848 = vadd.f32 0.0, %v2847
      %2849 = vdwg.mxu0
      %2850 = vmatpush.msra.mxu0 0.0
      %2851 = vmatpush.msra.mxu0 0.0
      %2852 = vmatpush.msra.mxu0 0.0
      %2853 = vmatpush.msra.mxu0 0.0
      %2854 = vmatpush.msra.mxu0 0.0
      %2855 = vmatpush.msra.mxu0 0.0
      %2856 = vmatpush.msra.mxu0 0.0
      %2857 = vmatpush.msra.mxu0 0.0
      %2858 = vmatpush.msra.mxu0 0.0
      %2859 = vmatpush.msra.mxu0 0.0
      %2860 = vmatpush.msra.mxu0 0.0
      %2861 = vmatpush.msra.mxu0 0.0
      %2862 = vmatpush.msra.mxu0 0.0
      %2863 = vmatpush.msra.mxu0 0.0
      %2864 = vmatpush.msra.mxu0 0.0
      %2865 = vmatpush.msra.mxu0 %v2774
      %2866 = vmatmul.f32.gmra.mxu0 %v2788
      %v2867 = vpop.f32.mrf.mxu0
      %v2868 = vadd.f32 0.0, %v2867
      %2869 = vdwg.mxu0
      %2870 = vmatpush.msra.mxu0 0.0
      %2871 = vmatpush.msra.mxu0 0.0
      %2872 = vmatpush.msra.mxu0 0.0
      %2873 = vmatpush.msra.mxu0 0.0
      %2874 = vmatpush.msra.mxu0 0.0
      %2875 = vmatpush.msra.mxu0 0.0
      %2876 = vmatpush.msra.mxu0 0.0
      %2877 = vmatpush.msra.mxu0 0.0
      %2878 = vmatpush.msra.mxu0 0.0
      %2879 = vmatpush.msra.mxu0 0.0
      %2880 = vmatpush.msra.mxu0 0.0
      %2881 = vmatpush.msra.mxu0 0.0
      %2882 = vmatpush.msra.mxu0 0.0
      %2883 = vmatpush.msra.mxu0 0.0
      %2884 = vmatpush.msra.mxu0 0.0
      %2885 = vmatpush.msra.mxu0 %v2775
      %2886 = vmatmul.f32.gmra.mxu0 %v2788
      %v2887 = vpop.f32.mrf.mxu0
      %v2888 = vadd.f32 0.0, %v2887
      %2889 = vdwg.mxu0
      %2890 = vmatpush.msra.mxu0 0.0
      %2891 = vmatpush.msra.mxu0 0.0
      %2892 = vmatpush.msra.mxu0 0.0
      %2893 = vmatpush.msra.mxu0 0.0
      %2894 = vmatpush.msra.mxu0 0.0
      %2895 = vmatpush.msra.mxu0 0.0
      %2896 = vmatpush.msra.mxu0 0.0
      %2897 = vmatpush.msra.mxu0 0.0
      %2898 = vmatpush.msra.mxu0 0.0
      %2899 = vmatpush.msra.mxu0 0.0
      %2900 = vmatpush.msra.mxu0 0.0
      %2901 = vmatpush.msra.mxu0 0.0
      %2902 = vmatpush.msra.mxu0 0.0
      %2903 = vmatpush.msra.mxu0 0.0
      %2904 = vmatpush.msra.mxu0 0.0
      %2905 = vmatpush.msra.mxu0 %v2776
      %2906 = vmatmul.f32.gmra.mxu0 %v2788
      %v2907 = vpop.f32.mrf.mxu0
      %v2908 = vadd.f32 0.0, %v2907
      %2909 = vdwg.mxu0
      %2910 = vmatpush.msra.mxu0 0.0
      %2911 = vmatpush.msra.mxu0 0.0
      %2912 = vmatpush.msra.mxu0 0.0
      %2913 = vmatpush.msra.mxu0 0.0
      %2914 = vmatpush.msra.mxu0 0.0
      %2915 = vmatpush.msra.mxu0 0.0
      %2916 = vmatpush.msra.mxu0 0.0
      %2917 = vmatpush.msra.mxu0 0.0
      %2918 = vmatpush.msra.mxu0 0.0
      %2919 = vmatpush.msra.mxu0 0.0
      %2920 = vmatpush.msra.mxu0 0.0
      %2921 = vmatpush.msra.mxu0 0.0
      %2922 = vmatpush.msra.mxu0 0.0
      %2923 = vmatpush.msra.mxu0 0.0
      %2924 = vmatpush.msra.mxu0 0.0
      %2925 = vmatpush.msra.mxu0 %v2777
      %2926 = vmatmul.f32.gmra.mxu0 %v2788
      %v2927 = vpop.f32.mrf.mxu0
      %v2928 = vadd.f32 0.0, %v2927
      %2929 = vdwg.mxu0
      %2930 = vmatpush.msra.mxu0 0.0
      %2931 = vmatpush.msra.mxu0 0.0
      %2932 = vmatpush.msra.mxu0 0.0
      %2933 = vmatpush.msra.mxu0 0.0
      %2934 = vmatpush.msra.mxu0 0.0
      %2935 = vmatpush.msra.mxu0 0.0
      %2936 = vmatpush.msra.mxu0 0.0
      %2937 = vmatpush.msra.mxu0 0.0
      %2938 = vmatpush.msra.mxu0 0.0
      %2939 = vmatpush.msra.mxu0 0.0
      %2940 = vmatpush.msra.mxu0 0.0
      %2941 = vmatpush.msra.mxu0 0.0
      %2942 = vmatpush.msra.mxu0 0.0
      %2943 = vmatpush.msra.mxu0 0.0
      %2944 = vmatpush.msra.mxu0 0.0
      %2945 = vmatpush.msra.mxu0 %v2778
      %2946 = vmatmul.f32.gmra.mxu0 %v2788
      %v2947 = vpop.f32.mrf.mxu0
      %v2948 = vadd.f32 0.0, %v2947
      %2949 = vdwg.mxu0
      %v2950 = vadd.f32 %v2743, %v2808
      %v2951 = vadd.f32 %v2744, %v2828
      %v2952 = vadd.f32 %v2745, %v2848
      %v2953 = vadd.f32 %v2746, %v2868
      %v2954 = vadd.f32 %v2747, %v2888
      %v2955 = vadd.f32 %v2748, %v2908
      %v2956 = vadd.f32 %v2749, %v2928
      %v2957 = vadd.f32 %v2750, %v2948
      %s2958 = scalar_lea.vmem %s3, 40
      %v2959 = vld [vmem:[%s2958] sm:$0xff]
      %2960 = vrot.lane.b32.xlu0 %v1957, 27
      %v2961 = vpop.permute.xlu0 %2960
      %2962 = vrot.lane.b32.xlu0 %v1958, 27
      %v2963 = vpop.permute.xlu0 %2962
      %2964 = vrot.lane.b32.xlu0 %v1959, 27
      %v2965 = vpop.permute.xlu0 %2964
      %2966 = vrot.lane.b32.xlu0 %v1960, 27
      %v2967 = vpop.permute.xlu0 %2966
      %2968 = vrot.lane.b32.xlu0 %v1961, 27
      %v2969 = vpop.permute.xlu0 %2968
      %2970 = vrot.lane.b32.xlu0 %v1962, 27
      %v2971 = vpop.permute.xlu0 %2970
      %2972 = vrot.lane.b32.xlu0 %v1963, 27
      %v2973 = vpop.permute.xlu0 %2972
      %2974 = vrot.lane.b32.xlu0 %v1964, 27
      %v2975 = vpop.permute.xlu0 %2974
      %2976 = vrot.lane.b32.xlu0 %v1965, 27
      %v2977 = vpop.permute.xlu0 %2976
      %v2978 = vsel %vm1288, %v2961, %v2963
      %v2979 = vsel %vm1288, %v2963, %v2965
      %v2980 = vsel %vm1288, %v2965, %v2967
      %v2981 = vsel %vm1288, %v2967, %v2969
      %v2982 = vsel %vm1288, %v2969, %v2971
      %v2983 = vsel %vm1288, %v2971, %v2973
      %v2984 = vsel %vm1288, %v2973, %v2975
      %v2985 = vsel %vm1288, %v2975, %v2977
      %v2995 = vsel %vm317, %v2959, 0
      %2997 = vmatpush.msra.mxu0 0.0
      %2998 = vmatpush.msra.mxu0 0.0
      %2999 = vmatpush.msra.mxu0 0.0
      %3000 = vmatpush.msra.mxu0 0.0
      %3001 = vmatpush.msra.mxu0 0.0
      %3002 = vmatpush.msra.mxu0 0.0
      %3003 = vmatpush.msra.mxu0 0.0
      %3004 = vmatpush.msra.mxu0 0.0
      %3005 = vmatpush.msra.mxu0 0.0
      %3006 = vmatpush.msra.mxu0 0.0
      %3007 = vmatpush.msra.mxu0 0.0
      %3008 = vmatpush.msra.mxu0 0.0
      %3009 = vmatpush.msra.mxu0 0.0
      %3010 = vmatpush.msra.mxu0 0.0
      %3011 = vmatpush.msra.mxu0 0.0
      %3012 = vmatpush.msra.mxu0 %v2978
      %3013 = vmatmul.f32.gmra.mxu0 %v2995
      %v3014 = vpop.f32.mrf.mxu0
      %v3015 = vadd.f32 0.0, %v3014
      %3016 = vdwg.mxu0
      %3017 = vmatpush.msra.mxu0 0.0
      %3018 = vmatpush.msra.mxu0 0.0
      %3019 = vmatpush.msra.mxu0 0.0
      %3020 = vmatpush.msra.mxu0 0.0
      %3021 = vmatpush.msra.mxu0 0.0
      %3022 = vmatpush.msra.mxu0 0.0
      %3023 = vmatpush.msra.mxu0 0.0
      %3024 = vmatpush.msra.mxu0 0.0
      %3025 = vmatpush.msra.mxu0 0.0
      %3026 = vmatpush.msra.mxu0 0.0
      %3027 = vmatpush.msra.mxu0 0.0
      %3028 = vmatpush.msra.mxu0 0.0
      %3029 = vmatpush.msra.mxu0 0.0
      %3030 = vmatpush.msra.mxu0 0.0
      %3031 = vmatpush.msra.mxu0 0.0
      %3032 = vmatpush.msra.mxu0 %v2979
      %3033 = vmatmul.f32.gmra.mxu0 %v2995
      %v3034 = vpop.f32.mrf.mxu0
      %v3035 = vadd.f32 0.0, %v3034
      %3036 = vdwg.mxu0
      %3037 = vmatpush.msra.mxu0 0.0
      %3038 = vmatpush.msra.mxu0 0.0
      %3039 = vmatpush.msra.mxu0 0.0
      %3040 = vmatpush.msra.mxu0 0.0
      %3041 = vmatpush.msra.mxu0 0.0
      %3042 = vmatpush.msra.mxu0 0.0
      %3043 = vmatpush.msra.mxu0 0.0
      %3044 = vmatpush.msra.mxu0 0.0
      %3045 = vmatpush.msra.mxu0 0.0
      %3046 = vmatpush.msra.mxu0 0.0
      %3047 = vmatpush.msra.mxu0 0.0
      %3048 = vmatpush.msra.mxu0 0.0
      %3049 = vmatpush.msra.mxu0 0.0
      %3050 = vmatpush.msra.mxu0 0.0
      %3051 = vmatpush.msra.mxu0 0.0
      %3052 = vmatpush.msra.mxu0 %v2980
      %3053 = vmatmul.f32.gmra.mxu0 %v2995
      %v3054 = vpop.f32.mrf.mxu0
      %v3055 = vadd.f32 0.0, %v3054
      %3056 = vdwg.mxu0
      %3057 = vmatpush.msra.mxu0 0.0
      %3058 = vmatpush.msra.mxu0 0.0
      %3059 = vmatpush.msra.mxu0 0.0
      %3060 = vmatpush.msra.mxu0 0.0
      %3061 = vmatpush.msra.mxu0 0.0
      %3062 = vmatpush.msra.mxu0 0.0
      %3063 = vmatpush.msra.mxu0 0.0
      %3064 = vmatpush.msra.mxu0 0.0
      %3065 = vmatpush.msra.mxu0 0.0
      %3066 = vmatpush.msra.mxu0 0.0
      %3067 = vmatpush.msra.mxu0 0.0
      %3068 = vmatpush.msra.mxu0 0.0
      %3069 = vmatpush.msra.mxu0 0.0
      %3070 = vmatpush.msra.mxu0 0.0
      %3071 = vmatpush.msra.mxu0 0.0
      %3072 = vmatpush.msra.mxu0 %v2981
      %3073 = vmatmul.f32.gmra.mxu0 %v2995
      %v3074 = vpop.f32.mrf.mxu0
      %v3075 = vadd.f32 0.0, %v3074
      %3076 = vdwg.mxu0
      %3077 = vmatpush.msra.mxu0 0.0
      %3078 = vmatpush.msra.mxu0 0.0
      %3079 = vmatpush.msra.mxu0 0.0
      %3080 = vmatpush.msra.mxu0 0.0
      %3081 = vmatpush.msra.mxu0 0.0
      %3082 = vmatpush.msra.mxu0 0.0
      %3083 = vmatpush.msra.mxu0 0.0
      %3084 = vmatpush.msra.mxu0 0.0
      %3085 = vmatpush.msra.mxu0 0.0
      %3086 = vmatpush.msra.mxu0 0.0
      %3087 = vmatpush.msra.mxu0 0.0
      %3088 = vmatpush.msra.mxu0 0.0
      %3089 = vmatpush.msra.mxu0 0.0
      %3090 = vmatpush.msra.mxu0 0.0
      %3091 = vmatpush.msra.mxu0 0.0
      %3092 = vmatpush.msra.mxu0 %v2982
      %3093 = vmatmul.f32.gmra.mxu0 %v2995
      %v3094 = vpop.f32.mrf.mxu0
      %v3095 = vadd.f32 0.0, %v3094
      %3096 = vdwg.mxu0
      %3097 = vmatpush.msra.mxu0 0.0
      %3098 = vmatpush.msra.mxu0 0.0
      %3099 = vmatpush.msra.mxu0 0.0
      %3100 = vmatpush.msra.mxu0 0.0
      %3101 = vmatpush.msra.mxu0 0.0
      %3102 = vmatpush.msra.mxu0 0.0
      %3103 = vmatpush.msra.mxu0 0.0
      %3104 = vmatpush.msra.mxu0 0.0
      %3105 = vmatpush.msra.mxu0 0.0
      %3106 = vmatpush.msra.mxu0 0.0
      %3107 = vmatpush.msra.mxu0 0.0
      %3108 = vmatpush.msra.mxu0 0.0
      %3109 = vmatpush.msra.mxu0 0.0
      %3110 = vmatpush.msra.mxu0 0.0
      %3111 = vmatpush.msra.mxu0 0.0
      %3112 = vmatpush.msra.mxu0 %v2983
      %3113 = vmatmul.f32.gmra.mxu0 %v2995
      %v3114 = vpop.f32.mrf.mxu0
      %v3115 = vadd.f32 0.0, %v3114
      %3116 = vdwg.mxu0
      %3117 = vmatpush.msra.mxu0 0.0
      %3118 = vmatpush.msra.mxu0 0.0
      %3119 = vmatpush.msra.mxu0 0.0
      %3120 = vmatpush.msra.mxu0 0.0
      %3121 = vmatpush.msra.mxu0 0.0
      %3122 = vmatpush.msra.mxu0 0.0
      %3123 = vmatpush.msra.mxu0 0.0
      %3124 = vmatpush.msra.mxu0 0.0
      %3125 = vmatpush.msra.mxu0 0.0
      %3126 = vmatpush.msra.mxu0 0.0
      %3127 = vmatpush.msra.mxu0 0.0
      %3128 = vmatpush.msra.mxu0 0.0
      %3129 = vmatpush.msra.mxu0 0.0
      %3130 = vmatpush.msra.mxu0 0.0
      %3131 = vmatpush.msra.mxu0 0.0
      %3132 = vmatpush.msra.mxu0 %v2984
      %3133 = vmatmul.f32.gmra.mxu0 %v2995
      %v3134 = vpop.f32.mrf.mxu0
      %v3135 = vadd.f32 0.0, %v3134
      %3136 = vdwg.mxu0
      %3137 = vmatpush.msra.mxu0 0.0
      %3138 = vmatpush.msra.mxu0 0.0
      %3139 = vmatpush.msra.mxu0 0.0
      %3140 = vmatpush.msra.mxu0 0.0
      %3141 = vmatpush.msra.mxu0 0.0
      %3142 = vmatpush.msra.mxu0 0.0
      %3143 = vmatpush.msra.mxu0 0.0
      %3144 = vmatpush.msra.mxu0 0.0
      %3145 = vmatpush.msra.mxu0 0.0
      %3146 = vmatpush.msra.mxu0 0.0
      %3147 = vmatpush.msra.mxu0 0.0
      %3148 = vmatpush.msra.mxu0 0.0
      %3149 = vmatpush.msra.mxu0 0.0
      %3150 = vmatpush.msra.mxu0 0.0
      %3151 = vmatpush.msra.mxu0 0.0
      %3152 = vmatpush.msra.mxu0 %v2985
      %3153 = vmatmul.f32.gmra.mxu0 %v2995
      %v3154 = vpop.f32.mrf.mxu0
      %v3155 = vadd.f32 0.0, %v3154
      %3156 = vdwg.mxu0
      %v3157 = vadd.f32 %v2950, %v3015
      %v3158 = vadd.f32 %v2951, %v3035
      %v3159 = vadd.f32 %v2952, %v3055
      %v3160 = vadd.f32 %v2953, %v3075
      %v3161 = vadd.f32 %v2954, %v3095
      %v3162 = vadd.f32 %v2955, %v3115
      %v3163 = vadd.f32 %v2956, %v3135
      %v3164 = vadd.f32 %v2957, %v3155
      %s3165 = scalar_lea.vmem %s3, 48
      %v3166 = vld [vmem:[%s3165] sm:$0xff]
      %3167 = vrot.lane.b32.xlu0 %v1957, 18
      %v3168 = vpop.permute.xlu0 %3167
      %3169 = vrot.lane.b32.xlu0 %v1958, 18
      %v3170 = vpop.permute.xlu0 %3169
      %3171 = vrot.lane.b32.xlu0 %v1959, 18
      %v3172 = vpop.permute.xlu0 %3171
      %3173 = vrot.lane.b32.xlu0 %v1960, 18
      %v3174 = vpop.permute.xlu0 %3173
      %3175 = vrot.lane.b32.xlu0 %v1961, 18
      %v3176 = vpop.permute.xlu0 %3175
      %3177 = vrot.lane.b32.xlu0 %v1962, 18
      %v3178 = vpop.permute.xlu0 %3177
      %3179 = vrot.lane.b32.xlu0 %v1963, 18
      %v3180 = vpop.permute.xlu0 %3179
      %3181 = vrot.lane.b32.xlu0 %v1964, 18
      %v3182 = vpop.permute.xlu0 %3181
      %3183 = vrot.lane.b32.xlu0 %v1965, 18
      %v3184 = vpop.permute.xlu0 %3183
      %v3185 = vsel %vm1496, %v3168, %v3170
      %v3186 = vsel %vm1496, %v3170, %v3172
      %v3187 = vsel %vm1496, %v3172, %v3174
      %v3188 = vsel %vm1496, %v3174, %v3176
      %v3189 = vsel %vm1496, %v3176, %v3178
      %v3190 = vsel %vm1496, %v3178, %v3180
      %v3191 = vsel %vm1496, %v3180, %v3182
      %v3192 = vsel %vm1496, %v3182, %v3184
      %v3202 = vsel %vm317, %v3166, 0
      %3204 = vmatpush.msra.mxu0 0.0
      %3205 = vmatpush.msra.mxu0 0.0
      %3206 = vmatpush.msra.mxu0 0.0
      %3207 = vmatpush.msra.mxu0 0.0
      %3208 = vmatpush.msra.mxu0 0.0
      %3209 = vmatpush.msra.mxu0 0.0
      %3210 = vmatpush.msra.mxu0 0.0
      %3211 = vmatpush.msra.mxu0 0.0
      %3212 = vmatpush.msra.mxu0 0.0
      %3213 = vmatpush.msra.mxu0 0.0
      %3214 = vmatpush.msra.mxu0 0.0
      %3215 = vmatpush.msra.mxu0 0.0
      %3216 = vmatpush.msra.mxu0 0.0
      %3217 = vmatpush.msra.mxu0 0.0
      %3218 = vmatpush.msra.mxu0 0.0
      %3219 = vmatpush.msra.mxu0 %v3185
      %3220 = vmatmul.f32.gmra.mxu0 %v3202
      %v3221 = vpop.f32.mrf.mxu0
      %v3222 = vadd.f32 0.0, %v3221
      %3223 = vdwg.mxu0
      %3224 = vmatpush.msra.mxu0 0.0
      %3225 = vmatpush.msra.mxu0 0.0
      %3226 = vmatpush.msra.mxu0 0.0
      %3227 = vmatpush.msra.mxu0 0.0
      %3228 = vmatpush.msra.mxu0 0.0
      %3229 = vmatpush.msra.mxu0 0.0
      %3230 = vmatpush.msra.mxu0 0.0
      %3231 = vmatpush.msra.mxu0 0.0
      %3232 = vmatpush.msra.mxu0 0.0
      %3233 = vmatpush.msra.mxu0 0.0
      %3234 = vmatpush.msra.mxu0 0.0
      %3235 = vmatpush.msra.mxu0 0.0
      %3236 = vmatpush.msra.mxu0 0.0
      %3237 = vmatpush.msra.mxu0 0.0
      %3238 = vmatpush.msra.mxu0 0.0
      %3239 = vmatpush.msra.mxu0 %v3186
      %3240 = vmatmul.f32.gmra.mxu0 %v3202
      %v3241 = vpop.f32.mrf.mxu0
      %v3242 = vadd.f32 0.0, %v3241
      %3243 = vdwg.mxu0
      %3244 = vmatpush.msra.mxu0 0.0
      %3245 = vmatpush.msra.mxu0 0.0
      %3246 = vmatpush.msra.mxu0 0.0
      %3247 = vmatpush.msra.mxu0 0.0
      %3248 = vmatpush.msra.mxu0 0.0
      %3249 = vmatpush.msra.mxu0 0.0
      %3250 = vmatpush.msra.mxu0 0.0
      %3251 = vmatpush.msra.mxu0 0.0
      %3252 = vmatpush.msra.mxu0 0.0
      %3253 = vmatpush.msra.mxu0 0.0
      %3254 = vmatpush.msra.mxu0 0.0
      %3255 = vmatpush.msra.mxu0 0.0
      %3256 = vmatpush.msra.mxu0 0.0
      %3257 = vmatpush.msra.mxu0 0.0
      %3258 = vmatpush.msra.mxu0 0.0
      %3259 = vmatpush.msra.mxu0 %v3187
      %3260 = vmatmul.f32.gmra.mxu0 %v3202
      %v3261 = vpop.f32.mrf.mxu0
      %v3262 = vadd.f32 0.0, %v3261
      %3263 = vdwg.mxu0
      %3264 = vmatpush.msra.mxu0 0.0
      %3265 = vmatpush.msra.mxu0 0.0
      %3266 = vmatpush.msra.mxu0 0.0
      %3267 = vmatpush.msra.mxu0 0.0
      %3268 = vmatpush.msra.mxu0 0.0
      %3269 = vmatpush.msra.mxu0 0.0
      %3270 = vmatpush.msra.mxu0 0.0
      %3271 = vmatpush.msra.mxu0 0.0
      %3272 = vmatpush.msra.mxu0 0.0
      %3273 = vmatpush.msra.mxu0 0.0
      %3274 = vmatpush.msra.mxu0 0.0
      %3275 = vmatpush.msra.mxu0 0.0
      %3276 = vmatpush.msra.mxu0 0.0
      %3277 = vmatpush.msra.mxu0 0.0
      %3278 = vmatpush.msra.mxu0 0.0
      %3279 = vmatpush.msra.mxu0 %v3188
      %3280 = vmatmul.f32.gmra.mxu0 %v3202
      %v3281 = vpop.f32.mrf.mxu0
      %v3282 = vadd.f32 0.0, %v3281
      %3283 = vdwg.mxu0
      %3284 = vmatpush.msra.mxu0 0.0
      %3285 = vmatpush.msra.mxu0 0.0
      %3286 = vmatpush.msra.mxu0 0.0
      %3287 = vmatpush.msra.mxu0 0.0
      %3288 = vmatpush.msra.mxu0 0.0
      %3289 = vmatpush.msra.mxu0 0.0
      %3290 = vmatpush.msra.mxu0 0.0
      %3291 = vmatpush.msra.mxu0 0.0
      %3292 = vmatpush.msra.mxu0 0.0
      %3293 = vmatpush.msra.mxu0 0.0
      %3294 = vmatpush.msra.mxu0 0.0
      %3295 = vmatpush.msra.mxu0 0.0
      %3296 = vmatpush.msra.mxu0 0.0
      %3297 = vmatpush.msra.mxu0 0.0
      %3298 = vmatpush.msra.mxu0 0.0
      %3299 = vmatpush.msra.mxu0 %v3189
      %3300 = vmatmul.f32.gmra.mxu0 %v3202
      %v3301 = vpop.f32.mrf.mxu0
      %v3302 = vadd.f32 0.0, %v3301
      %3303 = vdwg.mxu0
      %3304 = vmatpush.msra.mxu0 0.0
      %3305 = vmatpush.msra.mxu0 0.0
      %3306 = vmatpush.msra.mxu0 0.0
      %3307 = vmatpush.msra.mxu0 0.0
      %3308 = vmatpush.msra.mxu0 0.0
      %3309 = vmatpush.msra.mxu0 0.0
      %3310 = vmatpush.msra.mxu0 0.0
      %3311 = vmatpush.msra.mxu0 0.0
      %3312 = vmatpush.msra.mxu0 0.0
      %3313 = vmatpush.msra.mxu0 0.0
      %3314 = vmatpush.msra.mxu0 0.0
      %3315 = vmatpush.msra.mxu0 0.0
      %3316 = vmatpush.msra.mxu0 0.0
      %3317 = vmatpush.msra.mxu0 0.0
      %3318 = vmatpush.msra.mxu0 0.0
      %3319 = vmatpush.msra.mxu0 %v3190
      %3320 = vmatmul.f32.gmra.mxu0 %v3202
      %v3321 = vpop.f32.mrf.mxu0
      %v3322 = vadd.f32 0.0, %v3321
      %3323 = vdwg.mxu0
      %3324 = vmatpush.msra.mxu0 0.0
      %3325 = vmatpush.msra.mxu0 0.0
      %3326 = vmatpush.msra.mxu0 0.0
      %3327 = vmatpush.msra.mxu0 0.0
      %3328 = vmatpush.msra.mxu0 0.0
      %3329 = vmatpush.msra.mxu0 0.0
      %3330 = vmatpush.msra.mxu0 0.0
      %3331 = vmatpush.msra.mxu0 0.0
      %3332 = vmatpush.msra.mxu0 0.0
      %3333 = vmatpush.msra.mxu0 0.0
      %3334 = vmatpush.msra.mxu0 0.0
      %3335 = vmatpush.msra.mxu0 0.0
      %3336 = vmatpush.msra.mxu0 0.0
      %3337 = vmatpush.msra.mxu0 0.0
      %3338 = vmatpush.msra.mxu0 0.0
      %3339 = vmatpush.msra.mxu0 %v3191
      %3340 = vmatmul.f32.gmra.mxu0 %v3202
      %v3341 = vpop.f32.mrf.mxu0
      %v3342 = vadd.f32 0.0, %v3341
      %3343 = vdwg.mxu0
      %3344 = vmatpush.msra.mxu0 0.0
      %3345 = vmatpush.msra.mxu0 0.0
      %3346 = vmatpush.msra.mxu0 0.0
      %3347 = vmatpush.msra.mxu0 0.0
      %3348 = vmatpush.msra.mxu0 0.0
      %3349 = vmatpush.msra.mxu0 0.0
      %3350 = vmatpush.msra.mxu0 0.0
      %3351 = vmatpush.msra.mxu0 0.0
      %3352 = vmatpush.msra.mxu0 0.0
      %3353 = vmatpush.msra.mxu0 0.0
      %3354 = vmatpush.msra.mxu0 0.0
      %3355 = vmatpush.msra.mxu0 0.0
      %3356 = vmatpush.msra.mxu0 0.0
      %3357 = vmatpush.msra.mxu0 0.0
      %3358 = vmatpush.msra.mxu0 0.0
      %3359 = vmatpush.msra.mxu0 %v3192
      %3360 = vmatmul.f32.gmra.mxu0 %v3202
      %v3361 = vpop.f32.mrf.mxu0
      %v3362 = vadd.f32 0.0, %v3361
      %3363 = vdwg.mxu0
      %v3364 = vadd.f32 %v3157, %v3222
      %v3365 = vadd.f32 %v3158, %v3242
      %v3366 = vadd.f32 %v3159, %v3262
      %v3367 = vadd.f32 %v3160, %v3282
      %v3368 = vadd.f32 %v3161, %v3302
      %v3369 = vadd.f32 %v3162, %v3322
      %v3370 = vadd.f32 %v3163, %v3342
      %v3371 = vadd.f32 %v3164, %v3362
      %s3372 = scalar_lea.vmem %s3, 56
      %v3373 = vld [vmem:[%s3372] sm:$0xff]
      %3374 = vrot.lane.b32.xlu0 %v1957, 17
      %v3375 = vpop.permute.xlu0 %3374
      %3376 = vrot.lane.b32.xlu0 %v1958, 17
      %v3377 = vpop.permute.xlu0 %3376
      %3378 = vrot.lane.b32.xlu0 %v1959, 17
      %v3379 = vpop.permute.xlu0 %3378
      %3380 = vrot.lane.b32.xlu0 %v1960, 17
      %v3381 = vpop.permute.xlu0 %3380
      %3382 = vrot.lane.b32.xlu0 %v1961, 17
      %v3383 = vpop.permute.xlu0 %3382
      %3384 = vrot.lane.b32.xlu0 %v1962, 17
      %v3385 = vpop.permute.xlu0 %3384
      %3386 = vrot.lane.b32.xlu0 %v1963, 17
      %v3387 = vpop.permute.xlu0 %3386
      %3388 = vrot.lane.b32.xlu0 %v1964, 17
      %v3389 = vpop.permute.xlu0 %3388
      %3390 = vrot.lane.b32.xlu0 %v1965, 17
      %v3391 = vpop.permute.xlu0 %3390
      %v3392 = vsel %vm1704, %v3375, %v3377
      %v3393 = vsel %vm1704, %v3377, %v3379
      %v3394 = vsel %vm1704, %v3379, %v3381
      %v3395 = vsel %vm1704, %v3381, %v3383
      %v3396 = vsel %vm1704, %v3383, %v3385
      %v3397 = vsel %vm1704, %v3385, %v3387
      %v3398 = vsel %vm1704, %v3387, %v3389
      %v3399 = vsel %vm1704, %v3389, %v3391
      %v3409 = vsel %vm317, %v3373, 0
      %3411 = vmatpush.msra.mxu0 0.0
      %3412 = vmatpush.msra.mxu0 0.0
      %3413 = vmatpush.msra.mxu0 0.0
      %3414 = vmatpush.msra.mxu0 0.0
      %3415 = vmatpush.msra.mxu0 0.0
      %3416 = vmatpush.msra.mxu0 0.0
      %3417 = vmatpush.msra.mxu0 0.0
      %3418 = vmatpush.msra.mxu0 0.0
      %3419 = vmatpush.msra.mxu0 0.0
      %3420 = vmatpush.msra.mxu0 0.0
      %3421 = vmatpush.msra.mxu0 0.0
      %3422 = vmatpush.msra.mxu0 0.0
      %3423 = vmatpush.msra.mxu0 0.0
      %3424 = vmatpush.msra.mxu0 0.0
      %3425 = vmatpush.msra.mxu0 0.0
      %3426 = vmatpush.msra.mxu0 %v3392
      %3427 = vmatmul.f32.gmra.mxu0 %v3409
      %v3428 = vpop.f32.mrf.mxu0
      %v3429 = vadd.f32 0.0, %v3428
      %3430 = vdwg.mxu0
      %3431 = vmatpush.msra.mxu0 0.0
      %3432 = vmatpush.msra.mxu0 0.0
      %3433 = vmatpush.msra.mxu0 0.0
      %3434 = vmatpush.msra.mxu0 0.0
      %3435 = vmatpush.msra.mxu0 0.0
      %3436 = vmatpush.msra.mxu0 0.0
      %3437 = vmatpush.msra.mxu0 0.0
      %3438 = vmatpush.msra.mxu0 0.0
      %3439 = vmatpush.msra.mxu0 0.0
      %3440 = vmatpush.msra.mxu0 0.0
      %3441 = vmatpush.msra.mxu0 0.0
      %3442 = vmatpush.msra.mxu0 0.0
      %3443 = vmatpush.msra.mxu0 0.0
      %3444 = vmatpush.msra.mxu0 0.0
      %3445 = vmatpush.msra.mxu0 0.0
      %3446 = vmatpush.msra.mxu0 %v3393
      %3447 = vmatmul.f32.gmra.mxu0 %v3409
      %v3448 = vpop.f32.mrf.mxu0
      %v3449 = vadd.f32 0.0, %v3448
      %3450 = vdwg.mxu0
      %3451 = vmatpush.msra.mxu0 0.0
      %3452 = vmatpush.msra.mxu0 0.0
      %3453 = vmatpush.msra.mxu0 0.0
      %3454 = vmatpush.msra.mxu0 0.0
      %3455 = vmatpush.msra.mxu0 0.0
      %3456 = vmatpush.msra.mxu0 0.0
      %3457 = vmatpush.msra.mxu0 0.0
      %3458 = vmatpush.msra.mxu0 0.0
      %3459 = vmatpush.msra.mxu0 0.0
      %3460 = vmatpush.msra.mxu0 0.0
      %3461 = vmatpush.msra.mxu0 0.0
      %3462 = vmatpush.msra.mxu0 0.0
      %3463 = vmatpush.msra.mxu0 0.0
      %3464 = vmatpush.msra.mxu0 0.0
      %3465 = vmatpush.msra.mxu0 0.0
      %3466 = vmatpush.msra.mxu0 %v3394
      %3467 = vmatmul.f32.gmra.mxu0 %v3409
      %v3468 = vpop.f32.mrf.mxu0
      %v3469 = vadd.f32 0.0, %v3468
      %3470 = vdwg.mxu0
      %3471 = vmatpush.msra.mxu0 0.0
      %3472 = vmatpush.msra.mxu0 0.0
      %3473 = vmatpush.msra.mxu0 0.0
      %3474 = vmatpush.msra.mxu0 0.0
      %3475 = vmatpush.msra.mxu0 0.0
      %3476 = vmatpush.msra.mxu0 0.0
      %3477 = vmatpush.msra.mxu0 0.0
      %3478 = vmatpush.msra.mxu0 0.0
      %3479 = vmatpush.msra.mxu0 0.0
      %3480 = vmatpush.msra.mxu0 0.0
      %3481 = vmatpush.msra.mxu0 0.0
      %3482 = vmatpush.msra.mxu0 0.0
      %3483 = vmatpush.msra.mxu0 0.0
      %3484 = vmatpush.msra.mxu0 0.0
      %3485 = vmatpush.msra.mxu0 0.0
      %3486 = vmatpush.msra.mxu0 %v3395
      %3487 = vmatmul.f32.gmra.mxu0 %v3409
      %v3488 = vpop.f32.mrf.mxu0
      %v3489 = vadd.f32 0.0, %v3488
      %3490 = vdwg.mxu0
      %3491 = vmatpush.msra.mxu0 0.0
      %3492 = vmatpush.msra.mxu0 0.0
      %3493 = vmatpush.msra.mxu0 0.0
      %3494 = vmatpush.msra.mxu0 0.0
      %3495 = vmatpush.msra.mxu0 0.0
      %3496 = vmatpush.msra.mxu0 0.0
      %3497 = vmatpush.msra.mxu0 0.0
      %3498 = vmatpush.msra.mxu0 0.0
      %3499 = vmatpush.msra.mxu0 0.0
      %3500 = vmatpush.msra.mxu0 0.0
      %3501 = vmatpush.msra.mxu0 0.0
      %3502 = vmatpush.msra.mxu0 0.0
      %3503 = vmatpush.msra.mxu0 0.0
      %3504 = vmatpush.msra.mxu0 0.0
      %3505 = vmatpush.msra.mxu0 0.0
      %3506 = vmatpush.msra.mxu0 %v3396
      %3507 = vmatmul.f32.gmra.mxu0 %v3409
      %v3508 = vpop.f32.mrf.mxu0
      %v3509 = vadd.f32 0.0, %v3508
      %3510 = vdwg.mxu0
      %3511 = vmatpush.msra.mxu0 0.0
      %3512 = vmatpush.msra.mxu0 0.0
      %3513 = vmatpush.msra.mxu0 0.0
      %3514 = vmatpush.msra.mxu0 0.0
      %3515 = vmatpush.msra.mxu0 0.0
      %3516 = vmatpush.msra.mxu0 0.0
      %3517 = vmatpush.msra.mxu0 0.0
      %3518 = vmatpush.msra.mxu0 0.0
      %3519 = vmatpush.msra.mxu0 0.0
      %3520 = vmatpush.msra.mxu0 0.0
      %3521 = vmatpush.msra.mxu0 0.0
      %3522 = vmatpush.msra.mxu0 0.0
      %3523 = vmatpush.msra.mxu0 0.0
      %3524 = vmatpush.msra.mxu0 0.0
      %3525 = vmatpush.msra.mxu0 0.0
      %3526 = vmatpush.msra.mxu0 %v3397
      %3527 = vmatmul.f32.gmra.mxu0 %v3409
      %v3528 = vpop.f32.mrf.mxu0
      %v3529 = vadd.f32 0.0, %v3528
      %3530 = vdwg.mxu0
      %3531 = vmatpush.msra.mxu0 0.0
      %3532 = vmatpush.msra.mxu0 0.0
      %3533 = vmatpush.msra.mxu0 0.0
      %3534 = vmatpush.msra.mxu0 0.0
      %3535 = vmatpush.msra.mxu0 0.0
      %3536 = vmatpush.msra.mxu0 0.0
      %3537 = vmatpush.msra.mxu0 0.0
      %3538 = vmatpush.msra.mxu0 0.0
      %3539 = vmatpush.msra.mxu0 0.0
      %3540 = vmatpush.msra.mxu0 0.0
      %3541 = vmatpush.msra.mxu0 0.0
      %3542 = vmatpush.msra.mxu0 0.0
      %3543 = vmatpush.msra.mxu0 0.0
      %3544 = vmatpush.msra.mxu0 0.0
      %3545 = vmatpush.msra.mxu0 0.0
      %3546 = vmatpush.msra.mxu0 %v3398
      %3547 = vmatmul.f32.gmra.mxu0 %v3409
      %v3548 = vpop.f32.mrf.mxu0
      %v3549 = vadd.f32 0.0, %v3548
      %3550 = vdwg.mxu0
      %3551 = vmatpush.msra.mxu0 0.0
      %3552 = vmatpush.msra.mxu0 0.0
      %3553 = vmatpush.msra.mxu0 0.0
      %3554 = vmatpush.msra.mxu0 0.0
      %3555 = vmatpush.msra.mxu0 0.0
      %3556 = vmatpush.msra.mxu0 0.0
      %3557 = vmatpush.msra.mxu0 0.0
      %3558 = vmatpush.msra.mxu0 0.0
      %3559 = vmatpush.msra.mxu0 0.0
      %3560 = vmatpush.msra.mxu0 0.0
      %3561 = vmatpush.msra.mxu0 0.0
      %3562 = vmatpush.msra.mxu0 0.0
      %3563 = vmatpush.msra.mxu0 0.0
      %3564 = vmatpush.msra.mxu0 0.0
      %3565 = vmatpush.msra.mxu0 0.0
      %3566 = vmatpush.msra.mxu0 %v3399
      %3567 = vmatmul.f32.gmra.mxu0 %v3409
      %v3568 = vpop.f32.mrf.mxu0
      %v3569 = vadd.f32 0.0, %v3568
      %3570 = vdwg.mxu0
      %v3571 = vadd.f32 %v3364, %v3429
      %v3572 = vadd.f32 %v3365, %v3449
      %v3573 = vadd.f32 %v3366, %v3469
      %v3574 = vadd.f32 %v3367, %v3489
      %v3575 = vadd.f32 %v3368, %v3509
      %v3576 = vadd.f32 %v3369, %v3529
      %v3577 = vadd.f32 %v3370, %v3549
      %v3578 = vadd.f32 %v3371, %v3569
      %v3579 = vld [vmem:[%s4] sm:$0xff]
      %3581 = vset.pattern.permute.xlu0 0
      %3582 = vperm.xlu0 %3581, %v3579
      %v3583 = vpop.permute.xlu0 %3582
      %v3585 = vadd.f32 %v3571, %v3583
      %v3586 = vadd.f32 %v3572, %v3583
      %v3587 = vadd.f32 %v3573, %v3583
      %v3588 = vadd.f32 %v3574, %v3583
      %v3589 = vadd.f32 %v3575, %v3583
      %v3590 = vadd.f32 %v3576, %v3583
      %v3591 = vadd.f32 %v3577, %v3583
      %v3592 = vadd.f32 %v3578, %v3583
      %3593 = vst [vmem:[%s251] sm:$0xff] %v3585
      %3594 = vst [vmem:[%s251 + $0x8] sm:$0xff] %v3586
      %3595 = vst [vmem:[%s251 + $0x10] sm:$0xff] %v3587
      %3596 = vst [vmem:[%s251 + $0x18] sm:$0xff] %v3588
      %3597 = vst [vmem:[%s251 + $0x20] sm:$0xff] %v3589
      %3598 = vst [vmem:[%s251 + $0x28] sm:$0xff] %v3590
      %3599 = vst [vmem:[%s251 + $0x30] sm:$0xff] %v3591
      %3600 = vst [vmem:[%s251 + $0x38] sm:$0xff] %v3592
      %p3601 = scmp.lt.s32.totalorder %s17, 1
      %s3602 = scalar_select %p3601, %s17, 1
      %s3603 = smul.addr %s3602, 8
      %s3604 = smul.addr %s3603, 8
      %s3605 = scalar_lea.vmem %s6, %s3604
      // Predicated region
      $region45: #{block_forward.1} parent=43 // pred_check
        %p3606 = pneg %p166
      $region46: #{block_forward.1} parent=43 // pred_check_branch
        %3608 = sbr.rel (%p3606) target = $region48
      $region47: #{block_forward.1} parent=43 // pred_region
        _
      $region48: #{block_forward.1} parent=43 // pred_fallthru
        _
    $region44: #{block_forward.1} parent=5 // pred_fallthru
      _
    %p3609 = scmp.le.s32.totalorder 2, %s12
    // Predicated region
    $region49: #{block_forward.1} parent=5 // pred_check
      %p3610 = pneg %p3609
    $region50: #{block_forward.1} parent=5 // pred_check_branch
      %3612 = sbr.rel (%p3610) target = $region52
    $region51: #{block_forward.1} parent=5 // pred_region
      %s3613 = ssub.s32 %s12, 2
      // Predicated region
      $region53: #{block_forward.1} parent=51 // pred_check
        %p3614 = pneg %p172
      $region54: #{block_forward.1} parent=51 // pred_check_branch
        %3616 = sbr.rel (%p3614) target = $region56
      $region55: #{block_forward.1} parent=51 // pred_region
        %p3617 = scmp.lt.s32.totalorder %s18, 1
        %s3618 = scalar_select %p3617, %s18, 1
        %s3619 = smul.addr %s3618, 8
        %s3620 = smul.addr %s3619, 8
        %s3621 = scalar_lea.vmem %s6, %s3620
      $region56: #{block_forward.1} parent=51 // pred_fallthru
        _
    $region52: #{block_forward.1} parent=5 // pred_fallthru
      _
  $region6: #{block_forward.1} parent=0 // loop_footer
    %s16 = sadd.s32 1, %s12
  $region7: #{block_forward.1} parent=0 // loop_footer_branch
    %11 = sbr.rel target = $region3
  $region8: #{block_forward.1} parent=0 // loop_exit
    _

</llo_original>
